<compile_context>
chip_gen: v6e
topology: v6e:2x2x1
jax: 0.10.0
libtpu: 0.0.40
codegen_flags: <defaults>
</compile_context>

<pallas_src>
import math

import jax
import jax.numpy as jnp
from jax.experimental import pallas as pl
from jax.experimental.pallas import tpu as pltpu

LANE = 128            # lane-dense pad for every feature axis
NUM_LAYERS = 4
EDGE_FEAT_DIM = 2     # implied by MLP([3, 9]) / MLP([10, 10]) in the module
NODE_FEAT_DIM = 1
_EPS = 1e-5


def _round_up(x, m):
    return ((x + m - 1) // m) * m


def _full_spec(shape):
    n = len(shape)
    return pl.BlockSpec(shape, lambda: (0,) * n)


def _make_gcn_kernel(n_nodes, n_edges, node_a_dims):
    """Fused 4-layer EdgeConv forward; all activations stay VMEM-resident.

    node_a_dims[l] = width of `reduced_vector` entering layer l's node MLP
    (static Python int -> used as the pltpu.roll shift for the concat trick).
    """

    def kernel(ef_ref, nf_ref, g_ref, a_ref,
               ga_ref, ba_ref, gb_ref, bb_ref, w_ref, bias_ref,
               o_ref):

        def bn_stats(x, rows):
            # Training-mode BatchNorm1d statistics (biased var) over the REAL
            # rows only (static slice; padded rows must never enter stats).
            xs = x[:rows]
            mean = jnp.mean(xs, axis=0, keepdims=True)
            var = jnp.mean((xs - mean) ** 2, axis=0, keepdims=True)
            return mean, jax.lax.rsqrt(var + _EPS)

        def bn_apply(x, mean, rstd, gamma, beta):
            # Padded lanes: gamma/beta are exactly 0 -> result is exactly 0.
            return (x - mean) * rstd * gamma + beta

        # Edge-feature BN statistics are layer-invariant: hoist out of the
        # layer loop (only the per-layer gamma/beta application changes).
        ef_mean, ef_rstd = bn_stats(ef_ref[...], n_edges)

        def mlp(idx, a_n, b, b_rows, da):
            # ReLU(Linear(BN(concat([a, b], axis=1)))) with ONE bf16 dot:
            # BN each part, place the b-part at lanes [da, da+db) via an XLU
            # roll (wrap lanes are exactly 0 after BN), contract against the
            # merged [wa; wb] weight slab.
            bm, br = bn_stats(b, b_rows)
            b_n = bn_apply(b, bm, br, gb_ref[idx], bb_ref[idx])
            cat = a_n + pltpu.roll(b_n, shift=da, axis=1)
            y = jnp.dot(cat.astype(jnp.bfloat16), w_ref[idx],
                        preferred_element_type=jnp.float32) + bias_ref[idx]
            return jnp.maximum(y, 0.0)

        hid = nf_ref[...]                                   # (Np, 128) f32
        for l in range(NUM_LAYERS):
            # apply_edges: out = mlp1(cat(edge_feature, hid[src]))
            hid_src = jnp.dot(g_ref[...], hid.astype(jnp.bfloat16),
                              preferred_element_type=jnp.float32)  # (Ep, 128)
            ef_n = bn_apply(ef_ref[...], ef_mean, ef_rstd,
                            ga_ref[2 * l], ba_ref[2 * l])
            edge_out = mlp(2 * l, ef_n, hid_src, n_edges, EDGE_FEAT_DIM)
            # update_all: copy_e('out') + mean -> reduced_vector
            reduced = jnp.dot(a_ref[...], edge_out.astype(jnp.bfloat16),
                              preferred_element_type=jnp.float32)  # (Np, 128)
            # apply_func: hid = mlp2(cat(reduced_vector, hid))
            rm, rr = bn_stats(reduced, n_nodes)
            reduced_n = bn_apply(reduced, rm, rr,
                                 ga_ref[2 * l + 1], ba_ref[2 * l + 1])
            hid = mlp(2 * l + 1, reduced_n, hid, n_nodes, node_a_dims[l])

        o_ref[...] = hid   # (Np, 128) lane-dense store; caller slices [:N,:10]

    return kernel


def gcn_forward(edge_feat_pad, node_feat_pad, G, A, packed_params,
                n_nodes, n_edges, node_a_dims):
    kernel = _make_gcn_kernel(n_nodes, n_edges, node_a_dims)
    args = (edge_feat_pad, node_feat_pad, G, A) + tuple(packed_params)
    n_pad = node_feat_pad.shape[0]
    return pl.pallas_call(
        kernel,
        out_shape=jax.ShapeDtypeStruct((n_pad, LANE), jnp.float32),
        in_specs=[_full_spec(t.shape) for t in args],
        out_specs=_full_spec((n_pad, LANE)),
        compiler_params=pltpu.CompilerParams(vmem_limit_bytes=32 * 1024 * 1024),
    )(*args)


# ---------------------------------------------------------------------------
# Deterministic parameter init + packing into padded, stacked slabs
# ---------------------------------------------------------------------------
def make_mlp_params(key, da, db, dout):
    """Params for MLP([da + db, dout]) applied to concat([a, b], axis=1)."""
    k = jax.random.split(key, 7)
    ga = (1.0 + 0.1 * jax.random.normal(k[0], (1, da))).astype(jnp.float32)
    ba = (0.1 * jax.random.normal(k[1], (1, da))).astype(jnp.float32)
    gb = (1.0 + 0.1 * jax.random.normal(k[2], (1, db))).astype(jnp.float32)
    bb = (0.1 * jax.random.normal(k[3], (1, db))).astype(jnp.float32)
    bound = 1.0 / math.sqrt(da + db)
    wa = jax.random.uniform(k[4], (da, dout), jnp.float32, -bound, bound)
    wb = jax.random.uniform(k[5], (db, dout), jnp.float32, -bound, bound)
    bias = jax.random.uniform(k[6], (1, dout), jnp.float32, -bound, bound)
    return (ga, ba, gb, bb, wa, wb, bias)


def pack_params(mlp_params_list):
    """Stack the 8 MLPs into zero-padded slabs for the fused kernel.

    Invariant the roll-concat trick relies on: gamma/beta/bias/weight entries
    for padded feature lanes / rows stay EXACTLY 0 (so padded lanes are
    exactly 0 after BN and the lane wrap-around of pltpu.roll is harmless).
    """
    m = len(mlp_params_list)
    GA = jnp.zeros((m, 1, LANE), jnp.float32)
    BA = jnp.zeros((m, 1, LANE), jnp.float32)
    GB = jnp.zeros((m, 1, LANE), jnp.float32)
    BB = jnp.zeros((m, 1, LANE), jnp.float32)
    W = jnp.zeros((m, LANE, LANE), jnp.float32)   # merged [wa; wb] slab
    BIAS = jnp.zeros((m, 1, LANE), jnp.float32)
    for i, (ga, ba, gb, bb, wa, wb, bias) in enumerate(mlp_params_list):
        da, dout = wa.shape
        db = wb.shape[0]
        GA = GA.at[i, 0, :da].set(ga[0])
        BA = BA.at[i, 0, :da].set(ba[0])
        GB = GB.at[i, 0, :db].set(gb[0])
        BB = BB.at[i, 0, :db].set(bb[0])
        W = W.at[i, :da, :dout].set(wa)
        W = W.at[i, da:da + db, :dout].set(wb)
        BIAS = BIAS.at[i, 0, :dout].set(bias[0])
    # Weights ride the MXU in bf16 (f32 matmuls lower to multi-pass emulation).
    return (GA, BA, GB, BB, W.astype(jnp.bfloat16), BIAS)


# ---------------------------------------------------------------------------
# Pure-JAX f32 reference (for correctness validation of the bf16 kernel)
# ---------------------------------------------------------------------------
def reference_forward(edge_feat, node_feat, src, dst, n_nodes, mlp_params):
    def bn(x, gamma, beta):
        mean = jnp.mean(x, axis=0, keepdims=True)
        var = jnp.mean((x - mean) ** 2, axis=0, keepdims=True)
        return (x - mean) * jax.lax.rsqrt(var + _EPS) * gamma + beta

    def mlp_apply(params, a, b):
        ga, ba, gb, bb, wa, wb, bias = params
        y = bn(a, ga, ba) @ wa + bn(b, gb, bb) @ wb + bias
        return jnp.maximum(y, 0.0)

    deg = jnp.zeros((n_nodes,), jnp.float32).at[dst].add(1.0)
    hid = node_feat
    for l in range(NUM_LAYERS):
        edge_out = mlp_apply(mlp_params[2 * l], edge_feat, hid[src])
        summed = jnp.zeros((n_nodes, edge_out.shape[1]), jnp.float32).at[dst].add(edge_out)
        reduced = summed / jnp.maximum(deg, 1.0)[:, None]
        hid = mlp_apply(mlp_params[2 * l + 1], reduced, hid)
    return hid


if __name__ == "__main__":
    key = jax.random.PRNGKey(0)
    kf, ke, kp = jax.random.split(key, 3)

    # Small ring graph: N nodes, each receives edges from its +/-1, +/-2
    # neighbors -> E = 4N edges, in-degree 4 everywhere.
    N = 16
    src_list, dst_list = [], []
    for v in range(N):
        for d in (-2, -1, 1, 2):
            src_list.append((v + d) % N)
            dst_list.append(v)
    src = jnp.array(src_list, dtype=jnp.int32)
    dst = jnp.array(dst_list, dtype=jnp.int32)
    E = int(src.shape[0])

    # Row (sublane) padding only up to the hardware granule; lanes stay 128.
    Np = _round_up(N, 16)     # = 16
    Ep = _round_up(E, 16)     # = 64

    # Feature dims implied by the module:
    #   conv1.mlp1 = MLP([3, 9])  -> edge_feat_dim + node_feat_dim = 3
    #   conv1.mlp2 = MLP([10,10]) -> 9 + node_feat_dim = 10
    #   => node_feat_dim = 1, edge_feat_dim = 2
    node_feat = jax.random.normal(kf, (N, NODE_FEAT_DIM), jnp.float32)
    edge_feat = jax.random.normal(ke, (E, EDGE_FEAT_DIM), jnp.float32)

    node_feat_pad = jnp.zeros((Np, LANE), jnp.float32).at[:N, :NODE_FEAT_DIM].set(node_feat)
    edge_feat_pad = jnp.zeros((Ep, LANE), jnp.float32).at[:E, :EDGE_FEAT_DIM].set(edge_feat)

    # One-hot src gather matrix (0/1 -> bf16-exact): hid_src = G @ hid.
    G32 = jnp.zeros((Ep, Np), jnp.float32).at[jnp.arange(E), src].set(1.0)
    # Row-normalized incidence matrix for mean aggregation (1/deg = 0.25,
    # bf16-exact): reduced_vector = A @ edge_out.  Padded edge/node columns
    # are zero, so garbage in padded rows never reaches real outputs.
    deg = jnp.zeros((N,), jnp.float32).at[dst].add(1.0)
    inv_deg = 1.0 / jnp.maximum(deg, 1.0)
    A32 = jnp.zeros((Np, Ep), jnp.float32).at[dst, jnp.arange(E)].set(inv_deg[dst])
    G = G32.astype(jnp.bfloat16)
    A = A32.astype(jnp.bfloat16)

    # Per-layer (edge-MLP, node-MLP) configs: ((da, db, dout), (da, db, dout))
    layer_cfgs = [
        ((2, 1, 9), (9, 1, 10)),      # conv1: MLP([3,9]),   MLP([10,10])
        ((2, 10, 10), (10, 10, 10)),  # conv2: MLP([12,10]), MLP([20,10])
        ((2, 10, 10), (10, 10, 10)),  # conv3
        ((2, 10, 10), (10, 10, 10)),  # conv4
    ]
    node_a_dims = tuple(c2[0] for _, c2 in layer_cfgs)   # (9, 10, 10, 10)

    pkeys = jax.random.split(kp, 2 * len(layer_cfgs))
    mlp_params = []
    for i, (c1, c2) in enumerate(layer_cfgs):
        mlp_params.append(make_mlp_params(pkeys[2 * i], *c1))       # edge MLP
        mlp_params.append(make_mlp_params(pkeys[2 * i + 1], *c2))   # node MLP
    packed = pack_params(mlp_params)

    out_pad = gcn_forward(edge_feat_pad, node_feat_pad, G, A, packed,
                          N, E, node_a_dims)
    out_pad = jax.block_until_ready(out_pad)
    out = out_pad[:N, :10]

    assert out.shape == (N, 10) and out.dtype == jnp.float32
    assert bool(jnp.all(jnp.isfinite(out)))

    # Validate the bf16 kernel against the f32 pure-JAX reference.
    ref = reference_forward(edge_feat, node_feat, src, dst, N, mlp_params)
    max_diff = float(jnp.max(jnp.abs(out - ref)))
    tol = 0.05 * (1.0 + float(jnp.max(jnp.abs(ref))))
    assert max_diff < tol, f"kernel/reference mismatch: {max_diff} >= {tol}"

    print("KERNEL_OK")
</pallas_src>

<mosaic_0001>
module attributes {stable_mosaic.version = 11 : i64} {
  func.func @kernel(%arg0: memref<64x128xf32, #tpu.memory_space<vmem>>, %arg1: memref<16x128xf32, #tpu.memory_space<vmem>>, %arg2: memref<64x16xbf16, #tpu.memory_space<vmem>>, %arg3: memref<16x64xbf16, #tpu.memory_space<vmem>>, %arg4: memref<8x1x128xf32, #tpu.memory_space<vmem>>, %arg5: memref<8x1x128xf32, #tpu.memory_space<vmem>>, %arg6: memref<8x1x128xf32, #tpu.memory_space<vmem>>, %arg7: memref<8x1x128xf32, #tpu.memory_space<vmem>>, %arg8: memref<8x128x128xbf16, #tpu.memory_space<vmem>>, %arg9: memref<8x1x128xf32, #tpu.memory_space<vmem>>, %arg10: memref<16x128xf32, #tpu.memory_space<vmem>>) attributes {dimension_semantics = [], scalar_prefetch = 0 : i64, scratch_operands = 0 : i64, tpu.core_type = #tpu.core_type<tc>} {
    %c0 = arith.constant 0 : index
    %c0_0 = arith.constant 0 : index
    %0 = vector.load %arg0[%c0, %c0_0] : memref<64x128xf32, #tpu.memory_space<vmem>>, vector<64x128xf32>
    %cst = arith.constant dense<0.000000e+00> : vector<128xf32>
    %1 = vector.multi_reduction <add>, %0, %cst [0] : vector<64x128xf32> to vector<128xf32>
    %2 = vector.shape_cast %1 : vector<128xf32> to vector<1x128xf32>
    %cst_1 = arith.constant 6.400000e+01 : f32
    %3 = vector.broadcast %cst_1 : f32 to vector<1x128xf32>
    %4 = arith.divf %2, %3 : vector<1x128xf32>
    %5 = vector.broadcast %4 : vector<1x128xf32> to vector<64x128xf32>
    %6 = arith.subf %0, %5 : vector<64x128xf32>
    %7 = arith.mulf %6, %6 : vector<64x128xf32>
    %cst_2 = arith.constant dense<0.000000e+00> : vector<128xf32>
    %8 = vector.multi_reduction <add>, %7, %cst_2 [0] : vector<64x128xf32> to vector<128xf32>
    %9 = vector.shape_cast %8 : vector<128xf32> to vector<1x128xf32>
    %cst_3 = arith.constant 6.400000e+01 : f32
    %10 = vector.broadcast %cst_3 : f32 to vector<1x128xf32>
    %11 = arith.divf %9, %10 : vector<1x128xf32>
    %cst_4 = arith.constant 9.99999974E-6 : f32
    %12 = vector.broadcast %cst_4 : f32 to vector<1x128xf32>
    %13 = arith.addf %11, %12 : vector<1x128xf32>
    %14 = math.rsqrt %13 : vector<1x128xf32>
    %c0_5 = arith.constant 0 : index
    %c0_6 = arith.constant 0 : index
    %15 = vector.load %arg1[%c0_5, %c0_6] : memref<16x128xf32, #tpu.memory_space<vmem>>, vector<16x128xf32>
    %c0_7 = arith.constant 0 : index
    %c0_8 = arith.constant 0 : index
    %16 = vector.load %arg2[%c0_7, %c0_8] : memref<64x16xbf16, #tpu.memory_space<vmem>>, vector<64x16xbf16>
    %17 = arith.truncf %15 : vector<16x128xf32> to vector<16x128xbf16>
    %cst_9 = arith.constant dense<0.000000e+00> : vector<64x128xf32>
    %18 = tpu.matmul %16, %17, %cst_9 {dimension_numbers = #tpu.dot_dimension_numbers<[1], [0], [0], [1], [0, 0, 1, 1], [], []>} : vector<64x16xbf16>, vector<16x128xbf16>, vector<64x128xf32> -> vector<64x128xf32>
    %c0_10 = arith.constant 0 : index
    %c0_11 = arith.constant 0 : index
    %19 = vector.load %arg0[%c0_10, %c0_11] : memref<64x128xf32, #tpu.memory_space<vmem>>, vector<64x128xf32>
    %c0_12 = arith.constant 0 : index
    %c0_13 = arith.constant 0 : index
    %c0_14 = arith.constant 0 : index
    %20 = vector.load %arg4[%c0_12, %c0_13, %c0_14] : memref<8x1x128xf32, #tpu.memory_space<vmem>>, vector<1x1x128xf32>
    %21 = vector.shape_cast %20 : vector<1x1x128xf32> to vector<1x128xf32>
    %c0_15 = arith.constant 0 : index
    %c0_16 = arith.constant 0 : index
    %c0_17 = arith.constant 0 : index
    %22 = vector.load %arg5[%c0_15, %c0_16, %c0_17] : memref<8x1x128xf32, #tpu.memory_space<vmem>>, vector<1x1x128xf32>
    %23 = vector.shape_cast %22 : vector<1x1x128xf32> to vector<1x128xf32>
    %24 = vector.broadcast %4 : vector<1x128xf32> to vector<64x128xf32>
    %25 = arith.subf %19, %24 : vector<64x128xf32>
    %26 = vector.broadcast %14 : vector<1x128xf32> to vector<64x128xf32>
    %27 = arith.mulf %25, %26 : vector<64x128xf32>
    %28 = vector.broadcast %21 : vector<1x128xf32> to vector<64x128xf32>
    %29 = arith.mulf %27, %28 : vector<64x128xf32>
    %30 = vector.broadcast %23 : vector<1x128xf32> to vector<64x128xf32>
    %31 = arith.addf %29, %30 : vector<64x128xf32>
    %cst_18 = arith.constant dense<0.000000e+00> : vector<128xf32>
    %32 = vector.multi_reduction <add>, %18, %cst_18 [0] : vector<64x128xf32> to vector<128xf32>
    %33 = vector.shape_cast %32 : vector<128xf32> to vector<1x128xf32>
    %cst_19 = arith.constant 6.400000e+01 : f32
    %34 = vector.broadcast %cst_19 : f32 to vector<1x128xf32>
    %35 = arith.divf %33, %34 : vector<1x128xf32>
    %36 = vector.broadcast %35 : vector<1x128xf32> to vector<64x128xf32>
    %37 = arith.subf %18, %36 : vector<64x128xf32>
    %38 = arith.mulf %37, %37 : vector<64x128xf32>
    %cst_20 = arith.constant dense<0.000000e+00> : vector<128xf32>
    %39 = vector.multi_reduction <add>, %38, %cst_20 [0] : vector<64x128xf32> to vector<128xf32>
    %40 = vector.shape_cast %39 : vector<128xf32> to vector<1x128xf32>
    %cst_21 = arith.constant 6.400000e+01 : f32
    %41 = vector.broadcast %cst_21 : f32 to vector<1x128xf32>
    %42 = arith.divf %40, %41 : vector<1x128xf32>
    %cst_22 = arith.constant 9.99999974E-6 : f32
    %43 = vector.broadcast %cst_22 : f32 to vector<1x128xf32>
    %44 = arith.addf %42, %43 : vector<1x128xf32>
    %45 = math.rsqrt %44 : vector<1x128xf32>
    %c0_23 = arith.constant 0 : index
    %c0_24 = arith.constant 0 : index
    %c0_25 = arith.constant 0 : index
    %46 = vector.load %arg6[%c0_23, %c0_24, %c0_25] : memref<8x1x128xf32, #tpu.memory_space<vmem>>, vector<1x1x128xf32>
    %47 = vector.shape_cast %46 : vector<1x1x128xf32> to vector<1x128xf32>
    %c0_26 = arith.constant 0 : index
    %c0_27 = arith.constant 0 : index
    %c0_28 = arith.constant 0 : index
    %48 = vector.load %arg7[%c0_26, %c0_27, %c0_28] : memref<8x1x128xf32, #tpu.memory_space<vmem>>, vector<1x1x128xf32>
    %49 = vector.shape_cast %48 : vector<1x1x128xf32> to vector<1x128xf32>
    %50 = vector.broadcast %35 : vector<1x128xf32> to vector<64x128xf32>
    %51 = arith.subf %18, %50 : vector<64x128xf32>
    %52 = vector.broadcast %45 : vector<1x128xf32> to vector<64x128xf32>
    %53 = arith.mulf %51, %52 : vector<64x128xf32>
    %54 = vector.broadcast %47 : vector<1x128xf32> to vector<64x128xf32>
    %55 = arith.mulf %53, %54 : vector<64x128xf32>
    %56 = vector.broadcast %49 : vector<1x128xf32> to vector<64x128xf32>
    %57 = arith.addf %55, %56 : vector<64x128xf32>
    %c2_i32 = arith.constant 2 : i32
    %58 = tpu.dynamic_rotate %57 by %c2_i32 dim 1 : vector<64x128xf32>, i32 -> vector<64x128xf32>
    %59 = arith.addf %31, %58 : vector<64x128xf32>
    %60 = arith.truncf %59 : vector<64x128xf32> to vector<64x128xbf16>
    %c0_29 = arith.constant 0 : index
    %c0_30 = arith.constant 0 : index
    %c0_31 = arith.constant 0 : index
    %61 = vector.load %arg8[%c0_29, %c0_30, %c0_31] : memref<8x128x128xbf16, #tpu.memory_space<vmem>>, vector<1x128x128xbf16>
    %62 = vector.shape_cast %61 : vector<1x128x128xbf16> to vector<128x128xbf16>
    %cst_32 = arith.constant dense<0.000000e+00> : vector<64x128xf32>
    %63 = tpu.matmul %60, %62, %cst_32 {dimension_numbers = #tpu.dot_dimension_numbers<[1], [0], [0], [1], [0, 0, 1, 1], [], []>} : vector<64x128xbf16>, vector<128x128xbf16>, vector<64x128xf32> -> vector<64x128xf32>
    %c0_33 = arith.constant 0 : index
    %c0_34 = arith.constant 0 : index
    %c0_35 = arith.constant 0 : index
    %64 = vector.load %arg9[%c0_33, %c0_34, %c0_35] : memref<8x1x128xf32, #tpu.memory_space<vmem>>, vector<1x1x128xf32>
    %65 = vector.shape_cast %64 : vector<1x1x128xf32> to vector<1x128xf32>
    %66 = vector.broadcast %65 : vector<1x128xf32> to vector<64x128xf32>
    %67 = arith.addf %63, %66 : vector<64x128xf32>
    %cst_36 = arith.constant 0.000000e+00 : f32
    %68 = vector.broadcast %cst_36 : f32 to vector<64x128xf32>
    %69 = arith.maximumf %67, %68 : vector<64x128xf32>
    %c0_37 = arith.constant 0 : index
    %c0_38 = arith.constant 0 : index
    %70 = vector.load %arg3[%c0_37, %c0_38] : memref<16x64xbf16, #tpu.memory_space<vmem>>, vector<16x64xbf16>
    %71 = arith.truncf %69 : vector<64x128xf32> to vector<64x128xbf16>
    %cst_39 = arith.constant dense<0.000000e+00> : vector<16x128xf32>
    %72 = tpu.matmul %70, %71, %cst_39 {dimension_numbers = #tpu.dot_dimension_numbers<[1], [0], [0], [1], [0, 0, 1, 1], [], []>} : vector<16x64xbf16>, vector<64x128xbf16>, vector<16x128xf32> -> vector<16x128xf32>
    %cst_40 = arith.constant dense<0.000000e+00> : vector<128xf32>
    %73 = vector.multi_reduction <add>, %72, %cst_40 [0] : vector<16x128xf32> to vector<128xf32>
    %74 = vector.shape_cast %73 : vector<128xf32> to vector<1x128xf32>
    %cst_41 = arith.constant 1.600000e+01 : f32
    %75 = vector.broadcast %cst_41 : f32 to vector<1x128xf32>
    %76 = arith.divf %74, %75 : vector<1x128xf32>
    %77 = vector.broadcast %76 : vector<1x128xf32> to vector<16x128xf32>
    %78 = arith.subf %72, %77 : vector<16x128xf32>
    %79 = arith.mulf %78, %78 : vector<16x128xf32>
    %cst_42 = arith.constant dense<0.000000e+00> : vector<128xf32>
    %80 = vector.multi_reduction <add>, %79, %cst_42 [0] : vector<16x128xf32> to vector<128xf32>
    %81 = vector.shape_cast %80 : vector<128xf32> to vector<1x128xf32>
    %cst_43 = arith.constant 1.600000e+01 : f32
    %82 = vector.broadcast %cst_43 : f32 to vector<1x128xf32>
    %83 = arith.divf %81, %82 : vector<1x128xf32>
    %cst_44 = arith.constant 9.99999974E-6 : f32
    %84 = vector.broadcast %cst_44 : f32 to vector<1x128xf32>
    %85 = arith.addf %83, %84 : vector<1x128xf32>
    %86 = math.rsqrt %85 : vector<1x128xf32>
    %c1 = arith.constant 1 : index
    %c0_45 = arith.constant 0 : index
    %c0_46 = arith.constant 0 : index
    %87 = vector.load %arg4[%c1, %c0_45, %c0_46] : memref<8x1x128xf32, #tpu.memory_space<vmem>>, vector<1x1x128xf32>
    %88 = vector.shape_cast %87 : vector<1x1x128xf32> to vector<1x128xf32>
    %c1_47 = arith.constant 1 : index
    %c0_48 = arith.constant 0 : index
    %c0_49 = arith.constant 0 : index
    %89 = vector.load %arg5[%c1_47, %c0_48, %c0_49] : memref<8x1x128xf32, #tpu.memory_space<vmem>>, vector<1x1x128xf32>
    %90 = vector.shape_cast %89 : vector<1x1x128xf32> to vector<1x128xf32>
    %91 = vector.broadcast %76 : vector<1x128xf32> to vector<16x128xf32>
    %92 = arith.subf %72, %91 : vector<16x128xf32>
    %93 = vector.broadcast %86 : vector<1x128xf32> to vector<16x128xf32>
    %94 = arith.mulf %92, %93 : vector<16x128xf32>
    %95 = vector.broadcast %88 : vector<1x128xf32> to vector<16x128xf32>
    %96 = arith.mulf %94, %95 : vector<16x128xf32>
    %97 = vector.broadcast %90 : vector<1x128xf32> to vector<16x128xf32>
    %98 = arith.addf %96, %97 : vector<16x128xf32>
    %cst_50 = arith.constant dense<0.000000e+00> : vector<128xf32>
    %99 = vector.multi_reduction <add>, %15, %cst_50 [0] : vector<16x128xf32> to vector<128xf32>
    %100 = vector.shape_cast %99 : vector<128xf32> to vector<1x128xf32>
    %cst_51 = arith.constant 1.600000e+01 : f32
    %101 = vector.broadcast %cst_51 : f32 to vector<1x128xf32>
    %102 = arith.divf %100, %101 : vector<1x128xf32>
    %103 = vector.broadcast %102 : vector<1x128xf32> to vector<16x128xf32>
    %104 = arith.subf %15, %103 : vector<16x128xf32>
    %105 = arith.mulf %104, %104 : vector<16x128xf32>
    %cst_52 = arith.constant dense<0.000000e+00> : vector<128xf32>
    %106 = vector.multi_reduction <add>, %105, %cst_52 [0] : vector<16x128xf32> to vector<128xf32>
    %107 = vector.shape_cast %106 : vector<128xf32> to vector<1x128xf32>
    %cst_53 = arith.constant 1.600000e+01 : f32
    %108 = vector.broadcast %cst_53 : f32 to vector<1x128xf32>
    %109 = arith.divf %107, %108 : vector<1x128xf32>
    %cst_54 = arith.constant 9.99999974E-6 : f32
    %110 = vector.broadcast %cst_54 : f32 to vector<1x128xf32>
    %111 = arith.addf %109, %110 : vector<1x128xf32>
    %112 = math.rsqrt %111 : vector<1x128xf32>
    %c1_55 = arith.constant 1 : index
    %c0_56 = arith.constant 0 : index
    %c0_57 = arith.constant 0 : index
    %113 = vector.load %arg6[%c1_55, %c0_56, %c0_57] : memref<8x1x128xf32, #tpu.memory_space<vmem>>, vector<1x1x128xf32>
    %114 = vector.shape_cast %113 : vector<1x1x128xf32> to vector<1x128xf32>
    %c1_58 = arith.constant 1 : index
    %c0_59 = arith.constant 0 : index
    %c0_60 = arith.constant 0 : index
    %115 = vector.load %arg7[%c1_58, %c0_59, %c0_60] : memref<8x1x128xf32, #tpu.memory_space<vmem>>, vector<1x1x128xf32>
    %116 = vector.shape_cast %115 : vector<1x1x128xf32> to vector<1x128xf32>
    %117 = vector.broadcast %102 : vector<1x128xf32> to vector<16x128xf32>
    %118 = arith.subf %15, %117 : vector<16x128xf32>
    %119 = vector.broadcast %112 : vector<1x128xf32> to vector<16x128xf32>
    %120 = arith.mulf %118, %119 : vector<16x128xf32>
    %121 = vector.broadcast %114 : vector<1x128xf32> to vector<16x128xf32>
    %122 = arith.mulf %120, %121 : vector<16x128xf32>
    %123 = vector.broadcast %116 : vector<1x128xf32> to vector<16x128xf32>
    %124 = arith.addf %122, %123 : vector<16x128xf32>
    %c9_i32 = arith.constant 9 : i32
    %125 = tpu.dynamic_rotate %124 by %c9_i32 dim 1 : vector<16x128xf32>, i32 -> vector<16x128xf32>
    %126 = arith.addf %98, %125 : vector<16x128xf32>
    %127 = arith.truncf %126 : vector<16x128xf32> to vector<16x128xbf16>
    %c1_61 = arith.constant 1 : index
    %c0_62 = arith.constant 0 : index
    %c0_63 = arith.constant 0 : index
    %128 = vector.load %arg8[%c1_61, %c0_62, %c0_63] : memref<8x128x128xbf16, #tpu.memory_space<vmem>>, vector<1x128x128xbf16>
    %129 = vector.shape_cast %128 : vector<1x128x128xbf16> to vector<128x128xbf16>
    %cst_64 = arith.constant dense<0.000000e+00> : vector<16x128xf32>
    %130 = tpu.matmul %127, %129, %cst_64 {dimension_numbers = #tpu.dot_dimension_numbers<[1], [0], [0], [1], [0, 0, 1, 1], [], []>} : vector<16x128xbf16>, vector<128x128xbf16>, vector<16x128xf32> -> vector<16x128xf32>
    %c1_65 = arith.constant 1 : index
    %c0_66 = arith.constant 0 : index
    %c0_67 = arith.constant 0 : index
    %131 = vector.load %arg9[%c1_65, %c0_66, %c0_67] : memref<8x1x128xf32, #tpu.memory_space<vmem>>, vector<1x1x128xf32>
    %132 = vector.shape_cast %131 : vector<1x1x128xf32> to vector<1x128xf32>
    %133 = vector.broadcast %132 : vector<1x128xf32> to vector<16x128xf32>
    %134 = arith.addf %130, %133 : vector<16x128xf32>
    %cst_68 = arith.constant 0.000000e+00 : f32
    %135 = vector.broadcast %cst_68 : f32 to vector<16x128xf32>
    %136 = arith.maximumf %134, %135 : vector<16x128xf32>
    %c0_69 = arith.constant 0 : index
    %c0_70 = arith.constant 0 : index
    %137 = vector.load %arg2[%c0_69, %c0_70] : memref<64x16xbf16, #tpu.memory_space<vmem>>, vector<64x16xbf16>
    %138 = arith.truncf %136 : vector<16x128xf32> to vector<16x128xbf16>
    %cst_71 = arith.constant dense<0.000000e+00> : vector<64x128xf32>
    %139 = tpu.matmul %137, %138, %cst_71 {dimension_numbers = #tpu.dot_dimension_numbers<[1], [0], [0], [1], [0, 0, 1, 1], [], []>} : vector<64x16xbf16>, vector<16x128xbf16>, vector<64x128xf32> -> vector<64x128xf32>
    %c0_72 = arith.constant 0 : index
    %c0_73 = arith.constant 0 : index
    %140 = vector.load %arg0[%c0_72, %c0_73] : memref<64x128xf32, #tpu.memory_space<vmem>>, vector<64x128xf32>
    %c2 = arith.constant 2 : index
    %c0_74 = arith.constant 0 : index
    %c0_75 = arith.constant 0 : index
    %141 = vector.load %arg4[%c2, %c0_74, %c0_75] : memref<8x1x128xf32, #tpu.memory_space<vmem>>, vector<1x1x128xf32>
    %142 = vector.shape_cast %141 : vector<1x1x128xf32> to vector<1x128xf32>
    %c2_76 = arith.constant 2 : index
    %c0_77 = arith.constant 0 : index
    %c0_78 = arith.constant 0 : index
    %143 = vector.load %arg5[%c2_76, %c0_77, %c0_78] : memref<8x1x128xf32, #tpu.memory_space<vmem>>, vector<1x1x128xf32>
    %144 = vector.shape_cast %143 : vector<1x1x128xf32> to vector<1x128xf32>
    %145 = vector.broadcast %4 : vector<1x128xf32> to vector<64x128xf32>
    %146 = arith.subf %140, %145 : vector<64x128xf32>
    %147 = vector.broadcast %14 : vector<1x128xf32> to vector<64x128xf32>
    %148 = arith.mulf %146, %147 : vector<64x128xf32>
    %149 = vector.broadcast %142 : vector<1x128xf32> to vector<64x128xf32>
    %150 = arith.mulf %148, %149 : vector<64x128xf32>
    %151 = vector.broadcast %144 : vector<1x128xf32> to vector<64x128xf32>
    %152 = arith.addf %150, %151 : vector<64x128xf32>
    %cst_79 = arith.constant dense<0.000000e+00> : vector<128xf32>
    %153 = vector.multi_reduction <add>, %139, %cst_79 [0] : vector<64x128xf32> to vector<128xf32>
    %154 = vector.shape_cast %153 : vector<128xf32> to vector<1x128xf32>
    %cst_80 = arith.constant 6.400000e+01 : f32
    %155 = vector.broadcast %cst_80 : f32 to vector<1x128xf32>
    %156 = arith.divf %154, %155 : vector<1x128xf32>
    %157 = vector.broadcast %156 : vector<1x128xf32> to vector<64x128xf32>
    %158 = arith.subf %139, %157 : vector<64x128xf32>
    %159 = arith.mulf %158, %158 : vector<64x128xf32>
    %cst_81 = arith.constant dense<0.000000e+00> : vector<128xf32>
    %160 = vector.multi_reduction <add>, %159, %cst_81 [0] : vector<64x128xf32> to vector<128xf32>
    %161 = vector.shape_cast %160 : vector<128xf32> to vector<1x128xf32>
    %cst_82 = arith.constant 6.400000e+01 : f32
    %162 = vector.broadcast %cst_82 : f32 to vector<1x128xf32>
    %163 = arith.divf %161, %162 : vector<1x128xf32>
    %cst_83 = arith.constant 9.99999974E-6 : f32
    %164 = vector.broadcast %cst_83 : f32 to vector<1x128xf32>
    %165 = arith.addf %163, %164 : vector<1x128xf32>
    %166 = math.rsqrt %165 : vector<1x128xf32>
    %c2_84 = arith.constant 2 : index
    %c0_85 = arith.constant 0 : index
    %c0_86 = arith.constant 0 : index
    %167 = vector.load %arg6[%c2_84, %c0_85, %c0_86] : memref<8x1x128xf32, #tpu.memory_space<vmem>>, vector<1x1x128xf32>
    %168 = vector.shape_cast %167 : vector<1x1x128xf32> to vector<1x128xf32>
    %c2_87 = arith.constant 2 : index
    %c0_88 = arith.constant 0 : index
    %c0_89 = arith.constant 0 : index
    %169 = vector.load %arg7[%c2_87, %c0_88, %c0_89] : memref<8x1x128xf32, #tpu.memory_space<vmem>>, vector<1x1x128xf32>
    %170 = vector.shape_cast %169 : vector<1x1x128xf32> to vector<1x128xf32>
    %171 = vector.broadcast %156 : vector<1x128xf32> to vector<64x128xf32>
    %172 = arith.subf %139, %171 : vector<64x128xf32>
    %173 = vector.broadcast %166 : vector<1x128xf32> to vector<64x128xf32>
    %174 = arith.mulf %172, %173 : vector<64x128xf32>
    %175 = vector.broadcast %168 : vector<1x128xf32> to vector<64x128xf32>
    %176 = arith.mulf %174, %175 : vector<64x128xf32>
    %177 = vector.broadcast %170 : vector<1x128xf32> to vector<64x128xf32>
    %178 = arith.addf %176, %177 : vector<64x128xf32>
    %c2_i32_90 = arith.constant 2 : i32
    %179 = tpu.dynamic_rotate %178 by %c2_i32_90 dim 1 : vector<64x128xf32>, i32 -> vector<64x128xf32>
    %180 = arith.addf %152, %179 : vector<64x128xf32>
    %181 = arith.truncf %180 : vector<64x128xf32> to vector<64x128xbf16>
    %c2_91 = arith.constant 2 : index
    %c0_92 = arith.constant 0 : index
    %c0_93 = arith.constant 0 : index
    %182 = vector.load %arg8[%c2_91, %c0_92, %c0_93] : memref<8x128x128xbf16, #tpu.memory_space<vmem>>, vector<1x128x128xbf16>
    %183 = vector.shape_cast %182 : vector<1x128x128xbf16> to vector<128x128xbf16>
    %cst_94 = arith.constant dense<0.000000e+00> : vector<64x128xf32>
    %184 = tpu.matmul %181, %183, %cst_94 {dimension_numbers = #tpu.dot_dimension_numbers<[1], [0], [0], [1], [0, 0, 1, 1], [], []>} : vector<64x128xbf16>, vector<128x128xbf16>, vector<64x128xf32> -> vector<64x128xf32>
    %c2_95 = arith.constant 2 : index
    %c0_96 = arith.constant 0 : index
    %c0_97 = arith.constant 0 : index
    %185 = vector.load %arg9[%c2_95, %c0_96, %c0_97] : memref<8x1x128xf32, #tpu.memory_space<vmem>>, vector<1x1x128xf32>
    %186 = vector.shape_cast %185 : vector<1x1x128xf32> to vector<1x128xf32>
    %187 = vector.broadcast %186 : vector<1x128xf32> to vector<64x128xf32>
    %188 = arith.addf %184, %187 : vector<64x128xf32>
    %cst_98 = arith.constant 0.000000e+00 : f32
    %189 = vector.broadcast %cst_98 : f32 to vector<64x128xf32>
    %190 = arith.maximumf %188, %189 : vector<64x128xf32>
    %c0_99 = arith.constant 0 : index
    %c0_100 = arith.constant 0 : index
    %191 = vector.load %arg3[%c0_99, %c0_100] : memref<16x64xbf16, #tpu.memory_space<vmem>>, vector<16x64xbf16>
    %192 = arith.truncf %190 : vector<64x128xf32> to vector<64x128xbf16>
    %cst_101 = arith.constant dense<0.000000e+00> : vector<16x128xf32>
    %193 = tpu.matmul %191, %192, %cst_101 {dimension_numbers = #tpu.dot_dimension_numbers<[1], [0], [0], [1], [0, 0, 1, 1], [], []>} : vector<16x64xbf16>, vector<64x128xbf16>, vector<16x128xf32> -> vector<16x128xf32>
    %cst_102 = arith.constant dense<0.000000e+00> : vector<128xf32>
    %194 = vector.multi_reduction <add>, %193, %cst_102 [0] : vector<16x128xf32> to vector<128xf32>
    %195 = vector.shape_cast %194 : vector<128xf32> to vector<1x128xf32>
    %cst_103 = arith.constant 1.600000e+01 : f32
    %196 = vector.broadcast %cst_103 : f32 to vector<1x128xf32>
    %197 = arith.divf %195, %196 : vector<1x128xf32>
    %198 = vector.broadcast %197 : vector<1x128xf32> to vector<16x128xf32>
    %199 = arith.subf %193, %198 : vector<16x128xf32>
    %200 = arith.mulf %199, %199 : vector<16x128xf32>
    %cst_104 = arith.constant dense<0.000000e+00> : vector<128xf32>
    %201 = vector.multi_reduction <add>, %200, %cst_104 [0] : vector<16x128xf32> to vector<128xf32>
    %202 = vector.shape_cast %201 : vector<128xf32> to vector<1x128xf32>
    %cst_105 = arith.constant 1.600000e+01 : f32
    %203 = vector.broadcast %cst_105 : f32 to vector<1x128xf32>
    %204 = arith.divf %202, %203 : vector<1x128xf32>
    %cst_106 = arith.constant 9.99999974E-6 : f32
    %205 = vector.broadcast %cst_106 : f32 to vector<1x128xf32>
    %206 = arith.addf %204, %205 : vector<1x128xf32>
    %207 = math.rsqrt %206 : vector<1x128xf32>
    %c3 = arith.constant 3 : index
    %c0_107 = arith.constant 0 : index
    %c0_108 = arith.constant 0 : index
    %208 = vector.load %arg4[%c3, %c0_107, %c0_108] : memref<8x1x128xf32, #tpu.memory_space<vmem>>, vector<1x1x128xf32>
    %209 = vector.shape_cast %208 : vector<1x1x128xf32> to vector<1x128xf32>
    %c3_109 = arith.constant 3 : index
    %c0_110 = arith.constant 0 : index
    %c0_111 = arith.constant 0 : index
    %210 = vector.load %arg5[%c3_109, %c0_110, %c0_111] : memref<8x1x128xf32, #tpu.memory_space<vmem>>, vector<1x1x128xf32>
    %211 = vector.shape_cast %210 : vector<1x1x128xf32> to vector<1x128xf32>
    %212 = vector.broadcast %197 : vector<1x128xf32> to vector<16x128xf32>
    %213 = arith.subf %193, %212 : vector<16x128xf32>
    %214 = vector.broadcast %207 : vector<1x128xf32> to vector<16x128xf32>
    %215 = arith.mulf %213, %214 : vector<16x128xf32>
    %216 = vector.broadcast %209 : vector<1x128xf32> to vector<16x128xf32>
    %217 = arith.mulf %215, %216 : vector<16x128xf32>
    %218 = vector.broadcast %211 : vector<1x128xf32> to vector<16x128xf32>
    %219 = arith.addf %217, %218 : vector<16x128xf32>
    %cst_112 = arith.constant dense<0.000000e+00> : vector<128xf32>
    %220 = vector.multi_reduction <add>, %136, %cst_112 [0] : vector<16x128xf32> to vector<128xf32>
    %221 = vector.shape_cast %220 : vector<128xf32> to vector<1x128xf32>
    %cst_113 = arith.constant 1.600000e+01 : f32
    %222 = vector.broadcast %cst_113 : f32 to vector<1x128xf32>
    %223 = arith.divf %221, %222 : vector<1x128xf32>
    %224 = vector.broadcast %223 : vector<1x128xf32> to vector<16x128xf32>
    %225 = arith.subf %136, %224 : vector<16x128xf32>
    %226 = arith.mulf %225, %225 : vector<16x128xf32>
    %cst_114 = arith.constant dense<0.000000e+00> : vector<128xf32>
    %227 = vector.multi_reduction <add>, %226, %cst_114 [0] : vector<16x128xf32> to vector<128xf32>
    %228 = vector.shape_cast %227 : vector<128xf32> to vector<1x128xf32>
    %cst_115 = arith.constant 1.600000e+01 : f32
    %229 = vector.broadcast %cst_115 : f32 to vector<1x128xf32>
    %230 = arith.divf %228, %229 : vector<1x128xf32>
    %cst_116 = arith.constant 9.99999974E-6 : f32
    %231 = vector.broadcast %cst_116 : f32 to vector<1x128xf32>
    %232 = arith.addf %230, %231 : vector<1x128xf32>
    %233 = math.rsqrt %232 : vector<1x128xf32>
    %c3_117 = arith.constant 3 : index
    %c0_118 = arith.constant 0 : index
    %c0_119 = arith.constant 0 : index
    %234 = vector.load %arg6[%c3_117, %c0_118, %c0_119] : memref<8x1x128xf32, #tpu.memory_space<vmem>>, vector<1x1x128xf32>
    %235 = vector.shape_cast %234 : vector<1x1x128xf32> to vector<1x128xf32>
    %c3_120 = arith.constant 3 : index
    %c0_121 = arith.constant 0 : index
    %c0_122 = arith.constant 0 : index
    %236 = vector.load %arg7[%c3_120, %c0_121, %c0_122] : memref<8x1x128xf32, #tpu.memory_space<vmem>>, vector<1x1x128xf32>
    %237 = vector.shape_cast %236 : vector<1x1x128xf32> to vector<1x128xf32>
    %238 = vector.broadcast %223 : vector<1x128xf32> to vector<16x128xf32>
    %239 = arith.subf %136, %238 : vector<16x128xf32>
    %240 = vector.broadcast %233 : vector<1x128xf32> to vector<16x128xf32>
    %241 = arith.mulf %239, %240 : vector<16x128xf32>
    %242 = vector.broadcast %235 : vector<1x128xf32> to vector<16x128xf32>
    %243 = arith.mulf %241, %242 : vector<16x128xf32>
    %244 = vector.broadcast %237 : vector<1x128xf32> to vector<16x128xf32>
    %245 = arith.addf %243, %244 : vector<16x128xf32>
    %c10_i32 = arith.constant 10 : i32
    %246 = tpu.dynamic_rotate %245 by %c10_i32 dim 1 : vector<16x128xf32>, i32 -> vector<16x128xf32>
    %247 = arith.addf %219, %246 : vector<16x128xf32>
    %248 = arith.truncf %247 : vector<16x128xf32> to vector<16x128xbf16>
    %c3_123 = arith.constant 3 : index
    %c0_124 = arith.constant 0 : index
    %c0_125 = arith.constant 0 : index
    %249 = vector.load %arg8[%c3_123, %c0_124, %c0_125] : memref<8x128x128xbf16, #tpu.memory_space<vmem>>, vector<1x128x128xbf16>
    %250 = vector.shape_cast %249 : vector<1x128x128xbf16> to vector<128x128xbf16>
    %cst_126 = arith.constant dense<0.000000e+00> : vector<16x128xf32>
    %251 = tpu.matmul %248, %250, %cst_126 {dimension_numbers = #tpu.dot_dimension_numbers<[1], [0], [0], [1], [0, 0, 1, 1], [], []>} : vector<16x128xbf16>, vector<128x128xbf16>, vector<16x128xf32> -> vector<16x128xf32>
    %c3_127 = arith.constant 3 : index
    %c0_128 = arith.constant 0 : index
    %c0_129 = arith.constant 0 : index
    %252 = vector.load %arg9[%c3_127, %c0_128, %c0_129] : memref<8x1x128xf32, #tpu.memory_space<vmem>>, vector<1x1x128xf32>
    %253 = vector.shape_cast %252 : vector<1x1x128xf32> to vector<1x128xf32>
    %254 = vector.broadcast %253 : vector<1x128xf32> to vector<16x128xf32>
    %255 = arith.addf %251, %254 : vector<16x128xf32>
    %cst_130 = arith.constant 0.000000e+00 : f32
    %256 = vector.broadcast %cst_130 : f32 to vector<16x128xf32>
    %257 = arith.maximumf %255, %256 : vector<16x128xf32>
    %c0_131 = arith.constant 0 : index
    %c0_132 = arith.constant 0 : index
    %258 = vector.load %arg2[%c0_131, %c0_132] : memref<64x16xbf16, #tpu.memory_space<vmem>>, vector<64x16xbf16>
    %259 = arith.truncf %257 : vector<16x128xf32> to vector<16x128xbf16>
    %cst_133 = arith.constant dense<0.000000e+00> : vector<64x128xf32>
    %260 = tpu.matmul %258, %259, %cst_133 {dimension_numbers = #tpu.dot_dimension_numbers<[1], [0], [0], [1], [0, 0, 1, 1], [], []>} : vector<64x16xbf16>, vector<16x128xbf16>, vector<64x128xf32> -> vector<64x128xf32>
    %c0_134 = arith.constant 0 : index
    %c0_135 = arith.constant 0 : index
    %261 = vector.load %arg0[%c0_134, %c0_135] : memref<64x128xf32, #tpu.memory_space<vmem>>, vector<64x128xf32>
    %c4 = arith.constant 4 : index
    %c0_136 = arith.constant 0 : index
    %c0_137 = arith.constant 0 : index
    %262 = vector.load %arg4[%c4, %c0_136, %c0_137] : memref<8x1x128xf32, #tpu.memory_space<vmem>>, vector<1x1x128xf32>
    %263 = vector.shape_cast %262 : vector<1x1x128xf32> to vector<1x128xf32>
    %c4_138 = arith.constant 4 : index
    %c0_139 = arith.constant 0 : index
    %c0_140 = arith.constant 0 : index
    %264 = vector.load %arg5[%c4_138, %c0_139, %c0_140] : memref<8x1x128xf32, #tpu.memory_space<vmem>>, vector<1x1x128xf32>
    %265 = vector.shape_cast %264 : vector<1x1x128xf32> to vector<1x128xf32>
    %266 = vector.broadcast %4 : vector<1x128xf32> to vector<64x128xf32>
    %267 = arith.subf %261, %266 : vector<64x128xf32>
    %268 = vector.broadcast %14 : vector<1x128xf32> to vector<64x128xf32>
    %269 = arith.mulf %267, %268 : vector<64x128xf32>
    %270 = vector.broadcast %263 : vector<1x128xf32> to vector<64x128xf32>
    %271 = arith.mulf %269, %270 : vector<64x128xf32>
    %272 = vector.broadcast %265 : vector<1x128xf32> to vector<64x128xf32>
    %273 = arith.addf %271, %272 : vector<64x128xf32>
    %cst_141 = arith.constant dense<0.000000e+00> : vector<128xf32>
    %274 = vector.multi_reduction <add>, %260, %cst_141 [0] : vector<64x128xf32> to vector<128xf32>
    %275 = vector.shape_cast %274 : vector<128xf32> to vector<1x128xf32>
    %cst_142 = arith.constant 6.400000e+01 : f32
    %276 = vector.broadcast %cst_142 : f32 to vector<1x128xf32>
    %277 = arith.divf %275, %276 : vector<1x128xf32>
    %278 = vector.broadcast %277 : vector<1x128xf32> to vector<64x128xf32>
    %279 = arith.subf %260, %278 : vector<64x128xf32>
    %280 = arith.mulf %279, %279 : vector<64x128xf32>
    %cst_143 = arith.constant dense<0.000000e+00> : vector<128xf32>
    %281 = vector.multi_reduction <add>, %280, %cst_143 [0] : vector<64x128xf32> to vector<128xf32>
    %282 = vector.shape_cast %281 : vector<128xf32> to vector<1x128xf32>
    %cst_144 = arith.constant 6.400000e+01 : f32
    %283 = vector.broadcast %cst_144 : f32 to vector<1x128xf32>
    %284 = arith.divf %282, %283 : vector<1x128xf32>
    %cst_145 = arith.constant 9.99999974E-6 : f32
    %285 = vector.broadcast %cst_145 : f32 to vector<1x128xf32>
    %286 = arith.addf %284, %285 : vector<1x128xf32>
    %287 = math.rsqrt %286 : vector<1x128xf32>
    %c4_146 = arith.constant 4 : index
    %c0_147 = arith.constant 0 : index
    %c0_148 = arith.constant 0 : index
    %288 = vector.load %arg6[%c4_146, %c0_147, %c0_148] : memref<8x1x128xf32, #tpu.memory_space<vmem>>, vector<1x1x128xf32>
    %289 = vector.shape_cast %288 : vector<1x1x128xf32> to vector<1x128xf32>
    %c4_149 = arith.constant 4 : index
    %c0_150 = arith.constant 0 : index
    %c0_151 = arith.constant 0 : index
    %290 = vector.load %arg7[%c4_149, %c0_150, %c0_151] : memref<8x1x128xf32, #tpu.memory_space<vmem>>, vector<1x1x128xf32>
    %291 = vector.shape_cast %290 : vector<1x1x128xf32> to vector<1x128xf32>
    %292 = vector.broadcast %277 : vector<1x128xf32> to vector<64x128xf32>
    %293 = arith.subf %260, %292 : vector<64x128xf32>
    %294 = vector.broadcast %287 : vector<1x128xf32> to vector<64x128xf32>
    %295 = arith.mulf %293, %294 : vector<64x128xf32>
    %296 = vector.broadcast %289 : vector<1x128xf32> to vector<64x128xf32>
    %297 = arith.mulf %295, %296 : vector<64x128xf32>
    %298 = vector.broadcast %291 : vector<1x128xf32> to vector<64x128xf32>
    %299 = arith.addf %297, %298 : vector<64x128xf32>
    %c2_i32_152 = arith.constant 2 : i32
    %300 = tpu.dynamic_rotate %299 by %c2_i32_152 dim 1 : vector<64x128xf32>, i32 -> vector<64x128xf32>
    %301 = arith.addf %273, %300 : vector<64x128xf32>
    %302 = arith.truncf %301 : vector<64x128xf32> to vector<64x128xbf16>
    %c4_153 = arith.constant 4 : index
    %c0_154 = arith.constant 0 : index
    %c0_155 = arith.constant 0 : index
    %303 = vector.load %arg8[%c4_153, %c0_154, %c0_155] : memref<8x128x128xbf16, #tpu.memory_space<vmem>>, vector<1x128x128xbf16>
    %304 = vector.shape_cast %303 : vector<1x128x128xbf16> to vector<128x128xbf16>
    %cst_156 = arith.constant dense<0.000000e+00> : vector<64x128xf32>
    %305 = tpu.matmul %302, %304, %cst_156 {dimension_numbers = #tpu.dot_dimension_numbers<[1], [0], [0], [1], [0, 0, 1, 1], [], []>} : vector<64x128xbf16>, vector<128x128xbf16>, vector<64x128xf32> -> vector<64x128xf32>
    %c4_157 = arith.constant 4 : index
    %c0_158 = arith.constant 0 : index
    %c0_159 = arith.constant 0 : index
    %306 = vector.load %arg9[%c4_157, %c0_158, %c0_159] : memref<8x1x128xf32, #tpu.memory_space<vmem>>, vector<1x1x128xf32>
    %307 = vector.shape_cast %306 : vector<1x1x128xf32> to vector<1x128xf32>
    %308 = vector.broadcast %307 : vector<1x128xf32> to vector<64x128xf32>
    %309 = arith.addf %305, %308 : vector<64x128xf32>
    %cst_160 = arith.constant 0.000000e+00 : f32
    %310 = vector.broadcast %cst_160 : f32 to vector<64x128xf32>
    %311 = arith.maximumf %309, %310 : vector<64x128xf32>
    %c0_161 = arith.constant 0 : index
    %c0_162 = arith.constant 0 : index
    %312 = vector.load %arg3[%c0_161, %c0_162] : memref<16x64xbf16, #tpu.memory_space<vmem>>, vector<16x64xbf16>
    %313 = arith.truncf %311 : vector<64x128xf32> to vector<64x128xbf16>
    %cst_163 = arith.constant dense<0.000000e+00> : vector<16x128xf32>
    %314 = tpu.matmul %312, %313, %cst_163 {dimension_numbers = #tpu.dot_dimension_numbers<[1], [0], [0], [1], [0, 0, 1, 1], [], []>} : vector<16x64xbf16>, vector<64x128xbf16>, vector<16x128xf32> -> vector<16x128xf32>
    %cst_164 = arith.constant dense<0.000000e+00> : vector<128xf32>
    %315 = vector.multi_reduction <add>, %314, %cst_164 [0] : vector<16x128xf32> to vector<128xf32>
    %316 = vector.shape_cast %315 : vector<128xf32> to vector<1x128xf32>
    %cst_165 = arith.constant 1.600000e+01 : f32
    %317 = vector.broadcast %cst_165 : f32 to vector<1x128xf32>
    %318 = arith.divf %316, %317 : vector<1x128xf32>
    %319 = vector.broadcast %318 : vector<1x128xf32> to vector<16x128xf32>
    %320 = arith.subf %314, %319 : vector<16x128xf32>
    %321 = arith.mulf %320, %320 : vector<16x128xf32>
    %cst_166 = arith.constant dense<0.000000e+00> : vector<128xf32>
    %322 = vector.multi_reduction <add>, %321, %cst_166 [0] : vector<16x128xf32> to vector<128xf32>
    %323 = vector.shape_cast %322 : vector<128xf32> to vector<1x128xf32>
    %cst_167 = arith.constant 1.600000e+01 : f32
    %324 = vector.broadcast %cst_167 : f32 to vector<1x128xf32>
    %325 = arith.divf %323, %324 : vector<1x128xf32>
    %cst_168 = arith.constant 9.99999974E-6 : f32
    %326 = vector.broadcast %cst_168 : f32 to vector<1x128xf32>
    %327 = arith.addf %325, %326 : vector<1x128xf32>
    %328 = math.rsqrt %327 : vector<1x128xf32>
    %c5 = arith.constant 5 : index
    %c0_169 = arith.constant 0 : index
    %c0_170 = arith.constant 0 : index
    %329 = vector.load %arg4[%c5, %c0_169, %c0_170] : memref<8x1x128xf32, #tpu.memory_space<vmem>>, vector<1x1x128xf32>
    %330 = vector.shape_cast %329 : vector<1x1x128xf32> to vector<1x128xf32>
    %c5_171 = arith.constant 5 : index
    %c0_172 = arith.constant 0 : index
    %c0_173 = arith.constant 0 : index
    %331 = vector.load %arg5[%c5_171, %c0_172, %c0_173] : memref<8x1x128xf32, #tpu.memory_space<vmem>>, vector<1x1x128xf32>
    %332 = vector.shape_cast %331 : vector<1x1x128xf32> to vector<1x128xf32>
    %333 = vector.broadcast %318 : vector<1x128xf32> to vector<16x128xf32>
    %334 = arith.subf %314, %333 : vector<16x128xf32>
    %335 = vector.broadcast %328 : vector<1x128xf32> to vector<16x128xf32>
    %336 = arith.mulf %334, %335 : vector<16x128xf32>
    %337 = vector.broadcast %330 : vector<1x128xf32> to vector<16x128xf32>
    %338 = arith.mulf %336, %337 : vector<16x128xf32>
    %339 = vector.broadcast %332 : vector<1x128xf32> to vector<16x128xf32>
    %340 = arith.addf %338, %339 : vector<16x128xf32>
    %cst_174 = arith.constant dense<0.000000e+00> : vector<128xf32>
    %341 = vector.multi_reduction <add>, %257, %cst_174 [0] : vector<16x128xf32> to vector<128xf32>
    %342 = vector.shape_cast %341 : vector<128xf32> to vector<1x128xf32>
    %cst_175 = arith.constant 1.600000e+01 : f32
    %343 = vector.broadcast %cst_175 : f32 to vector<1x128xf32>
    %344 = arith.divf %342, %343 : vector<1x128xf32>
    %345 = vector.broadcast %344 : vector<1x128xf32> to vector<16x128xf32>
    %346 = arith.subf %257, %345 : vector<16x128xf32>
    %347 = arith.mulf %346, %346 : vector<16x128xf32>
    %cst_176 = arith.constant dense<0.000000e+00> : vector<128xf32>
    %348 = vector.multi_reduction <add>, %347, %cst_176 [0] : vector<16x128xf32> to vector<128xf32>
    %349 = vector.shape_cast %348 : vector<128xf32> to vector<1x128xf32>
    %cst_177 = arith.constant 1.600000e+01 : f32
    %350 = vector.broadcast %cst_177 : f32 to vector<1x128xf32>
    %351 = arith.divf %349, %350 : vector<1x128xf32>
    %cst_178 = arith.constant 9.99999974E-6 : f32
    %352 = vector.broadcast %cst_178 : f32 to vector<1x128xf32>
    %353 = arith.addf %351, %352 : vector<1x128xf32>
    %354 = math.rsqrt %353 : vector<1x128xf32>
    %c5_179 = arith.constant 5 : index
    %c0_180 = arith.constant 0 : index
    %c0_181 = arith.constant 0 : index
    %355 = vector.load %arg6[%c5_179, %c0_180, %c0_181] : memref<8x1x128xf32, #tpu.memory_space<vmem>>, vector<1x1x128xf32>
    %356 = vector.shape_cast %355 : vector<1x1x128xf32> to vector<1x128xf32>
    %c5_182 = arith.constant 5 : index
    %c0_183 = arith.constant 0 : index
    %c0_184 = arith.constant 0 : index
    %357 = vector.load %arg7[%c5_182, %c0_183, %c0_184] : memref<8x1x128xf32, #tpu.memory_space<vmem>>, vector<1x1x128xf32>
    %358 = vector.shape_cast %357 : vector<1x1x128xf32> to vector<1x128xf32>
    %359 = vector.broadcast %344 : vector<1x128xf32> to vector<16x128xf32>
    %360 = arith.subf %257, %359 : vector<16x128xf32>
    %361 = vector.broadcast %354 : vector<1x128xf32> to vector<16x128xf32>
    %362 = arith.mulf %360, %361 : vector<16x128xf32>
    %363 = vector.broadcast %356 : vector<1x128xf32> to vector<16x128xf32>
    %364 = arith.mulf %362, %363 : vector<16x128xf32>
    %365 = vector.broadcast %358 : vector<1x128xf32> to vector<16x128xf32>
    %366 = arith.addf %364, %365 : vector<16x128xf32>
    %c10_i32_185 = arith.constant 10 : i32
    %367 = tpu.dynamic_rotate %366 by %c10_i32_185 dim 1 : vector<16x128xf32>, i32 -> vector<16x128xf32>
    %368 = arith.addf %340, %367 : vector<16x128xf32>
    %369 = arith.truncf %368 : vector<16x128xf32> to vector<16x128xbf16>
    %c5_186 = arith.constant 5 : index
    %c0_187 = arith.constant 0 : index
    %c0_188 = arith.constant 0 : index
    %370 = vector.load %arg8[%c5_186, %c0_187, %c0_188] : memref<8x128x128xbf16, #tpu.memory_space<vmem>>, vector<1x128x128xbf16>
    %371 = vector.shape_cast %370 : vector<1x128x128xbf16> to vector<128x128xbf16>
    %cst_189 = arith.constant dense<0.000000e+00> : vector<16x128xf32>
    %372 = tpu.matmul %369, %371, %cst_189 {dimension_numbers = #tpu.dot_dimension_numbers<[1], [0], [0], [1], [0, 0, 1, 1], [], []>} : vector<16x128xbf16>, vector<128x128xbf16>, vector<16x128xf32> -> vector<16x128xf32>
    %c5_190 = arith.constant 5 : index
    %c0_191 = arith.constant 0 : index
    %c0_192 = arith.constant 0 : index
    %373 = vector.load %arg9[%c5_190, %c0_191, %c0_192] : memref<8x1x128xf32, #tpu.memory_space<vmem>>, vector<1x1x128xf32>
    %374 = vector.shape_cast %373 : vector<1x1x128xf32> to vector<1x128xf32>
    %375 = vector.broadcast %374 : vector<1x128xf32> to vector<16x128xf32>
    %376 = arith.addf %372, %375 : vector<16x128xf32>
    %cst_193 = arith.constant 0.000000e+00 : f32
    %377 = vector.broadcast %cst_193 : f32 to vector<16x128xf32>
    %378 = arith.maximumf %376, %377 : vector<16x128xf32>
    %c0_194 = arith.constant 0 : index
    %c0_195 = arith.constant 0 : index
    %379 = vector.load %arg2[%c0_194, %c0_195] : memref<64x16xbf16, #tpu.memory_space<vmem>>, vector<64x16xbf16>
    %380 = arith.truncf %378 : vector<16x128xf32> to vector<16x128xbf16>
    %cst_196 = arith.constant dense<0.000000e+00> : vector<64x128xf32>
    %381 = tpu.matmul %379, %380, %cst_196 {dimension_numbers = #tpu.dot_dimension_numbers<[1], [0], [0], [1], [0, 0, 1, 1], [], []>} : vector<64x16xbf16>, vector<16x128xbf16>, vector<64x128xf32> -> vector<64x128xf32>
    %c0_197 = arith.constant 0 : index
    %c0_198 = arith.constant 0 : index
    %382 = vector.load %arg0[%c0_197, %c0_198] : memref<64x128xf32, #tpu.memory_space<vmem>>, vector<64x128xf32>
    %c6 = arith.constant 6 : index
    %c0_199 = arith.constant 0 : index
    %c0_200 = arith.constant 0 : index
    %383 = vector.load %arg4[%c6, %c0_199, %c0_200] : memref<8x1x128xf32, #tpu.memory_space<vmem>>, vector<1x1x128xf32>
    %384 = vector.shape_cast %383 : vector<1x1x128xf32> to vector<1x128xf32>
    %c6_201 = arith.constant 6 : index
    %c0_202 = arith.constant 0 : index
    %c0_203 = arith.constant 0 : index
    %385 = vector.load %arg5[%c6_201, %c0_202, %c0_203] : memref<8x1x128xf32, #tpu.memory_space<vmem>>, vector<1x1x128xf32>
    %386 = vector.shape_cast %385 : vector<1x1x128xf32> to vector<1x128xf32>
    %387 = vector.broadcast %4 : vector<1x128xf32> to vector<64x128xf32>
    %388 = arith.subf %382, %387 : vector<64x128xf32>
    %389 = vector.broadcast %14 : vector<1x128xf32> to vector<64x128xf32>
    %390 = arith.mulf %388, %389 : vector<64x128xf32>
    %391 = vector.broadcast %384 : vector<1x128xf32> to vector<64x128xf32>
    %392 = arith.mulf %390, %391 : vector<64x128xf32>
    %393 = vector.broadcast %386 : vector<1x128xf32> to vector<64x128xf32>
    %394 = arith.addf %392, %393 : vector<64x128xf32>
    %cst_204 = arith.constant dense<0.000000e+00> : vector<128xf32>
    %395 = vector.multi_reduction <add>, %381, %cst_204 [0] : vector<64x128xf32> to vector<128xf32>
    %396 = vector.shape_cast %395 : vector<128xf32> to vector<1x128xf32>
    %cst_205 = arith.constant 6.400000e+01 : f32
    %397 = vector.broadcast %cst_205 : f32 to vector<1x128xf32>
    %398 = arith.divf %396, %397 : vector<1x128xf32>
    %399 = vector.broadcast %398 : vector<1x128xf32> to vector<64x128xf32>
    %400 = arith.subf %381, %399 : vector<64x128xf32>
    %401 = arith.mulf %400, %400 : vector<64x128xf32>
    %cst_206 = arith.constant dense<0.000000e+00> : vector<128xf32>
    %402 = vector.multi_reduction <add>, %401, %cst_206 [0] : vector<64x128xf32> to vector<128xf32>
    %403 = vector.shape_cast %402 : vector<128xf32> to vector<1x128xf32>
    %cst_207 = arith.constant 6.400000e+01 : f32
    %404 = vector.broadcast %cst_207 : f32 to vector<1x128xf32>
    %405 = arith.divf %403, %404 : vector<1x128xf32>
    %cst_208 = arith.constant 9.99999974E-6 : f32
    %406 = vector.broadcast %cst_208 : f32 to vector<1x128xf32>
    %407 = arith.addf %405, %406 : vector<1x128xf32>
    %408 = math.rsqrt %407 : vector<1x128xf32>
    %c6_209 = arith.constant 6 : index
    %c0_210 = arith.constant 0 : index
    %c0_211 = arith.constant 0 : index
    %409 = vector.load %arg6[%c6_209, %c0_210, %c0_211] : memref<8x1x128xf32, #tpu.memory_space<vmem>>, vector<1x1x128xf32>
    %410 = vector.shape_cast %409 : vector<1x1x128xf32> to vector<1x128xf32>
    %c6_212 = arith.constant 6 : index
    %c0_213 = arith.constant 0 : index
    %c0_214 = arith.constant 0 : index
    %411 = vector.load %arg7[%c6_212, %c0_213, %c0_214] : memref<8x1x128xf32, #tpu.memory_space<vmem>>, vector<1x1x128xf32>
    %412 = vector.shape_cast %411 : vector<1x1x128xf32> to vector<1x128xf32>
    %413 = vector.broadcast %398 : vector<1x128xf32> to vector<64x128xf32>
    %414 = arith.subf %381, %413 : vector<64x128xf32>
    %415 = vector.broadcast %408 : vector<1x128xf32> to vector<64x128xf32>
    %416 = arith.mulf %414, %415 : vector<64x128xf32>
    %417 = vector.broadcast %410 : vector<1x128xf32> to vector<64x128xf32>
    %418 = arith.mulf %416, %417 : vector<64x128xf32>
    %419 = vector.broadcast %412 : vector<1x128xf32> to vector<64x128xf32>
    %420 = arith.addf %418, %419 : vector<64x128xf32>
    %c2_i32_215 = arith.constant 2 : i32
    %421 = tpu.dynamic_rotate %420 by %c2_i32_215 dim 1 : vector<64x128xf32>, i32 -> vector<64x128xf32>
    %422 = arith.addf %394, %421 : vector<64x128xf32>
    %423 = arith.truncf %422 : vector<64x128xf32> to vector<64x128xbf16>
    %c6_216 = arith.constant 6 : index
    %c0_217 = arith.constant 0 : index
    %c0_218 = arith.constant 0 : index
    %424 = vector.load %arg8[%c6_216, %c0_217, %c0_218] : memref<8x128x128xbf16, #tpu.memory_space<vmem>>, vector<1x128x128xbf16>
    %425 = vector.shape_cast %424 : vector<1x128x128xbf16> to vector<128x128xbf16>
    %cst_219 = arith.constant dense<0.000000e+00> : vector<64x128xf32>
    %426 = tpu.matmul %423, %425, %cst_219 {dimension_numbers = #tpu.dot_dimension_numbers<[1], [0], [0], [1], [0, 0, 1, 1], [], []>} : vector<64x128xbf16>, vector<128x128xbf16>, vector<64x128xf32> -> vector<64x128xf32>
    %c6_220 = arith.constant 6 : index
    %c0_221 = arith.constant 0 : index
    %c0_222 = arith.constant 0 : index
    %427 = vector.load %arg9[%c6_220, %c0_221, %c0_222] : memref<8x1x128xf32, #tpu.memory_space<vmem>>, vector<1x1x128xf32>
    %428 = vector.shape_cast %427 : vector<1x1x128xf32> to vector<1x128xf32>
    %429 = vector.broadcast %428 : vector<1x128xf32> to vector<64x128xf32>
    %430 = arith.addf %426, %429 : vector<64x128xf32>
    %cst_223 = arith.constant 0.000000e+00 : f32
    %431 = vector.broadcast %cst_223 : f32 to vector<64x128xf32>
    %432 = arith.maximumf %430, %431 : vector<64x128xf32>
    %c0_224 = arith.constant 0 : index
    %c0_225 = arith.constant 0 : index
    %433 = vector.load %arg3[%c0_224, %c0_225] : memref<16x64xbf16, #tpu.memory_space<vmem>>, vector<16x64xbf16>
    %434 = arith.truncf %432 : vector<64x128xf32> to vector<64x128xbf16>
    %cst_226 = arith.constant dense<0.000000e+00> : vector<16x128xf32>
    %435 = tpu.matmul %433, %434, %cst_226 {dimension_numbers = #tpu.dot_dimension_numbers<[1], [0], [0], [1], [0, 0, 1, 1], [], []>} : vector<16x64xbf16>, vector<64x128xbf16>, vector<16x128xf32> -> vector<16x128xf32>
    %cst_227 = arith.constant dense<0.000000e+00> : vector<128xf32>
    %436 = vector.multi_reduction <add>, %435, %cst_227 [0] : vector<16x128xf32> to vector<128xf32>
    %437 = vector.shape_cast %436 : vector<128xf32> to vector<1x128xf32>
    %cst_228 = arith.constant 1.600000e+01 : f32
    %438 = vector.broadcast %cst_228 : f32 to vector<1x128xf32>
    %439 = arith.divf %437, %438 : vector<1x128xf32>
    %440 = vector.broadcast %439 : vector<1x128xf32> to vector<16x128xf32>
    %441 = arith.subf %435, %440 : vector<16x128xf32>
    %442 = arith.mulf %441, %441 : vector<16x128xf32>
    %cst_229 = arith.constant dense<0.000000e+00> : vector<128xf32>
    %443 = vector.multi_reduction <add>, %442, %cst_229 [0] : vector<16x128xf32> to vector<128xf32>
    %444 = vector.shape_cast %443 : vector<128xf32> to vector<1x128xf32>
    %cst_230 = arith.constant 1.600000e+01 : f32
    %445 = vector.broadcast %cst_230 : f32 to vector<1x128xf32>
    %446 = arith.divf %444, %445 : vector<1x128xf32>
    %cst_231 = arith.constant 9.99999974E-6 : f32
    %447 = vector.broadcast %cst_231 : f32 to vector<1x128xf32>
    %448 = arith.addf %446, %447 : vector<1x128xf32>
    %449 = math.rsqrt %448 : vector<1x128xf32>
    %c7 = arith.constant 7 : index
    %c0_232 = arith.constant 0 : index
    %c0_233 = arith.constant 0 : index
    %450 = vector.load %arg4[%c7, %c0_232, %c0_233] : memref<8x1x128xf32, #tpu.memory_space<vmem>>, vector<1x1x128xf32>
    %451 = vector.shape_cast %450 : vector<1x1x128xf32> to vector<1x128xf32>
    %c7_234 = arith.constant 7 : index
    %c0_235 = arith.constant 0 : index
    %c0_236 = arith.constant 0 : index
    %452 = vector.load %arg5[%c7_234, %c0_235, %c0_236] : memref<8x1x128xf32, #tpu.memory_space<vmem>>, vector<1x1x128xf32>
    %453 = vector.shape_cast %452 : vector<1x1x128xf32> to vector<1x128xf32>
    %454 = vector.broadcast %439 : vector<1x128xf32> to vector<16x128xf32>
    %455 = arith.subf %435, %454 : vector<16x128xf32>
    %456 = vector.broadcast %449 : vector<1x128xf32> to vector<16x128xf32>
    %457 = arith.mulf %455, %456 : vector<16x128xf32>
    %458 = vector.broadcast %451 : vector<1x128xf32> to vector<16x128xf32>
    %459 = arith.mulf %457, %458 : vector<16x128xf32>
    %460 = vector.broadcast %453 : vector<1x128xf32> to vector<16x128xf32>
    %461 = arith.addf %459, %460 : vector<16x128xf32>
    %cst_237 = arith.constant dense<0.000000e+00> : vector<128xf32>
    %462 = vector.multi_reduction <add>, %378, %cst_237 [0] : vector<16x128xf32> to vector<128xf32>
    %463 = vector.shape_cast %462 : vector<128xf32> to vector<1x128xf32>
    %cst_238 = arith.constant 1.600000e+01 : f32
    %464 = vector.broadcast %cst_238 : f32 to vector<1x128xf32>
    %465 = arith.divf %463, %464 : vector<1x128xf32>
    %466 = vector.broadcast %465 : vector<1x128xf32> to vector<16x128xf32>
    %467 = arith.subf %378, %466 : vector<16x128xf32>
    %468 = arith.mulf %467, %467 : vector<16x128xf32>
    %cst_239 = arith.constant dense<0.000000e+00> : vector<128xf32>
    %469 = vector.multi_reduction <add>, %468, %cst_239 [0] : vector<16x128xf32> to vector<128xf32>
    %470 = vector.shape_cast %469 : vector<128xf32> to vector<1x128xf32>
    %cst_240 = arith.constant 1.600000e+01 : f32
    %471 = vector.broadcast %cst_240 : f32 to vector<1x128xf32>
    %472 = arith.divf %470, %471 : vector<1x128xf32>
    %cst_241 = arith.constant 9.99999974E-6 : f32
    %473 = vector.broadcast %cst_241 : f32 to vector<1x128xf32>
    %474 = arith.addf %472, %473 : vector<1x128xf32>
    %475 = math.rsqrt %474 : vector<1x128xf32>
    %c7_242 = arith.constant 7 : index
    %c0_243 = arith.constant 0 : index
    %c0_244 = arith.constant 0 : index
    %476 = vector.load %arg6[%c7_242, %c0_243, %c0_244] : memref<8x1x128xf32, #tpu.memory_space<vmem>>, vector<1x1x128xf32>
    %477 = vector.shape_cast %476 : vector<1x1x128xf32> to vector<1x128xf32>
    %c7_245 = arith.constant 7 : index
    %c0_246 = arith.constant 0 : index
    %c0_247 = arith.constant 0 : index
    %478 = vector.load %arg7[%c7_245, %c0_246, %c0_247] : memref<8x1x128xf32, #tpu.memory_space<vmem>>, vector<1x1x128xf32>
    %479 = vector.shape_cast %478 : vector<1x1x128xf32> to vector<1x128xf32>
    %480 = vector.broadcast %465 : vector<1x128xf32> to vector<16x128xf32>
    %481 = arith.subf %378, %480 : vector<16x128xf32>
    %482 = vector.broadcast %475 : vector<1x128xf32> to vector<16x128xf32>
    %483 = arith.mulf %481, %482 : vector<16x128xf32>
    %484 = vector.broadcast %477 : vector<1x128xf32> to vector<16x128xf32>
    %485 = arith.mulf %483, %484 : vector<16x128xf32>
    %486 = vector.broadcast %479 : vector<1x128xf32> to vector<16x128xf32>
    %487 = arith.addf %485, %486 : vector<16x128xf32>
    %c10_i32_248 = arith.constant 10 : i32
    %488 = tpu.dynamic_rotate %487 by %c10_i32_248 dim 1 : vector<16x128xf32>, i32 -> vector<16x128xf32>
    %489 = arith.addf %461, %488 : vector<16x128xf32>
    %490 = arith.truncf %489 : vector<16x128xf32> to vector<16x128xbf16>
    %c7_249 = arith.constant 7 : index
    %c0_250 = arith.constant 0 : index
    %c0_251 = arith.constant 0 : index
    %491 = vector.load %arg8[%c7_249, %c0_250, %c0_251] : memref<8x128x128xbf16, #tpu.memory_space<vmem>>, vector<1x128x128xbf16>
    %492 = vector.shape_cast %491 : vector<1x128x128xbf16> to vector<128x128xbf16>
    %cst_252 = arith.constant dense<0.000000e+00> : vector<16x128xf32>
    %493 = tpu.matmul %490, %492, %cst_252 {dimension_numbers = #tpu.dot_dimension_numbers<[1], [0], [0], [1], [0, 0, 1, 1], [], []>} : vector<16x128xbf16>, vector<128x128xbf16>, vector<16x128xf32> -> vector<16x128xf32>
    %c7_253 = arith.constant 7 : index
    %c0_254 = arith.constant 0 : index
    %c0_255 = arith.constant 0 : index
    %494 = vector.load %arg9[%c7_253, %c0_254, %c0_255] : memref<8x1x128xf32, #tpu.memory_space<vmem>>, vector<1x1x128xf32>
    %495 = vector.shape_cast %494 : vector<1x1x128xf32> to vector<1x128xf32>
    %496 = vector.broadcast %495 : vector<1x128xf32> to vector<16x128xf32>
    %497 = arith.addf %493, %496 : vector<16x128xf32>
    %cst_256 = arith.constant 0.000000e+00 : f32
    %498 = vector.broadcast %cst_256 : f32 to vector<16x128xf32>
    %499 = arith.maximumf %497, %498 : vector<16x128xf32>
    %c0_257 = arith.constant 0 : index
    %c0_258 = arith.constant 0 : index
    %500 = vector.load %arg10[%c0_257, %c0_258] : memref<16x128xf32, #tpu.memory_space<vmem>>, vector<16x128xf32>
    tpu.vector_store %arg10[%c0_257, %c0_258], %499 {strides = array<i32>} : memref<16x128xf32, #tpu.memory_space<vmem>>, vector<16x128xf32>,
    return
  }
}

</mosaic_0001>

<llo_original>
// kernel: tpu_custom_call.1
$region0: #{tpu_custom_call.1}
  #allocation0 [shape = 'u32[]', space=smem, size = 0x4, offset = 0x4, fixed_abs, tag = 'smem constant byte address 0x4 - core index']
  #allocation1 [shape = 'u32[144,128]{1,0:T(1,128)}', space=vmem, size = 0x12000, scoped, tag = 'internal scratch']
  %s0 = inlined_call_operand.hbm [shape: f32[64,128], index: 0, kind: input, shape index: {}]
  %s1 = inlined_call_operand.vmem [shape: f32[16,128], index: 1, kind: input, shape index: {}]
  %s2 = inlined_call_operand.vmem [shape: bf16[64,16], index: 2, kind: input, shape index: {}]
  %s3 = inlined_call_operand.vmem [shape: bf16[16,64], index: 3, kind: input, shape index: {}]
  %s4 = inlined_call_operand.vmem [shape: f32[8,1,128], index: 4, kind: input, shape index: {}]
  %s5 = inlined_call_operand.vmem [shape: f32[8,1,128], index: 5, kind: input, shape index: {}]
  %s6 = inlined_call_operand.vmem [shape: f32[8,1,128], index: 6, kind: input, shape index: {}]
  %s7 = inlined_call_operand.hbm [shape: f32[8,1,128], index: 7, kind: input, shape index: {}]
  %s8 = inlined_call_operand.hbm [shape: bf16[8,128,128], index: 8, kind: input, shape index: {}]
  %s9 = inlined_call_operand.vmem [shape: f32[8,1,128], index: 9, kind: input, shape index: {}]
  %s10 = inlined_call_operand.hbm [shape: f32[16,128], index: 10, kind: output, shape index: {}]
  %s11 = sld [smem:[#allocation0]]
  $region62: #{tpu_custom_call.1} parent=0
    _
  %s13 = ssub.s32 1, %s11
  %s14 = scalar_select 0, %s13, %s11
  $region1: #{tpu_custom_call.1} parent=0
    #allocation2 [shape = 'u8[32768]{0}', space=vmem, size = 0x8000, scoped, tag = 'input window, operand 0, single buffered']
    #allocation3 [shape = 's32[1]{0}', space=sflag, size = 0x4, scoped, tag = 'scoped memory for tpu_custom_call.1']
    #allocation4 [shape = 's32[1]{0}', space=sflag, size = 0x4, scoped, tag = 'scoped memory for tpu_custom_call.1']
    #allocation5 [shape = 'u8[4096]{0}', space=vmem, size = 0x1000, scoped, tag = 'input window, operand 7, single buffered']
    #allocation6 [shape = 's32[1]{0}', space=sflag, size = 0x4, scoped, tag = 'scoped memory for tpu_custom_call.1']
    #allocation7 [shape = 'u8[262144]{0}', space=vmem, size = 0x40000, scoped, tag = 'input window, operand 8, single buffered']
    #allocation8 [shape = 'u8[8192]{0}', space=vmem, size = 0x2000, scoped, tag = 'output window, operand 0, single buffered']
    %15 = vsyncpa [#allocation3], 0
    %16 = vsyncpa [#allocation6], 0
    %17 = vsyncpa [#allocation4], 0
    // Predicated region
    $region2: #{tpu_custom_call.1} parent=1 // pred_check
      _
    $region3: #{tpu_custom_call.1} parent=1 // pred_check_branch
      %19 = sbr.rel (0) target = $region5
    $region4: #{tpu_custom_call.1} parent=1 // pred_region
      %s21 = ssub.s32 1024, 1024
      %22 = vsyncadd [#allocation3], %s21
      %s23 = sshll.u32 [#allocation2], 4
      %s24 = int_to_ptr.vmem [resolvable:$true] %s23
      %29 = dma.hbm_to_vmem [thread:$0]  %s0, 1024, %s24, [#allocation3], 128, 128, 8
    $region5: #{tpu_custom_call.1} parent=1 // pred_fallthru
      _
    // Predicated region
    $region6: #{tpu_custom_call.1} parent=1 // pred_check
      _
    $region7: #{tpu_custom_call.1} parent=1 // pred_check_branch
      %31 = sbr.rel (0) target = $region9
    $region8: #{tpu_custom_call.1} parent=1 // pred_region
      _
    $region9: #{tpu_custom_call.1} parent=1 // pred_fallthru
      _
    // Predicated region
    $region10: #{tpu_custom_call.1} parent=1 // pred_check
      _
    $region11: #{tpu_custom_call.1} parent=1 // pred_check_branch
      %33 = sbr.rel (0) target = $region13
    $region12: #{tpu_custom_call.1} parent=1 // pred_region
      _
    $region13: #{tpu_custom_call.1} parent=1 // pred_fallthru
      _
    // Predicated region
    $region14: #{tpu_custom_call.1} parent=1 // pred_check
      _
    $region15: #{tpu_custom_call.1} parent=1 // pred_check_branch
      %35 = sbr.rel (0) target = $region17
    $region16: #{tpu_custom_call.1} parent=1 // pred_region
      _
    $region17: #{tpu_custom_call.1} parent=1 // pred_fallthru
      _
    // Predicated region
    $region18: #{tpu_custom_call.1} parent=1 // pred_check
      _
    $region19: #{tpu_custom_call.1} parent=1 // pred_check_branch
      %37 = sbr.rel (0) target = $region21
    $region20: #{tpu_custom_call.1} parent=1 // pred_region
      _
    $region21: #{tpu_custom_call.1} parent=1 // pred_fallthru
      _
    // Predicated region
    $region22: #{tpu_custom_call.1} parent=1 // pred_check
      _
    $region23: #{tpu_custom_call.1} parent=1 // pred_check_branch
      %39 = sbr.rel (0) target = $region25
    $region24: #{tpu_custom_call.1} parent=1 // pred_region
      _
    $region25: #{tpu_custom_call.1} parent=1 // pred_fallthru
      _
    // Predicated region
    $region26: #{tpu_custom_call.1} parent=1 // pred_check
      _
    $region27: #{tpu_custom_call.1} parent=1 // pred_check_branch
      %41 = sbr.rel (0) target = $region29
    $region28: #{tpu_custom_call.1} parent=1 // pred_region
      _
    $region29: #{tpu_custom_call.1} parent=1 // pred_fallthru
      _
    // Predicated region
    $region30: #{tpu_custom_call.1} parent=1 // pred_check
      _
    $region31: #{tpu_custom_call.1} parent=1 // pred_check_branch
      %43 = sbr.rel (0) target = $region33
    $region32: #{tpu_custom_call.1} parent=1 // pred_region
      %s45 = ssub.s32 128, 128
      %46 = vsyncadd [#allocation6], %s45
      %s47 = sshll.u32 [#allocation5], 4
      %s48 = int_to_ptr.vmem [resolvable:$true] %s47
      %53 = dma.hbm_to_vmem [thread:$0]  %s7, 128, %s48, [#allocation6], 16, 16, 1
    $region33: #{tpu_custom_call.1} parent=1 // pred_fallthru
      _
    // Predicated region
    $region34: #{tpu_custom_call.1} parent=1 // pred_check
      _
    $region35: #{tpu_custom_call.1} parent=1 // pred_check_branch
      %55 = sbr.rel (0) target = $region37
    $region36: #{tpu_custom_call.1} parent=1 // pred_region
      %s57 = ssub.s32 8192, 8192
      %58 = vsyncadd [#allocation6], %s57
      %s59 = sshll.u32 [#allocation7], 4
      %s60 = int_to_ptr.vmem [resolvable:$true] %s59
      %65 = dma.hbm_to_vmem [thread:$0]  %s8, 8192, %s60, [#allocation6], 64, 64, 4
    $region37: #{tpu_custom_call.1} parent=1 // pred_fallthru
      _
    // Predicated region
    $region38: #{tpu_custom_call.1} parent=1 // pred_check
      _
    $region39: #{tpu_custom_call.1} parent=1 // pred_check_branch
      %67 = sbr.rel (0) target = $region41
    $region40: #{tpu_custom_call.1} parent=1 // pred_region
      _
    $region41: #{tpu_custom_call.1} parent=1 // pred_fallthru
      _
    // Predicated region
    $region42: #{tpu_custom_call.1} parent=1 // pred_check
      _
    $region43: #{tpu_custom_call.1} parent=1 // pred_check_branch
      %69 = sbr.rel (0) target = $region45
    $region44: #{tpu_custom_call.1} parent=1 // pred_region
      %70 = dma.done [#allocation3], 1024
    $region45: #{tpu_custom_call.1} parent=1 // pred_fallthru
      _
    // Predicated region
    $region46: #{tpu_custom_call.1} parent=1 // pred_check
      _
    $region47: #{tpu_custom_call.1} parent=1 // pred_check_branch
      %72 = sbr.rel (0) target = $region49
    $region48: #{tpu_custom_call.1} parent=1 // pred_region
      %73 = dma.done [#allocation6], 128
    $region49: #{tpu_custom_call.1} parent=1 // pred_fallthru
      _
    // Predicated region
    $region50: #{tpu_custom_call.1} parent=1 // pred_check
      _
    $region51: #{tpu_custom_call.1} parent=1 // pred_check_branch
      %75 = sbr.rel (0) target = $region53
    $region52: #{tpu_custom_call.1} parent=1 // pred_region
      %76 = dma.done [#allocation6], 8192
    $region53: #{tpu_custom_call.1} parent=1 // pred_fallthru
      _
    %v78 = vld [vmem:[#allocation2] sm:$0xff]
    %v79 = vld [vmem:[#allocation2 + $0x8] sm:$0xff]
    %v80 = vld [vmem:[#allocation2 + $0x10] sm:$0xff]
    %v81 = vld [vmem:[#allocation2 + $0x18] sm:$0xff]
    %v82 = vld [vmem:[#allocation2 + $0x20] sm:$0xff]
    %v83 = vld [vmem:[#allocation2 + $0x28] sm:$0xff]
    %v84 = vld [vmem:[#allocation2 + $0x30] sm:$0xff]
    %v85 = vld [vmem:[#allocation2 + $0x38] sm:$0xff]
    %v86 = vadd.f32 %v78, %v79
    %v87 = vadd.f32 %v86, %v80
    %v88 = vadd.f32 %v87, %v81
    %v89 = vadd.f32 %v88, %v82
    %v90 = vadd.f32 %v89, %v83
    %v91 = vadd.f32 %v90, %v84
    %v92 = vadd.f32 %v91, %v85
    %v93 = vrot.slane %v92, 4
    %v94 = vadd.f32 %v92, %v93
    %v95 = vrot.slane %v94, 2
    %v96 = vadd.f32 %v94, %v95
    %v97 = vrot.slane %v96, 1
    %v98 = vadd.f32 %v96, %v97
    %v99 = vrcp.pop 64.0
    %v100 = vmul.f32 %v98, %v99
    %v101 = vsub.f32 %v78, %v100
    %v102 = vsub.f32 %v79, %v100
    %v103 = vsub.f32 %v80, %v100
    %v104 = vsub.f32 %v81, %v100
    %v105 = vsub.f32 %v82, %v100
    %v106 = vsub.f32 %v83, %v100
    %v107 = vsub.f32 %v84, %v100
    %v108 = vsub.f32 %v85, %v100
    %v109 = vmul.f32 %v101, %v101
    %v110 = vmul.f32 %v102, %v102
    %v111 = vmul.f32 %v103, %v103
    %v112 = vmul.f32 %v104, %v104
    %v113 = vmul.f32 %v105, %v105
    %v114 = vmul.f32 %v106, %v106
    %v115 = vmul.f32 %v107, %v107
    %v116 = vmul.f32 %v108, %v108
    %v117 = vadd.f32 %v109, %v110
    %v118 = vadd.f32 %v117, %v111
    %v119 = vadd.f32 %v118, %v112
    %v120 = vadd.f32 %v119, %v113
    %v121 = vadd.f32 %v120, %v114
    %v122 = vadd.f32 %v121, %v115
    %v123 = vadd.f32 %v122, %v116
    %v124 = vrot.slane %v123, 4
    %v125 = vadd.f32 %v123, %v124
    %v126 = vrot.slane %v125, 2
    %v127 = vadd.f32 %v125, %v126
    %v128 = vrot.slane %v127, 1
    %v129 = vadd.f32 %v127, %v128
    %v130 = vmul.f32 %v129, %v99
    %v131 = vadd.f32 %v130, 1e-05
    %v132 = vrsqrt.pop %v131
    %v133 = vld [vmem:[%s1] sm:$0xff]
    %v134 = vld [vmem:[%s1 + $0x8] sm:$0xff]
    %v135 = vld [vmem:[%s2] sm:$0xf]
    %v136 = vld [vmem:[%s2 + $0x4] sm:$0xf]
    %v137 = vld [vmem:[%s2 + $0x8] sm:$0xf]
    %v138 = vld [vmem:[%s2 + $0xc] sm:$0xf]
    %v139 = vld [vmem:[%s2 + $0x10] sm:$0xf]
    %v140 = vld [vmem:[%s2 + $0x14] sm:$0xf]
    %v141 = vld [vmem:[%s2 + $0x18] sm:$0xf]
    %v142 = vld [vmem:[%s2 + $0x1c] sm:$0xf]
    %v143 = vpack.c.bf16 %v134, %v133
    %v152 = vunpack.c.l.b16 %v135
    %v153 = vunpack.c.l.b16 %v136
    %v154 = vunpack.c.l.b16 %v137
    %v155 = vunpack.c.l.b16 %v138
    %v156 = vunpack.c.l.b16 %v139
    %v157 = vunpack.c.l.b16 %v140
    %v158 = vunpack.c.l.b16 %v141
    %v159 = vunpack.c.l.b16 %v142
    %v160 = vpack.c.b16 %v153, %v152
    %v161 = vpack.c.b16 %v155, %v154
    %v162 = vpack.c.b16 %v157, %v156
    %v163 = vpack.c.b16 %v159, %v158
    %vm164 = vcmask 130048
    %v166 = vsel %vm164, %v160, 0
    %v169 = vsel %vm164, %v161, 0
    %v172 = vsel %vm164, %v162, 0
    %v175 = vsel %vm164, %v163, 0
    %177 = vmatprep.subr.bf16.mxu0 0
    %178 = vmatpush1.bf16.msra.mxu0 0
    %179 = vmatprep.subr.bf16.mxu0 0
    %180 = vmatpush1.bf16.msra.mxu0 0
    %181 = vmatprep.subr.bf16.mxu0 0
    %182 = vmatpush1.bf16.msra.mxu0 0
    %183 = vmatprep.subr.bf16.mxu0 0
    %184 = vmatpush1.bf16.msra.mxu0 0
    %185 = vmatprep.subr.bf16.mxu0 0
    %186 = vmatpush1.bf16.msra.mxu0 0
    %187 = vmatprep.subr.bf16.mxu0 0
    %188 = vmatpush1.bf16.msra.mxu0 0
    %189 = vmatprep.subr.bf16.mxu0 0
    %190 = vmatpush1.bf16.msra.mxu0 0
    %191 = vmatprep.subr.bf16.mxu0 0
    %192 = vmatpush1.bf16.msra.mxu0 %v143
    %193 = vmatprep.subr.bf16.mxu0 0
    %194 = vmatpush2.bf16.msra.mxu0 0
    %195 = vmatprep.subr.bf16.mxu0 0
    %196 = vmatpush2.bf16.msra.mxu0 0
    %197 = vmatprep.subr.bf16.mxu0 0
    %198 = vmatpush2.bf16.msra.mxu0 0
    %199 = vmatprep.subr.bf16.mxu0 0
    %200 = vmatpush2.bf16.msra.mxu0 0
    %201 = vmatprep.subr.bf16.mxu0 0
    %202 = vmatpush2.bf16.msra.mxu0 0
    %203 = vmatprep.subr.bf16.mxu0 0
    %204 = vmatpush2.bf16.msra.mxu0 0
    %205 = vmatprep.subr.bf16.mxu0 0
    %206 = vmatpush2.bf16.msra.mxu0 0
    %207 = vmatprep.subr.bf16.mxu0 0
    %208 = vmatpush2.bf16.msra.mxu0 0
    %209 = vmatprep.mubr.bf16.mxu0 0
    %210 = vmatmul.mubr.bf16.gmra.mxu0 %v166
    %v211 = vpop.f32.mrf.mxu0
    %v212 = vadd.f32 0.0, %v211
    %v213 = vpop.f32.mrf.mxu0
    %v214 = vpop.f32.mrf.mxu0
    %v215 = vadd.f32 0.0, %v214
    %v216 = vpop.f32.mrf.mxu0
    %217 = vmatprep.mubr.bf16.mxu0 0
    %218 = vmatmul.mubr.bf16.gmra.mxu0 %v169
    %v219 = vpop.f32.mrf.mxu0
    %v220 = vadd.f32 0.0, %v219
    %v221 = vpop.f32.mrf.mxu0
    %v222 = vpop.f32.mrf.mxu0
    %v223 = vadd.f32 0.0, %v222
    %v224 = vpop.f32.mrf.mxu0
    %225 = vmatprep.mubr.bf16.mxu0 0
    %226 = vmatmul.mubr.bf16.gmra.mxu0 %v172
    %v227 = vpop.f32.mrf.mxu0
    %v228 = vadd.f32 0.0, %v227
    %v229 = vpop.f32.mrf.mxu0
    %v230 = vpop.f32.mrf.mxu0
    %v231 = vadd.f32 0.0, %v230
    %v232 = vpop.f32.mrf.mxu0
    %233 = vmatprep.mubr.bf16.mxu0 0
    %234 = vmatmul.mubr.bf16.gmra.mxu0 %v175
    %v235 = vpop.f32.mrf.mxu0
    %v236 = vadd.f32 0.0, %v235
    %v237 = vpop.f32.mrf.mxu0
    %v238 = vpop.f32.mrf.mxu0
    %v239 = vadd.f32 0.0, %v238
    %v240 = vpop.f32.mrf.mxu0
    %241 = vdwg.mxu0
    %v242 = vld [vmem:[%s4] sm:$0x1]
    %v243 = vld [vmem:[%s5] sm:$0x1]
    %v244 = vmul.f32 %v101, %v132
    %v245 = vmul.f32 %v102, %v132
    %v246 = vmul.f32 %v103, %v132
    %v247 = vmul.f32 %v104, %v132
    %v248 = vmul.f32 %v105, %v132
    %v249 = vmul.f32 %v106, %v132
    %v250 = vmul.f32 %v107, %v132
    %v251 = vmul.f32 %v108, %v132
    %v253 = vlaneseq
    %v254 = vshrl.u32 %v253, 7
    %v255 = vsub.s32 0, %v254
    %v256 = vrot.slane %v242, %v255
    %v258 = vmul.f32 %v244, %v256
    %v259 = vmul.f32 %v245, %v256
    %v260 = vmul.f32 %v246, %v256
    %v261 = vmul.f32 %v247, %v256
    %v262 = vmul.f32 %v248, %v256
    %v263 = vmul.f32 %v249, %v256
    %v264 = vmul.f32 %v250, %v256
    %v265 = vmul.f32 %v251, %v256
    %v267 = vlaneseq
    %v268 = vshrl.u32 %v267, 7
    %v269 = vsub.s32 0, %v268
    %v270 = vrot.slane %v243, %v269
    %v272 = vadd.f32 %v258, %v270
    %v273 = vadd.f32 %v259, %v270
    %v274 = vadd.f32 %v260, %v270
    %v275 = vadd.f32 %v261, %v270
    %v276 = vadd.f32 %v262, %v270
    %v277 = vadd.f32 %v263, %v270
    %v278 = vadd.f32 %v264, %v270
    %v279 = vadd.f32 %v265, %v270
    %v280 = vadd.f32 %v212, %v215
    %v281 = vadd.f32 %v280, %v220
    %v282 = vadd.f32 %v281, %v223
    %v283 = vadd.f32 %v282, %v228
    %v284 = vadd.f32 %v283, %v231
    %v285 = vadd.f32 %v284, %v236
    %v286 = vadd.f32 %v285, %v239
    %v287 = vrot.slane %v286, 4
    %v288 = vadd.f32 %v286, %v287
    %v289 = vrot.slane %v288, 2
    %v290 = vadd.f32 %v288, %v289
    %v291 = vrot.slane %v290, 1
    %v292 = vadd.f32 %v290, %v291
    %v293 = vmul.f32 %v292, %v99
    %v294 = vsub.f32 %v212, %v293
    %v295 = vsub.f32 %v215, %v293
    %v296 = vsub.f32 %v220, %v293
    %v297 = vsub.f32 %v223, %v293
    %v298 = vsub.f32 %v228, %v293
    %v299 = vsub.f32 %v231, %v293
    %v300 = vsub.f32 %v236, %v293
    %v301 = vsub.f32 %v239, %v293
    %v302 = vmul.f32 %v294, %v294
    %v303 = vmul.f32 %v295, %v295
    %v304 = vmul.f32 %v296, %v296
    %v305 = vmul.f32 %v297, %v297
    %v306 = vmul.f32 %v298, %v298
    %v307 = vmul.f32 %v299, %v299
    %v308 = vmul.f32 %v300, %v300
    %v309 = vmul.f32 %v301, %v301
    %v310 = vadd.f32 %v302, %v303
    %v311 = vadd.f32 %v310, %v304
    %v312 = vadd.f32 %v311, %v305
    %v313 = vadd.f32 %v312, %v306
    %v314 = vadd.f32 %v313, %v307
    %v315 = vadd.f32 %v314, %v308
    %v316 = vadd.f32 %v315, %v309
    %v317 = vrot.slane %v316, 4
    %v318 = vadd.f32 %v316, %v317
    %v319 = vrot.slane %v318, 2
    %v320 = vadd.f32 %v318, %v319
    %v321 = vrot.slane %v320, 1
    %v322 = vadd.f32 %v320, %v321
    %v323 = vmul.f32 %v322, %v99
    %v324 = vadd.f32 %v323, 1e-05
    %v325 = vrsqrt.pop %v324
    %v326 = vld [vmem:[%s6] sm:$0x1]
    %v327 = vld [vmem:[#allocation5] sm:$0x1]
    %v328 = vmul.f32 %v294, %v325
    %v329 = vmul.f32 %v295, %v325
    %v330 = vmul.f32 %v296, %v325
    %v331 = vmul.f32 %v297, %v325
    %v332 = vmul.f32 %v298, %v325
    %v333 = vmul.f32 %v299, %v325
    %v334 = vmul.f32 %v300, %v325
    %v335 = vmul.f32 %v301, %v325
    %v337 = vlaneseq
    %v338 = vshrl.u32 %v337, 7
    %v339 = vsub.s32 0, %v338
    %v340 = vrot.slane %v326, %v339
    %v342 = vmul.f32 %v328, %v340
    %v343 = vmul.f32 %v329, %v340
    %v344 = vmul.f32 %v330, %v340
    %v345 = vmul.f32 %v331, %v340
    %v346 = vmul.f32 %v332, %v340
    %v347 = vmul.f32 %v333, %v340
    %v348 = vmul.f32 %v334, %v340
    %v349 = vmul.f32 %v335, %v340
    %v351 = vlaneseq
    %v352 = vshrl.u32 %v351, 7
    %v353 = vsub.s32 0, %v352
    %v354 = vrot.slane %v327, %v353
    %v356 = vadd.f32 %v342, %v354
    %v357 = vadd.f32 %v343, %v354
    %v358 = vadd.f32 %v344, %v354
    %v359 = vadd.f32 %v345, %v354
    %v360 = vadd.f32 %v346, %v354
    %v361 = vadd.f32 %v347, %v354
    %v362 = vadd.f32 %v348, %v354
    %v363 = vadd.f32 %v349, %v354
    %364 = vrot.lane.b32.xlu0 %v356, 2
    %v365 = vpop.permute.xlu0 %364
    %366 = vrot.lane.b32.xlu0 %v357, 2
    %v367 = vpop.permute.xlu0 %366
    %368 = vrot.lane.b32.xlu0 %v358, 2
    %v369 = vpop.permute.xlu0 %368
    %370 = vrot.lane.b32.xlu0 %v359, 2
    %v371 = vpop.permute.xlu0 %370
    %372 = vrot.lane.b32.xlu0 %v360, 2
    %v373 = vpop.permute.xlu0 %372
    %374 = vrot.lane.b32.xlu0 %v361, 2
    %v375 = vpop.permute.xlu0 %374
    %376 = vrot.lane.b32.xlu0 %v362, 2
    %v377 = vpop.permute.xlu0 %376
    %378 = vrot.lane.b32.xlu0 %v363, 2
    %v379 = vpop.permute.xlu0 %378
    %v380 = vadd.f32 %v272, %v365
    %v381 = vadd.f32 %v273, %v367
    %v382 = vadd.f32 %v274, %v369
    %v383 = vadd.f32 %v275, %v371
    %v384 = vadd.f32 %v276, %v373
    %v385 = vadd.f32 %v277, %v375
    %v386 = vadd.f32 %v278, %v377
    %v387 = vadd.f32 %v279, %v379
    %v388 = vpack.c.bf16 %v381, %v380
    %v389 = vpack.c.bf16 %v383, %v382
    %v390 = vpack.c.bf16 %v385, %v384
    %v391 = vpack.c.bf16 %v387, %v386
    %v392 = vld [vmem:[#allocation7] sm:$0xf]
    %v393 = vld [vmem:[#allocation7 + $0x4] sm:$0xf]
    %v394 = vld [vmem:[#allocation7 + $0x8] sm:$0xf]
    %v395 = vld [vmem:[#allocation7 + $0xc] sm:$0xf]
    %v396 = vld [vmem:[#allocation7 + $0x10] sm:$0xf]
    %v397 = vld [vmem:[#allocation7 + $0x14] sm:$0xf]
    %v398 = vld [vmem:[#allocation7 + $0x18] sm:$0xf]
    %v399 = vld [vmem:[#allocation7 + $0x1c] sm:$0xf]
    %v400 = vld [vmem:[#allocation7 + $0x20] sm:$0xf]
    %v401 = vld [vmem:[#allocation7 + $0x24] sm:$0xf]
    %v402 = vld [vmem:[#allocation7 + $0x28] sm:$0xf]
    %v403 = vld [vmem:[#allocation7 + $0x2c] sm:$0xf]
    %v404 = vld [vmem:[#allocation7 + $0x30] sm:$0xf]
    %v405 = vld [vmem:[#allocation7 + $0x34] sm:$0xf]
    %v406 = vld [vmem:[#allocation7 + $0x38] sm:$0xf]
    %v407 = vld [vmem:[#allocation7 + $0x3c] sm:$0xf]
    %v408 = vld [vmem:[%s9] sm:$0x1]
    %v410 = vlaneseq
    %v411 = vshrl.u32 %v410, 7
    %v412 = vsub.s32 0, %v411
    %v413 = vrot.slane %v408, %v412
    %v431 = vunpack.c.l.b16 %v392
    %v432 = vunpack.c.l.b16 %v393
    %v433 = vunpack.c.l.b16 %v394
    %v434 = vunpack.c.l.b16 %v395
    %v435 = vunpack.c.l.b16 %v396
    %v436 = vunpack.c.l.b16 %v397
    %v437 = vunpack.c.l.b16 %v398
    %v438 = vunpack.c.l.b16 %v399
    %v439 = vunpack.c.l.b16 %v400
    %v440 = vunpack.c.l.b16 %v401
    %v441 = vunpack.c.l.b16 %v402
    %v442 = vunpack.c.l.b16 %v403
    %v443 = vunpack.c.l.b16 %v404
    %v444 = vunpack.c.l.b16 %v405
    %v445 = vunpack.c.l.b16 %v406
    %v446 = vunpack.c.l.b16 %v407
    %v447 = vpack.c.b16 %v432, %v431
    %v448 = vpack.c.b16 %v434, %v433
    %v449 = vpack.c.b16 %v436, %v435
    %v450 = vpack.c.b16 %v438, %v437
    %v451 = vpack.c.b16 %v440, %v439
    %v452 = vpack.c.b16 %v442, %v441
    %v453 = vpack.c.b16 %v444, %v443
    %v454 = vpack.c.b16 %v446, %v445
    %463 = vmatprep.subr.bf16.mxu0 0
    %464 = vmatpush1.bf16.msra.mxu0 %v454
    %465 = vmatprep.subr.bf16.mxu0 0
    %466 = vmatpush1.bf16.msra.mxu0 %v453
    %467 = vmatprep.subr.bf16.mxu0 0
    %468 = vmatpush1.bf16.msra.mxu0 %v452
    %469 = vmatprep.subr.bf16.mxu0 0
    %470 = vmatpush1.bf16.msra.mxu0 %v451
    %471 = vmatprep.subr.bf16.mxu0 0
    %472 = vmatpush1.bf16.msra.mxu0 %v450
    %473 = vmatprep.subr.bf16.mxu0 0
    %474 = vmatpush1.bf16.msra.mxu0 %v449
    %475 = vmatprep.subr.bf16.mxu0 0
    %476 = vmatpush1.bf16.msra.mxu0 %v448
    %477 = vmatprep.subr.bf16.mxu0 0
    %478 = vmatpush1.bf16.msra.mxu0 %v447
    %479 = vmatprep.subr.bf16.mxu0 0
    %480 = vmatpush2.bf16.msra.mxu0 0
    %481 = vmatprep.subr.bf16.mxu0 0
    %482 = vmatpush2.bf16.msra.mxu0 0
    %483 = vmatprep.subr.bf16.mxu0 0
    %484 = vmatpush2.bf16.msra.mxu0 0
    %485 = vmatprep.subr.bf16.mxu0 0
    %486 = vmatpush2.bf16.msra.mxu0 0
    %487 = vmatprep.subr.bf16.mxu0 0
    %488 = vmatpush2.bf16.msra.mxu0 0
    %489 = vmatprep.subr.bf16.mxu0 0
    %490 = vmatpush2.bf16.msra.mxu0 0
    %491 = vmatprep.subr.bf16.mxu0 0
    %492 = vmatpush2.bf16.msra.mxu0 0
    %493 = vmatprep.subr.bf16.mxu0 0
    %494 = vmatpush2.bf16.msra.mxu0 0
    %495 = vmatprep.mubr.bf16.mxu0 0
    %496 = vmatmul.mubr.bf16.gmra.mxu0 %v388
    %v497 = vpop.f32.mrf.mxu0
    %v498 = vadd.f32 %v413, %v497
    %v499 = vpop.f32.mrf.mxu0
    %v500 = vpop.f32.mrf.mxu0
    %v501 = vadd.f32 %v413, %v500
    %v502 = vpop.f32.mrf.mxu0
    %503 = vmatprep.mubr.bf16.mxu0 0
    %504 = vmatmul.mubr.bf16.gmra.mxu0 %v389
    %v505 = vpop.f32.mrf.mxu0
    %v506 = vadd.f32 %v413, %v505
    %v507 = vpop.f32.mrf.mxu0
    %v508 = vpop.f32.mrf.mxu0
    %v509 = vadd.f32 %v413, %v508
    %v510 = vpop.f32.mrf.mxu0
    %511 = vmatprep.mubr.bf16.mxu0 0
    %512 = vmatmul.mubr.bf16.gmra.mxu0 %v390
    %v513 = vpop.f32.mrf.mxu0
    %v514 = vadd.f32 %v413, %v513
    %v515 = vpop.f32.mrf.mxu0
    %v516 = vpop.f32.mrf.mxu0
    %v517 = vadd.f32 %v413, %v516
    %v518 = vpop.f32.mrf.mxu0
    %519 = vmatprep.mubr.bf16.mxu0 0
    %520 = vmatmul.mubr.bf16.gmra.mxu0 %v391
    %v521 = vpop.f32.mrf.mxu0
    %v522 = vadd.f32 %v413, %v521
    %v523 = vpop.f32.mrf.mxu0
    %v524 = vpop.f32.mrf.mxu0
    %v525 = vadd.f32 %v413, %v524
    %v526 = vpop.f32.mrf.mxu0
    %527 = vdwg.mxu0
    %v528 = vmax.f32 %v498, 0.0
    %v529 = vmax.f32 %v501, 0.0
    %v530 = vmax.f32 %v506, 0.0
    %v531 = vmax.f32 %v509, 0.0
    %v532 = vmax.f32 %v514, 0.0
    %v533 = vmax.f32 %v517, 0.0
    %v534 = vmax.f32 %v522, 0.0
    %v535 = vmax.f32 %v525, 0.0
    %v536 = vld [vmem:[%s3] sm:$0xf]
    %v537 = vld [vmem:[%s3 + $0x4] sm:$0xf]
    %v538 = vpack.c.bf16 %v529, %v528
    %v539 = vpack.c.bf16 %v531, %v530
    %v540 = vpack.c.bf16 %v533, %v532
    %v541 = vpack.c.bf16 %v535, %v534
    %v544 = vunpack.c.l.b16 %v536
    %v545 = vunpack.c.l.b16 %v537
    %v546 = vpack.c.b16 %v545, %v544
    %vm547 = vcmask 523264
    %v549 = vsel %vm547, %v546, 0
    %551 = vmatprep.subr.bf16.mxu0 0
    %552 = vmatpush1.bf16.msra.mxu0 0
    %553 = vmatprep.subr.bf16.mxu0 0
    %554 = vmatpush1.bf16.msra.mxu0 0
    %555 = vmatprep.subr.bf16.mxu0 0
    %556 = vmatpush1.bf16.msra.mxu0 0
    %557 = vmatprep.subr.bf16.mxu0 0
    %558 = vmatpush1.bf16.msra.mxu0 0
    %559 = vmatprep.subr.bf16.mxu0 0
    %560 = vmatpush1.bf16.msra.mxu0 %v541
    %561 = vmatprep.subr.bf16.mxu0 0
    %562 = vmatpush1.bf16.msra.mxu0 %v540
    %563 = vmatprep.subr.bf16.mxu0 0
    %564 = vmatpush1.bf16.msra.mxu0 %v539
    %565 = vmatprep.subr.bf16.mxu0 0
    %566 = vmatpush1.bf16.msra.mxu0 %v538
    %567 = vmatprep.subr.bf16.mxu0 0
    %568 = vmatpush2.bf16.msra.mxu0 0
    %569 = vmatprep.subr.bf16.mxu0 0
    %570 = vmatpush2.bf16.msra.mxu0 0
    %571 = vmatprep.subr.bf16.mxu0 0
    %572 = vmatpush2.bf16.msra.mxu0 0
    %573 = vmatprep.subr.bf16.mxu0 0
    %574 = vmatpush2.bf16.msra.mxu0 0
    %575 = vmatprep.subr.bf16.mxu0 0
    %576 = vmatpush2.bf16.msra.mxu0 0
    %577 = vmatprep.subr.bf16.mxu0 0
    %578 = vmatpush2.bf16.msra.mxu0 0
    %579 = vmatprep.subr.bf16.mxu0 0
    %580 = vmatpush2.bf16.msra.mxu0 0
    %581 = vmatprep.subr.bf16.mxu0 0
    %582 = vmatpush2.bf16.msra.mxu0 0
    %583 = vmatprep.mubr.bf16.mxu0 0
    %584 = vmatmul.mubr.bf16.gmra.mxu0 %v549
    %v585 = vpop.f32.mrf.mxu0
    %v586 = vadd.f32 0.0, %v585
    %v587 = vpop.f32.mrf.mxu0
    %v588 = vpop.f32.mrf.mxu0
    %v589 = vadd.f32 0.0, %v588
    %v590 = vpop.f32.mrf.mxu0
    %591 = vdwg.mxu0
    %v592 = vadd.f32 %v586, %v589
    %v593 = vrot.slane %v592, 4
    %v594 = vadd.f32 %v592, %v593
    %v595 = vrot.slane %v594, 2
    %v596 = vadd.f32 %v594, %v595
    %v597 = vrot.slane %v596, 1
    %v598 = vadd.f32 %v596, %v597
    %v599 = vrcp.pop 16.0
    %v600 = vmul.f32 %v598, %v599
    %v601 = vsub.f32 %v586, %v600
    %v602 = vsub.f32 %v589, %v600
    %v603 = vmul.f32 %v601, %v601
    %v604 = vmul.f32 %v602, %v602
    %v605 = vadd.f32 %v603, %v604
    %v606 = vrot.slane %v605, 4
    %v607 = vadd.f32 %v605, %v606
    %v608 = vrot.slane %v607, 2
    %v609 = vadd.f32 %v607, %v608
    %v610 = vrot.slane %v609, 1
    %v611 = vadd.f32 %v609, %v610
    %v612 = vmul.f32 %v611, %v599
    %v613 = vadd.f32 %v612, 1e-05
    %v614 = vrsqrt.pop %v613
    %s615 = scalar_lea.vmem %s4, 1
    %v616 = vld [vmem:[%s615] sm:$0x1]
    %s617 = scalar_lea.vmem %s5, 1
    %v618 = vld [vmem:[%s617] sm:$0x1]
    %v619 = vmul.f32 %v601, %v614
    %v620 = vmul.f32 %v602, %v614
    %v622 = vlaneseq
    %v623 = vshrl.u32 %v622, 7
    %v624 = vsub.s32 0, %v623
    %v625 = vrot.slane %v616, %v624
    %v627 = vmul.f32 %v619, %v625
    %v628 = vmul.f32 %v620, %v625
    %v630 = vlaneseq
    %v631 = vshrl.u32 %v630, 7
    %v632 = vsub.s32 0, %v631
    %v633 = vrot.slane %v618, %v632
    %v635 = vadd.f32 %v627, %v633
    %v636 = vadd.f32 %v628, %v633
    %v637 = vadd.f32 %v133, %v134
    %v638 = vrot.slane %v637, 4
    %v639 = vadd.f32 %v637, %v638
    %v640 = vrot.slane %v639, 2
    %v641 = vadd.f32 %v639, %v640
    %v642 = vrot.slane %v641, 1
    %v643 = vadd.f32 %v641, %v642
    %v644 = vmul.f32 %v643, %v599
    %v645 = vsub.f32 %v133, %v644
    %v646 = vsub.f32 %v134, %v644
    %v647 = vmul.f32 %v645, %v645
    %v648 = vmul.f32 %v646, %v646
    %v649 = vadd.f32 %v647, %v648
    %v650 = vrot.slane %v649, 4
    %v651 = vadd.f32 %v649, %v650
    %v652 = vrot.slane %v651, 2
    %v653 = vadd.f32 %v651, %v652
    %v654 = vrot.slane %v653, 1
    %v655 = vadd.f32 %v653, %v654
    %v656 = vmul.f32 %v655, %v599
    %v657 = vadd.f32 %v656, 1e-05
    %v658 = vrsqrt.pop %v657
    %s659 = scalar_lea.vmem %s6, 1
    %v660 = vld [vmem:[%s659] sm:$0x1]
    %s661 = scalar_lea.vmem [#allocation5], 1
    %v662 = vld [vmem:[%s661] sm:$0x1]
    %v663 = vmul.f32 %v645, %v658
    %v664 = vmul.f32 %v646, %v658
    %v666 = vlaneseq
    %v667 = vshrl.u32 %v666, 7
    %v668 = vsub.s32 0, %v667
    %v669 = vrot.slane %v660, %v668
    %v671 = vmul.f32 %v663, %v669
    %v672 = vmul.f32 %v664, %v669
    %v674 = vlaneseq
    %v675 = vshrl.u32 %v674, 7
    %v676 = vsub.s32 0, %v675
    %v677 = vrot.slane %v662, %v676
    %v679 = vadd.f32 %v671, %v677
    %v680 = vadd.f32 %v672, %v677
    %681 = vrot.lane.b32.xlu0 %v679, 9
    %v682 = vpop.permute.xlu0 %681
    %683 = vrot.lane.b32.xlu0 %v680, 9
    %v684 = vpop.permute.xlu0 %683
    %v685 = vadd.f32 %v635, %v682
    %v686 = vadd.f32 %v636, %v684
    %v687 = vpack.c.bf16 %v686, %v685
    %s688 = scalar_lea.vmem [#allocation7], 64
    %v689 = vld [vmem:[%s688] sm:$0xf]
    %v690 = vld [vmem:[%s688 + $0x4] sm:$0xf]
    %v691 = vld [vmem:[%s688 + $0x8] sm:$0xf]
    %v692 = vld [vmem:[%s688 + $0xc] sm:$0xf]
    %v693 = vld [vmem:[%s688 + $0x10] sm:$0xf]
    %v694 = vld [vmem:[%s688 + $0x14] sm:$0xf]
    %v695 = vld [vmem:[%s688 + $0x18] sm:$0xf]
    %v696 = vld [vmem:[%s688 + $0x1c] sm:$0xf]
    %v697 = vld [vmem:[%s688 + $0x20] sm:$0xf]
    %v698 = vld [vmem:[%s688 + $0x24] sm:$0xf]
    %v699 = vld [vmem:[%s688 + $0x28] sm:$0xf]
    %v700 = vld [vmem:[%s688 + $0x2c] sm:$0xf]
    %v701 = vld [vmem:[%s688 + $0x30] sm:$0xf]
    %v702 = vld [vmem:[%s688 + $0x34] sm:$0xf]
    %v703 = vld [vmem:[%s688 + $0x38] sm:$0xf]
    %v704 = vld [vmem:[%s688 + $0x3c] sm:$0xf]
    %s705 = scalar_lea.vmem %s9, 1
    %v706 = vld [vmem:[%s705] sm:$0x1]
    %v708 = vlaneseq
    %v709 = vshrl.u32 %v708, 7
    %v710 = vsub.s32 0, %v709
    %v711 = vrot.slane %v706, %v710
    %v729 = vunpack.c.l.b16 %v689
    %v730 = vunpack.c.l.b16 %v690
    %v731 = vunpack.c.l.b16 %v691
    %v732 = vunpack.c.l.b16 %v692
    %v733 = vunpack.c.l.b16 %v693
    %v734 = vunpack.c.l.b16 %v694
    %v735 = vunpack.c.l.b16 %v695
    %v736 = vunpack.c.l.b16 %v696
    %v737 = vunpack.c.l.b16 %v697
    %v738 = vunpack.c.l.b16 %v698
    %v739 = vunpack.c.l.b16 %v699
    %v740 = vunpack.c.l.b16 %v700
    %v741 = vunpack.c.l.b16 %v701
    %v742 = vunpack.c.l.b16 %v702
    %v743 = vunpack.c.l.b16 %v703
    %v744 = vunpack.c.l.b16 %v704
    %v745 = vpack.c.b16 %v730, %v729
    %v746 = vpack.c.b16 %v732, %v731
    %v747 = vpack.c.b16 %v734, %v733
    %v748 = vpack.c.b16 %v736, %v735
    %v749 = vpack.c.b16 %v738, %v737
    %v750 = vpack.c.b16 %v740, %v739
    %v751 = vpack.c.b16 %v742, %v741
    %v752 = vpack.c.b16 %v744, %v743
    %761 = vmatprep.subr.bf16.mxu0 0
    %762 = vmatpush1.bf16.msra.mxu0 %v752
    %763 = vmatprep.subr.bf16.mxu0 0
    %764 = vmatpush1.bf16.msra.mxu0 %v751
    %765 = vmatprep.subr.bf16.mxu0 0
    %766 = vmatpush1.bf16.msra.mxu0 %v750
    %767 = vmatprep.subr.bf16.mxu0 0
    %768 = vmatpush1.bf16.msra.mxu0 %v749
    %769 = vmatprep.subr.bf16.mxu0 0
    %770 = vmatpush1.bf16.msra.mxu0 %v748
    %771 = vmatprep.subr.bf16.mxu0 0
    %772 = vmatpush1.bf16.msra.mxu0 %v747
    %773 = vmatprep.subr.bf16.mxu0 0
    %774 = vmatpush1.bf16.msra.mxu0 %v746
    %775 = vmatprep.subr.bf16.mxu0 0
    %776 = vmatpush1.bf16.msra.mxu0 %v745
    %777 = vmatprep.subr.bf16.mxu0 0
    %778 = vmatpush2.bf16.msra.mxu0 0
    %779 = vmatprep.subr.bf16.mxu0 0
    %780 = vmatpush2.bf16.msra.mxu0 0
    %781 = vmatprep.subr.bf16.mxu0 0
    %782 = vmatpush2.bf16.msra.mxu0 0
    %783 = vmatprep.subr.bf16.mxu0 0
    %784 = vmatpush2.bf16.msra.mxu0 0
    %785 = vmatprep.subr.bf16.mxu0 0
    %786 = vmatpush2.bf16.msra.mxu0 0
    %787 = vmatprep.subr.bf16.mxu0 0
    %788 = vmatpush2.bf16.msra.mxu0 0
    %789 = vmatprep.subr.bf16.mxu0 0
    %790 = vmatpush2.bf16.msra.mxu0 0
    %791 = vmatprep.subr.bf16.mxu0 0
    %792 = vmatpush2.bf16.msra.mxu0 0
    %793 = vmatprep.mubr.bf16.mxu0 0
    %794 = vmatmul.mubr.bf16.gmra.mxu0 %v687
    %v795 = vpop.f32.mrf.mxu0
    %v796 = vadd.f32 %v711, %v795
    %v797 = vpop.f32.mrf.mxu0
    %v798 = vpop.f32.mrf.mxu0
    %v799 = vadd.f32 %v711, %v798
    %v800 = vpop.f32.mrf.mxu0
    %801 = vdwg.mxu0
    %v802 = vmax.f32 %v796, 0.0
    %v803 = vmax.f32 %v799, 0.0
    %v804 = vpack.c.bf16 %v803, %v802
    %805 = vmatprep.subr.bf16.mxu0 0
    %806 = vmatpush1.bf16.msra.mxu0 0
    %807 = vmatprep.subr.bf16.mxu0 0
    %808 = vmatpush1.bf16.msra.mxu0 0
    %809 = vmatprep.subr.bf16.mxu0 0
    %810 = vmatpush1.bf16.msra.mxu0 0
    %811 = vmatprep.subr.bf16.mxu0 0
    %812 = vmatpush1.bf16.msra.mxu0 0
    %813 = vmatprep.subr.bf16.mxu0 0
    %814 = vmatpush1.bf16.msra.mxu0 0
    %815 = vmatprep.subr.bf16.mxu0 0
    %816 = vmatpush1.bf16.msra.mxu0 0
    %817 = vmatprep.subr.bf16.mxu0 0
    %818 = vmatpush1.bf16.msra.mxu0 0
    %819 = vmatprep.subr.bf16.mxu0 0
    %820 = vmatpush1.bf16.msra.mxu0 %v804
    %821 = vmatprep.subr.bf16.mxu0 0
    %822 = vmatpush2.bf16.msra.mxu0 0
    %823 = vmatprep.subr.bf16.mxu0 0
    %824 = vmatpush2.bf16.msra.mxu0 0
    %825 = vmatprep.subr.bf16.mxu0 0
    %826 = vmatpush2.bf16.msra.mxu0 0
    %827 = vmatprep.subr.bf16.mxu0 0
    %828 = vmatpush2.bf16.msra.mxu0 0
    %829 = vmatprep.subr.bf16.mxu0 0
    %830 = vmatpush2.bf16.msra.mxu0 0
    %831 = vmatprep.subr.bf16.mxu0 0
    %832 = vmatpush2.bf16.msra.mxu0 0
    %833 = vmatprep.subr.bf16.mxu0 0
    %834 = vmatpush2.bf16.msra.mxu0 0
    %835 = vmatprep.subr.bf16.mxu0 0
    %836 = vmatpush2.bf16.msra.mxu0 0
    %837 = vmatprep.mubr.bf16.mxu0 0
    %838 = vmatmul.mubr.bf16.gmra.mxu0 %v166
    %v839 = vpop.f32.mrf.mxu0
    %v840 = vadd.f32 0.0, %v839
    %v841 = vpop.f32.mrf.mxu0
    %v842 = vpop.f32.mrf.mxu0
    %v843 = vadd.f32 0.0, %v842
    %v844 = vpop.f32.mrf.mxu0
    %845 = vmatprep.mubr.bf16.mxu0 0
    %846 = vmatmul.mubr.bf16.gmra.mxu0 %v169
    %v847 = vpop.f32.mrf.mxu0
    %v848 = vadd.f32 0.0, %v847
    %v849 = vpop.f32.mrf.mxu0
    %v850 = vpop.f32.mrf.mxu0
    %v851 = vadd.f32 0.0, %v850
    %v852 = vpop.f32.mrf.mxu0
    %853 = vmatprep.mubr.bf16.mxu0 0
    %854 = vmatmul.mubr.bf16.gmra.mxu0 %v172
    %v855 = vpop.f32.mrf.mxu0
    %v856 = vadd.f32 0.0, %v855
    %v857 = vpop.f32.mrf.mxu0
    %v858 = vpop.f32.mrf.mxu0
    %v859 = vadd.f32 0.0, %v858
    %v860 = vpop.f32.mrf.mxu0
    %861 = vmatprep.mubr.bf16.mxu0 0
    %862 = vmatmul.mubr.bf16.gmra.mxu0 %v175
    %v863 = vpop.f32.mrf.mxu0
    %v864 = vadd.f32 0.0, %v863
    %v865 = vpop.f32.mrf.mxu0
    %v866 = vpop.f32.mrf.mxu0
    %v867 = vadd.f32 0.0, %v866
    %v868 = vpop.f32.mrf.mxu0
    %869 = vdwg.mxu0
    %s870 = scalar_lea.vmem %s4, 2
    %v871 = vld [vmem:[%s870] sm:$0x1]
    %s872 = scalar_lea.vmem %s5, 2
    %v873 = vld [vmem:[%s872] sm:$0x1]
    %v875 = vlaneseq
    %v876 = vshrl.u32 %v875, 7
    %v877 = vsub.s32 0, %v876
    %v878 = vrot.slane %v871, %v877
    %v880 = vmul.f32 %v244, %v878
    %v881 = vmul.f32 %v245, %v878
    %v882 = vmul.f32 %v246, %v878
    %v883 = vmul.f32 %v247, %v878
    %v884 = vmul.f32 %v248, %v878
    %v885 = vmul.f32 %v249, %v878
    %v886 = vmul.f32 %v250, %v878
    %v887 = vmul.f32 %v251, %v878
    %v889 = vlaneseq
    %v890 = vshrl.u32 %v889, 7
    %v891 = vsub.s32 0, %v890
    %v892 = vrot.slane %v873, %v891
    %v894 = vadd.f32 %v880, %v892
    %v895 = vadd.f32 %v881, %v892
    %v896 = vadd.f32 %v882, %v892
    %v897 = vadd.f32 %v883, %v892
    %v898 = vadd.f32 %v884, %v892
    %v899 = vadd.f32 %v885, %v892
    %v900 = vadd.f32 %v886, %v892
    %v901 = vadd.f32 %v887, %v892
    %v902 = vadd.f32 %v840, %v843
    %v903 = vadd.f32 %v902, %v848
    %v904 = vadd.f32 %v903, %v851
    %v905 = vadd.f32 %v904, %v856
    %v906 = vadd.f32 %v905, %v859
    %v907 = vadd.f32 %v906, %v864
    %v908 = vadd.f32 %v907, %v867
    %v909 = vrot.slane %v908, 4
    %v910 = vadd.f32 %v908, %v909
    %v911 = vrot.slane %v910, 2
    %v912 = vadd.f32 %v910, %v911
    %v913 = vrot.slane %v912, 1
    %v914 = vadd.f32 %v912, %v913
    %v915 = vmul.f32 %v914, %v99
    %v916 = vsub.f32 %v840, %v915
    %v917 = vsub.f32 %v843, %v915
    %v918 = vsub.f32 %v848, %v915
    %v919 = vsub.f32 %v851, %v915
    %v920 = vsub.f32 %v856, %v915
    %v921 = vsub.f32 %v859, %v915
    %v922 = vsub.f32 %v864, %v915
    %v923 = vsub.f32 %v867, %v915
    %v924 = vmul.f32 %v916, %v916
    %v925 = vmul.f32 %v917, %v917
    %v926 = vmul.f32 %v918, %v918
    %v927 = vmul.f32 %v919, %v919
    %v928 = vmul.f32 %v920, %v920
    %v929 = vmul.f32 %v921, %v921
    %v930 = vmul.f32 %v922, %v922
    %v931 = vmul.f32 %v923, %v923
    %v932 = vadd.f32 %v924, %v925
    %v933 = vadd.f32 %v932, %v926
    %v934 = vadd.f32 %v933, %v927
    %v935 = vadd.f32 %v934, %v928
    %v936 = vadd.f32 %v935, %v929
    %v937 = vadd.f32 %v936, %v930
    %v938 = vadd.f32 %v937, %v931
    %v939 = vrot.slane %v938, 4
    %v940 = vadd.f32 %v938, %v939
    %v941 = vrot.slane %v940, 2
    %v942 = vadd.f32 %v940, %v941
    %v943 = vrot.slane %v942, 1
    %v944 = vadd.f32 %v942, %v943
    %v945 = vmul.f32 %v944, %v99
    %v946 = vadd.f32 %v945, 1e-05
    %v947 = vrsqrt.pop %v946
    %s948 = scalar_lea.vmem %s6, 2
    %v949 = vld [vmem:[%s948] sm:$0x1]
    %s950 = scalar_lea.vmem [#allocation5], 2
    %v951 = vld [vmem:[%s950] sm:$0x1]
    %v952 = vmul.f32 %v916, %v947
    %v953 = vmul.f32 %v917, %v947
    %v954 = vmul.f32 %v918, %v947
    %v955 = vmul.f32 %v919, %v947
    %v956 = vmul.f32 %v920, %v947
    %v957 = vmul.f32 %v921, %v947
    %v958 = vmul.f32 %v922, %v947
    %v959 = vmul.f32 %v923, %v947
    %v961 = vlaneseq
    %v962 = vshrl.u32 %v961, 7
    %v963 = vsub.s32 0, %v962
    %v964 = vrot.slane %v949, %v963
    %v966 = vmul.f32 %v952, %v964
    %v967 = vmul.f32 %v953, %v964
    %v968 = vmul.f32 %v954, %v964
    %v969 = vmul.f32 %v955, %v964
    %v970 = vmul.f32 %v956, %v964
    %v971 = vmul.f32 %v957, %v964
    %v972 = vmul.f32 %v958, %v964
    %v973 = vmul.f32 %v959, %v964
    %v975 = vlaneseq
    %v976 = vshrl.u32 %v975, 7
    %v977 = vsub.s32 0, %v976
    %v978 = vrot.slane %v951, %v977
    %v980 = vadd.f32 %v966, %v978
    %v981 = vadd.f32 %v967, %v978
    %v982 = vadd.f32 %v968, %v978
    %v983 = vadd.f32 %v969, %v978
    %v984 = vadd.f32 %v970, %v978
    %v985 = vadd.f32 %v971, %v978
    %v986 = vadd.f32 %v972, %v978
    %v987 = vadd.f32 %v973, %v978
    %988 = vrot.lane.b32.xlu0 %v980, 2
    %v989 = vpop.permute.xlu0 %988
    %990 = vrot.lane.b32.xlu0 %v981, 2
    %v991 = vpop.permute.xlu0 %990
    %992 = vrot.lane.b32.xlu0 %v982, 2
    %v993 = vpop.permute.xlu0 %992
    %994 = vrot.lane.b32.xlu0 %v983, 2
    %v995 = vpop.permute.xlu0 %994
    %996 = vrot.lane.b32.xlu0 %v984, 2
    %v997 = vpop.permute.xlu0 %996
    %998 = vrot.lane.b32.xlu0 %v985, 2
    %v999 = vpop.permute.xlu0 %998
    %1000 = vrot.lane.b32.xlu0 %v986, 2
    %v1001 = vpop.permute.xlu0 %1000
    %1002 = vrot.lane.b32.xlu0 %v987, 2
    %v1003 = vpop.permute.xlu0 %1002
    %v1004 = vadd.f32 %v894, %v989
    %v1005 = vadd.f32 %v895, %v991
    %v1006 = vadd.f32 %v896, %v993
    %v1007 = vadd.f32 %v897, %v995
    %v1008 = vadd.f32 %v898, %v997
    %v1009 = vadd.f32 %v899, %v999
    %v1010 = vadd.f32 %v900, %v1001
    %v1011 = vadd.f32 %v901, %v1003
    %v1012 = vpack.c.bf16 %v1005, %v1004
    %v1013 = vpack.c.bf16 %v1007, %v1006
    %v1014 = vpack.c.bf16 %v1009, %v1008
    %v1015 = vpack.c.bf16 %v1011, %v1010
    %s1016 = scalar_lea.vmem [#allocation7], 128
    %v1017 = vld [vmem:[%s1016] sm:$0xf]
    %v1018 = vld [vmem:[%s1016 + $0x4] sm:$0xf]
    %v1019 = vld [vmem:[%s1016 + $0x8] sm:$0xf]
    %v1020 = vld [vmem:[%s1016 + $0xc] sm:$0xf]
    %v1021 = vld [vmem:[%s1016 + $0x10] sm:$0xf]
    %v1022 = vld [vmem:[%s1016 + $0x14] sm:$0xf]
    %v1023 = vld [vmem:[%s1016 + $0x18] sm:$0xf]
    %v1024 = vld [vmem:[%s1016 + $0x1c] sm:$0xf]
    %v1025 = vld [vmem:[%s1016 + $0x20] sm:$0xf]
    %v1026 = vld [vmem:[%s1016 + $0x24] sm:$0xf]
    %v1027 = vld [vmem:[%s1016 + $0x28] sm:$0xf]
    %v1028 = vld [vmem:[%s1016 + $0x2c] sm:$0xf]
    %v1029 = vld [vmem:[%s1016 + $0x30] sm:$0xf]
    %v1030 = vld [vmem:[%s1016 + $0x34] sm:$0xf]
    %v1031 = vld [vmem:[%s1016 + $0x38] sm:$0xf]
    %v1032 = vld [vmem:[%s1016 + $0x3c] sm:$0xf]
    %s1033 = scalar_lea.vmem %s9, 2
    %v1034 = vld [vmem:[%s1033] sm:$0x1]
    %v1036 = vlaneseq
    %v1037 = vshrl.u32 %v1036, 7
    %v1038 = vsub.s32 0, %v1037
    %v1039 = vrot.slane %v1034, %v1038
    %v1057 = vunpack.c.l.b16 %v1017
    %v1058 = vunpack.c.l.b16 %v1018
    %v1059 = vunpack.c.l.b16 %v1019
    %v1060 = vunpack.c.l.b16 %v1020
    %v1061 = vunpack.c.l.b16 %v1021
    %v1062 = vunpack.c.l.b16 %v1022
    %v1063 = vunpack.c.l.b16 %v1023
    %v1064 = vunpack.c.l.b16 %v1024
    %v1065 = vunpack.c.l.b16 %v1025
    %v1066 = vunpack.c.l.b16 %v1026
    %v1067 = vunpack.c.l.b16 %v1027
    %v1068 = vunpack.c.l.b16 %v1028
    %v1069 = vunpack.c.l.b16 %v1029
    %v1070 = vunpack.c.l.b16 %v1030
    %v1071 = vunpack.c.l.b16 %v1031
    %v1072 = vunpack.c.l.b16 %v1032
    %v1073 = vpack.c.b16 %v1058, %v1057
    %v1074 = vpack.c.b16 %v1060, %v1059
    %v1075 = vpack.c.b16 %v1062, %v1061
    %v1076 = vpack.c.b16 %v1064, %v1063
    %v1077 = vpack.c.b16 %v1066, %v1065
    %v1078 = vpack.c.b16 %v1068, %v1067
    %v1079 = vpack.c.b16 %v1070, %v1069
    %v1080 = vpack.c.b16 %v1072, %v1071
    %1089 = vmatprep.subr.bf16.mxu0 0
    %1090 = vmatpush1.bf16.msra.mxu0 %v1080
    %1091 = vmatprep.subr.bf16.mxu0 0
    %1092 = vmatpush1.bf16.msra.mxu0 %v1079
    %1093 = vmatprep.subr.bf16.mxu0 0
    %1094 = vmatpush1.bf16.msra.mxu0 %v1078
    %1095 = vmatprep.subr.bf16.mxu0 0
    %1096 = vmatpush1.bf16.msra.mxu0 %v1077
    %1097 = vmatprep.subr.bf16.mxu0 0
    %1098 = vmatpush1.bf16.msra.mxu0 %v1076
    %1099 = vmatprep.subr.bf16.mxu0 0
    %1100 = vmatpush1.bf16.msra.mxu0 %v1075
    %1101 = vmatprep.subr.bf16.mxu0 0
    %1102 = vmatpush1.bf16.msra.mxu0 %v1074
    %1103 = vmatprep.subr.bf16.mxu0 0
    %1104 = vmatpush1.bf16.msra.mxu0 %v1073
    %1105 = vmatprep.subr.bf16.mxu0 0
    %1106 = vmatpush2.bf16.msra.mxu0 0
    %1107 = vmatprep.subr.bf16.mxu0 0
    %1108 = vmatpush2.bf16.msra.mxu0 0
    %1109 = vmatprep.subr.bf16.mxu0 0
    %1110 = vmatpush2.bf16.msra.mxu0 0
    %1111 = vmatprep.subr.bf16.mxu0 0
    %1112 = vmatpush2.bf16.msra.mxu0 0
    %1113 = vmatprep.subr.bf16.mxu0 0
    %1114 = vmatpush2.bf16.msra.mxu0 0
    %1115 = vmatprep.subr.bf16.mxu0 0
    %1116 = vmatpush2.bf16.msra.mxu0 0
    %1117 = vmatprep.subr.bf16.mxu0 0
    %1118 = vmatpush2.bf16.msra.mxu0 0
    %1119 = vmatprep.subr.bf16.mxu0 0
    %1120 = vmatpush2.bf16.msra.mxu0 0
    %1121 = vmatprep.mubr.bf16.mxu0 0
    %1122 = vmatmul.mubr.bf16.gmra.mxu0 %v1012
    %v1123 = vpop.f32.mrf.mxu0
    %v1124 = vadd.f32 %v1039, %v1123
    %v1125 = vpop.f32.mrf.mxu0
    %v1126 = vpop.f32.mrf.mxu0
    %v1127 = vadd.f32 %v1039, %v1126
    %v1128 = vpop.f32.mrf.mxu0
    %1129 = vmatprep.mubr.bf16.mxu0 0
    %1130 = vmatmul.mubr.bf16.gmra.mxu0 %v1013
    %v1131 = vpop.f32.mrf.mxu0
    %v1132 = vadd.f32 %v1039, %v1131
    %v1133 = vpop.f32.mrf.mxu0
    %v1134 = vpop.f32.mrf.mxu0
    %v1135 = vadd.f32 %v1039, %v1134
    %v1136 = vpop.f32.mrf.mxu0
    %1137 = vmatprep.mubr.bf16.mxu0 0
    %1138 = vmatmul.mubr.bf16.gmra.mxu0 %v1014
    %v1139 = vpop.f32.mrf.mxu0
    %v1140 = vadd.f32 %v1039, %v1139
    %v1141 = vpop.f32.mrf.mxu0
    %v1142 = vpop.f32.mrf.mxu0
    %v1143 = vadd.f32 %v1039, %v1142
    %v1144 = vpop.f32.mrf.mxu0
    %1145 = vmatprep.mubr.bf16.mxu0 0
    %1146 = vmatmul.mubr.bf16.gmra.mxu0 %v1015
    %v1147 = vpop.f32.mrf.mxu0
    %v1148 = vadd.f32 %v1039, %v1147
    %v1149 = vpop.f32.mrf.mxu0
    %v1150 = vpop.f32.mrf.mxu0
    %v1151 = vadd.f32 %v1039, %v1150
    %v1152 = vpop.f32.mrf.mxu0
    %1153 = vdwg.mxu0
    %v1154 = vmax.f32 %v1124, 0.0
    %v1155 = vmax.f32 %v1127, 0.0
    %v1156 = vmax.f32 %v1132, 0.0
    %v1157 = vmax.f32 %v1135, 0.0
    %v1158 = vmax.f32 %v1140, 0.0
    %v1159 = vmax.f32 %v1143, 0.0
    %v1160 = vmax.f32 %v1148, 0.0
    %v1161 = vmax.f32 %v1151, 0.0
    %v1162 = vpack.c.bf16 %v1155, %v1154
    %v1163 = vpack.c.bf16 %v1157, %v1156
    %v1164 = vpack.c.bf16 %v1159, %v1158
    %v1165 = vpack.c.bf16 %v1161, %v1160
    %1166 = vmatprep.subr.bf16.mxu0 0
    %1167 = vmatpush1.bf16.msra.mxu0 0
    %1168 = vmatprep.subr.bf16.mxu0 0
    %1169 = vmatpush1.bf16.msra.mxu0 0
    %1170 = vmatprep.subr.bf16.mxu0 0
    %1171 = vmatpush1.bf16.msra.mxu0 0
    %1172 = vmatprep.subr.bf16.mxu0 0
    %1173 = vmatpush1.bf16.msra.mxu0 0
    %1174 = vmatprep.subr.bf16.mxu0 0
    %1175 = vmatpush1.bf16.msra.mxu0 %v1165
    %1176 = vmatprep.subr.bf16.mxu0 0
    %1177 = vmatpush1.bf16.msra.mxu0 %v1164
    %1178 = vmatprep.subr.bf16.mxu0 0
    %1179 = vmatpush1.bf16.msra.mxu0 %v1163
    %1180 = vmatprep.subr.bf16.mxu0 0
    %1181 = vmatpush1.bf16.msra.mxu0 %v1162
    %1182 = vmatprep.subr.bf16.mxu0 0
    %1183 = vmatpush2.bf16.msra.mxu0 0
    %1184 = vmatprep.subr.bf16.mxu0 0
    %1185 = vmatpush2.bf16.msra.mxu0 0
    %1186 = vmatprep.subr.bf16.mxu0 0
    %1187 = vmatpush2.bf16.msra.mxu0 0
    %1188 = vmatprep.subr.bf16.mxu0 0
    %1189 = vmatpush2.bf16.msra.mxu0 0
    %1190 = vmatprep.subr.bf16.mxu0 0
    %1191 = vmatpush2.bf16.msra.mxu0 0
    %1192 = vmatprep.subr.bf16.mxu0 0
    %1193 = vmatpush2.bf16.msra.mxu0 0
    %1194 = vmatprep.subr.bf16.mxu0 0
    %1195 = vmatpush2.bf16.msra.mxu0 0
    %1196 = vmatprep.subr.bf16.mxu0 0
    %1197 = vmatpush2.bf16.msra.mxu0 0
    %1198 = vmatprep.mubr.bf16.mxu0 0
    %1199 = vmatmul.mubr.bf16.gmra.mxu0 %v549
    %v1200 = vpop.f32.mrf.mxu0
    %v1201 = vadd.f32 0.0, %v1200
    %v1202 = vpop.f32.mrf.mxu0
    %v1203 = vpop.f32.mrf.mxu0
    %v1204 = vadd.f32 0.0, %v1203
    %v1205 = vpop.f32.mrf.mxu0
    %1206 = vdwg.mxu0
    %v1207 = vadd.f32 %v1201, %v1204
    %v1208 = vrot.slane %v1207, 4
    %v1209 = vadd.f32 %v1207, %v1208
    %v1210 = vrot.slane %v1209, 2
    %v1211 = vadd.f32 %v1209, %v1210
    %v1212 = vrot.slane %v1211, 1
    %v1213 = vadd.f32 %v1211, %v1212
    %v1214 = vmul.f32 %v1213, %v599
    %v1215 = vsub.f32 %v1201, %v1214
    %v1216 = vsub.f32 %v1204, %v1214
    %v1217 = vmul.f32 %v1215, %v1215
    %v1218 = vmul.f32 %v1216, %v1216
    %v1219 = vadd.f32 %v1217, %v1218
    %v1220 = vrot.slane %v1219, 4
    %v1221 = vadd.f32 %v1219, %v1220
    %v1222 = vrot.slane %v1221, 2
    %v1223 = vadd.f32 %v1221, %v1222
    %v1224 = vrot.slane %v1223, 1
    %v1225 = vadd.f32 %v1223, %v1224
    %v1226 = vmul.f32 %v1225, %v599
    %v1227 = vadd.f32 %v1226, 1e-05
    %v1228 = vrsqrt.pop %v1227
    %s1229 = scalar_lea.vmem %s4, 3
    %v1230 = vld [vmem:[%s1229] sm:$0x1]
    %s1231 = scalar_lea.vmem %s5, 3
    %v1232 = vld [vmem:[%s1231] sm:$0x1]
    %v1233 = vmul.f32 %v1215, %v1228
    %v1234 = vmul.f32 %v1216, %v1228
    %v1236 = vlaneseq
    %v1237 = vshrl.u32 %v1236, 7
    %v1238 = vsub.s32 0, %v1237
    %v1239 = vrot.slane %v1230, %v1238
    %v1241 = vmul.f32 %v1233, %v1239
    %v1242 = vmul.f32 %v1234, %v1239
    %v1244 = vlaneseq
    %v1245 = vshrl.u32 %v1244, 7
    %v1246 = vsub.s32 0, %v1245
    %v1247 = vrot.slane %v1232, %v1246
    %v1249 = vadd.f32 %v1241, %v1247
    %v1250 = vadd.f32 %v1242, %v1247
    %v1251 = vadd.f32 %v802, %v803
    %v1252 = vrot.slane %v1251, 4
    %v1253 = vadd.f32 %v1251, %v1252
    %v1254 = vrot.slane %v1253, 2
    %v1255 = vadd.f32 %v1253, %v1254
    %v1256 = vrot.slane %v1255, 1
    %v1257 = vadd.f32 %v1255, %v1256
    %v1258 = vmul.f32 %v1257, %v599
    %v1259 = vsub.f32 %v802, %v1258
    %v1260 = vsub.f32 %v803, %v1258
    %v1261 = vmul.f32 %v1259, %v1259
    %v1262 = vmul.f32 %v1260, %v1260
    %v1263 = vadd.f32 %v1261, %v1262
    %v1264 = vrot.slane %v1263, 4
    %v1265 = vadd.f32 %v1263, %v1264
    %v1266 = vrot.slane %v1265, 2
    %v1267 = vadd.f32 %v1265, %v1266
    %v1268 = vrot.slane %v1267, 1
    %v1269 = vadd.f32 %v1267, %v1268
    %v1270 = vmul.f32 %v1269, %v599
    %v1271 = vadd.f32 %v1270, 1e-05
    %v1272 = vrsqrt.pop %v1271
    %s1273 = scalar_lea.vmem %s6, 3
    %v1274 = vld [vmem:[%s1273] sm:$0x1]
    %s1275 = scalar_lea.vmem [#allocation5], 3
    %v1276 = vld [vmem:[%s1275] sm:$0x1]
    %v1277 = vmul.f32 %v1259, %v1272
    %v1278 = vmul.f32 %v1260, %v1272
    %v1280 = vlaneseq
    %v1281 = vshrl.u32 %v1280, 7
    %v1282 = vsub.s32 0, %v1281
    %v1283 = vrot.slane %v1274, %v1282
    %v1285 = vmul.f32 %v1277, %v1283
    %v1286 = vmul.f32 %v1278, %v1283
    %v1288 = vlaneseq
    %v1289 = vshrl.u32 %v1288, 7
    %v1290 = vsub.s32 0, %v1289
    %v1291 = vrot.slane %v1276, %v1290
    %v1293 = vadd.f32 %v1285, %v1291
    %v1294 = vadd.f32 %v1286, %v1291
    %1295 = vrot.lane.b32.xlu0 %v1293, 10
    %v1296 = vpop.permute.xlu0 %1295
    %1297 = vrot.lane.b32.xlu0 %v1294, 10
    %v1298 = vpop.permute.xlu0 %1297
    %v1299 = vadd.f32 %v1249, %v1296
    %v1300 = vadd.f32 %v1250, %v1298
    %v1301 = vpack.c.bf16 %v1300, %v1299
    %s1302 = scalar_lea.vmem [#allocation7], 192
    %v1303 = vld [vmem:[%s1302] sm:$0xf]
    %v1304 = vld [vmem:[%s1302 + $0x4] sm:$0xf]
    %v1305 = vld [vmem:[%s1302 + $0x8] sm:$0xf]
    %v1306 = vld [vmem:[%s1302 + $0xc] sm:$0xf]
    %v1307 = vld [vmem:[%s1302 + $0x10] sm:$0xf]
    %v1308 = vld [vmem:[%s1302 + $0x14] sm:$0xf]
    %v1309 = vld [vmem:[%s1302 + $0x18] sm:$0xf]
    %v1310 = vld [vmem:[%s1302 + $0x1c] sm:$0xf]
    %v1311 = vld [vmem:[%s1302 + $0x20] sm:$0xf]
    %v1312 = vld [vmem:[%s1302 + $0x24] sm:$0xf]
    %v1313 = vld [vmem:[%s1302 + $0x28] sm:$0xf]
    %v1314 = vld [vmem:[%s1302 + $0x2c] sm:$0xf]
    %v1315 = vld [vmem:[%s1302 + $0x30] sm:$0xf]
    %v1316 = vld [vmem:[%s1302 + $0x34] sm:$0xf]
    %v1317 = vld [vmem:[%s1302 + $0x38] sm:$0xf]
    %v1318 = vld [vmem:[%s1302 + $0x3c] sm:$0xf]
    %s1319 = scalar_lea.vmem %s9, 3
    %v1320 = vld [vmem:[%s1319] sm:$0x1]
    %v1322 = vlaneseq
    %v1323 = vshrl.u32 %v1322, 7
    %v1324 = vsub.s32 0, %v1323
    %v1325 = vrot.slane %v1320, %v1324
    %v1343 = vunpack.c.l.b16 %v1303
    %v1344 = vunpack.c.l.b16 %v1304
    %v1345 = vunpack.c.l.b16 %v1305
    %v1346 = vunpack.c.l.b16 %v1306
    %v1347 = vunpack.c.l.b16 %v1307
    %v1348 = vunpack.c.l.b16 %v1308
    %v1349 = vunpack.c.l.b16 %v1309
    %v1350 = vunpack.c.l.b16 %v1310
    %v1351 = vunpack.c.l.b16 %v1311
    %v1352 = vunpack.c.l.b16 %v1312
    %v1353 = vunpack.c.l.b16 %v1313
    %v1354 = vunpack.c.l.b16 %v1314
    %v1355 = vunpack.c.l.b16 %v1315
    %v1356 = vunpack.c.l.b16 %v1316
    %v1357 = vunpack.c.l.b16 %v1317
    %v1358 = vunpack.c.l.b16 %v1318
    %v1359 = vpack.c.b16 %v1344, %v1343
    %v1360 = vpack.c.b16 %v1346, %v1345
    %v1361 = vpack.c.b16 %v1348, %v1347
    %v1362 = vpack.c.b16 %v1350, %v1349
    %v1363 = vpack.c.b16 %v1352, %v1351
    %v1364 = vpack.c.b16 %v1354, %v1353
    %v1365 = vpack.c.b16 %v1356, %v1355
    %v1366 = vpack.c.b16 %v1358, %v1357
    %1375 = vmatprep.subr.bf16.mxu0 0
    %1376 = vmatpush1.bf16.msra.mxu0 %v1366
    %1377 = vmatprep.subr.bf16.mxu0 0
    %1378 = vmatpush1.bf16.msra.mxu0 %v1365
    %1379 = vmatprep.subr.bf16.mxu0 0
    %1380 = vmatpush1.bf16.msra.mxu0 %v1364
    %1381 = vmatprep.subr.bf16.mxu0 0
    %1382 = vmatpush1.bf16.msra.mxu0 %v1363
    %1383 = vmatprep.subr.bf16.mxu0 0
    %1384 = vmatpush1.bf16.msra.mxu0 %v1362
    %1385 = vmatprep.subr.bf16.mxu0 0
    %1386 = vmatpush1.bf16.msra.mxu0 %v1361
    %1387 = vmatprep.subr.bf16.mxu0 0
    %1388 = vmatpush1.bf16.msra.mxu0 %v1360
    %1389 = vmatprep.subr.bf16.mxu0 0
    %1390 = vmatpush1.bf16.msra.mxu0 %v1359
    %1391 = vmatprep.subr.bf16.mxu0 0
    %1392 = vmatpush2.bf16.msra.mxu0 0
    %1393 = vmatprep.subr.bf16.mxu0 0
    %1394 = vmatpush2.bf16.msra.mxu0 0
    %1395 = vmatprep.subr.bf16.mxu0 0
    %1396 = vmatpush2.bf16.msra.mxu0 0
    %1397 = vmatprep.subr.bf16.mxu0 0
    %1398 = vmatpush2.bf16.msra.mxu0 0
    %1399 = vmatprep.subr.bf16.mxu0 0
    %1400 = vmatpush2.bf16.msra.mxu0 0
    %1401 = vmatprep.subr.bf16.mxu0 0
    %1402 = vmatpush2.bf16.msra.mxu0 0
    %1403 = vmatprep.subr.bf16.mxu0 0
    %1404 = vmatpush2.bf16.msra.mxu0 0
    %1405 = vmatprep.subr.bf16.mxu0 0
    %1406 = vmatpush2.bf16.msra.mxu0 0
    %1407 = vmatprep.mubr.bf16.mxu0 0
    %1408 = vmatmul.mubr.bf16.gmra.mxu0 %v1301
    %v1409 = vpop.f32.mrf.mxu0
    %v1410 = vadd.f32 %v1325, %v1409
    %v1411 = vpop.f32.mrf.mxu0
    %v1412 = vpop.f32.mrf.mxu0
    %v1413 = vadd.f32 %v1325, %v1412
    %v1414 = vpop.f32.mrf.mxu0
    %1415 = vdwg.mxu0
    %v1416 = vmax.f32 %v1410, 0.0
    %v1417 = vmax.f32 %v1413, 0.0
    %v1418 = vpack.c.bf16 %v1417, %v1416
    %1419 = vmatprep.subr.bf16.mxu0 0
    %1420 = vmatpush1.bf16.msra.mxu0 0
    %1421 = vmatprep.subr.bf16.mxu0 0
    %1422 = vmatpush1.bf16.msra.mxu0 0
    %1423 = vmatprep.subr.bf16.mxu0 0
    %1424 = vmatpush1.bf16.msra.mxu0 0
    %1425 = vmatprep.subr.bf16.mxu0 0
    %1426 = vmatpush1.bf16.msra.mxu0 0
    %1427 = vmatprep.subr.bf16.mxu0 0
    %1428 = vmatpush1.bf16.msra.mxu0 0
    %1429 = vmatprep.subr.bf16.mxu0 0
    %1430 = vmatpush1.bf16.msra.mxu0 0
    %1431 = vmatprep.subr.bf16.mxu0 0
    %1432 = vmatpush1.bf16.msra.mxu0 0
    %1433 = vmatprep.subr.bf16.mxu0 0
    %1434 = vmatpush1.bf16.msra.mxu0 %v1418
    %1435 = vmatprep.subr.bf16.mxu0 0
    %1436 = vmatpush2.bf16.msra.mxu0 0
    %1437 = vmatprep.subr.bf16.mxu0 0
    %1438 = vmatpush2.bf16.msra.mxu0 0
    %1439 = vmatprep.subr.bf16.mxu0 0
    %1440 = vmatpush2.bf16.msra.mxu0 0
    %1441 = vmatprep.subr.bf16.mxu0 0
    %1442 = vmatpush2.bf16.msra.mxu0 0
    %1443 = vmatprep.subr.bf16.mxu0 0
    %1444 = vmatpush2.bf16.msra.mxu0 0
    %1445 = vmatprep.subr.bf16.mxu0 0
    %1446 = vmatpush2.bf16.msra.mxu0 0
    %1447 = vmatprep.subr.bf16.mxu0 0
    %1448 = vmatpush2.bf16.msra.mxu0 0
    %1449 = vmatprep.subr.bf16.mxu0 0
    %1450 = vmatpush2.bf16.msra.mxu0 0
    %1451 = vmatprep.mubr.bf16.mxu0 0
    %1452 = vmatmul.mubr.bf16.gmra.mxu0 %v166
    %v1453 = vpop.f32.mrf.mxu0
    %v1454 = vadd.f32 0.0, %v1453
    %v1455 = vpop.f32.mrf.mxu0
    %v1456 = vpop.f32.mrf.mxu0
    %v1457 = vadd.f32 0.0, %v1456
    %v1458 = vpop.f32.mrf.mxu0
    %1459 = vmatprep.mubr.bf16.mxu0 0
    %1460 = vmatmul.mubr.bf16.gmra.mxu0 %v169
    %v1461 = vpop.f32.mrf.mxu0
    %v1462 = vadd.f32 0.0, %v1461
    %v1463 = vpop.f32.mrf.mxu0
    %v1464 = vpop.f32.mrf.mxu0
    %v1465 = vadd.f32 0.0, %v1464
    %v1466 = vpop.f32.mrf.mxu0
    %1467 = vmatprep.mubr.bf16.mxu0 0
    %1468 = vmatmul.mubr.bf16.gmra.mxu0 %v172
    %v1469 = vpop.f32.mrf.mxu0
    %v1470 = vadd.f32 0.0, %v1469
    %v1471 = vpop.f32.mrf.mxu0
    %v1472 = vpop.f32.mrf.mxu0
    %v1473 = vadd.f32 0.0, %v1472
    %v1474 = vpop.f32.mrf.mxu0
    %1475 = vmatprep.mubr.bf16.mxu0 0
    %1476 = vmatmul.mubr.bf16.gmra.mxu0 %v175
    %v1477 = vpop.f32.mrf.mxu0
    %v1478 = vadd.f32 0.0, %v1477
    %v1479 = vpop.f32.mrf.mxu0
    %v1480 = vpop.f32.mrf.mxu0
    %v1481 = vadd.f32 0.0, %v1480
    %v1482 = vpop.f32.mrf.mxu0
    %1483 = vdwg.mxu0
    %s1484 = scalar_lea.vmem %s4, 4
    %v1485 = vld [vmem:[%s1484] sm:$0x1]
    %s1486 = scalar_lea.vmem %s5, 4
    %v1487 = vld [vmem:[%s1486] sm:$0x1]
    %v1489 = vlaneseq
    %v1490 = vshrl.u32 %v1489, 7
    %v1491 = vsub.s32 0, %v1490
    %v1492 = vrot.slane %v1485, %v1491
    %v1494 = vmul.f32 %v244, %v1492
    %v1495 = vmul.f32 %v245, %v1492
    %v1496 = vmul.f32 %v246, %v1492
    %v1497 = vmul.f32 %v247, %v1492
    %v1498 = vmul.f32 %v248, %v1492
    %v1499 = vmul.f32 %v249, %v1492
    %v1500 = vmul.f32 %v250, %v1492
    %v1501 = vmul.f32 %v251, %v1492
    %v1503 = vlaneseq
    %v1504 = vshrl.u32 %v1503, 7
    %v1505 = vsub.s32 0, %v1504
    %v1506 = vrot.slane %v1487, %v1505
    %v1508 = vadd.f32 %v1494, %v1506
    %v1509 = vadd.f32 %v1495, %v1506
    %v1510 = vadd.f32 %v1496, %v1506
    %v1511 = vadd.f32 %v1497, %v1506
    %v1512 = vadd.f32 %v1498, %v1506
    %v1513 = vadd.f32 %v1499, %v1506
    %v1514 = vadd.f32 %v1500, %v1506
    %v1515 = vadd.f32 %v1501, %v1506
    %v1516 = vadd.f32 %v1454, %v1457
    %v1517 = vadd.f32 %v1516, %v1462
    %v1518 = vadd.f32 %v1517, %v1465
    %v1519 = vadd.f32 %v1518, %v1470
    %v1520 = vadd.f32 %v1519, %v1473
    %v1521 = vadd.f32 %v1520, %v1478
    %v1522 = vadd.f32 %v1521, %v1481
    %v1523 = vrot.slane %v1522, 4
    %v1524 = vadd.f32 %v1522, %v1523
    %v1525 = vrot.slane %v1524, 2
    %v1526 = vadd.f32 %v1524, %v1525
    %v1527 = vrot.slane %v1526, 1
    %v1528 = vadd.f32 %v1526, %v1527
    %v1529 = vmul.f32 %v1528, %v99
    %v1530 = vsub.f32 %v1454, %v1529
    %v1531 = vsub.f32 %v1457, %v1529
    %v1532 = vsub.f32 %v1462, %v1529
    %v1533 = vsub.f32 %v1465, %v1529
    %v1534 = vsub.f32 %v1470, %v1529
    %v1535 = vsub.f32 %v1473, %v1529
    %v1536 = vsub.f32 %v1478, %v1529
    %v1537 = vsub.f32 %v1481, %v1529
    %v1538 = vmul.f32 %v1530, %v1530
    %v1539 = vmul.f32 %v1531, %v1531
    %v1540 = vmul.f32 %v1532, %v1532
    %v1541 = vmul.f32 %v1533, %v1533
    %v1542 = vmul.f32 %v1534, %v1534
    %v1543 = vmul.f32 %v1535, %v1535
    %v1544 = vmul.f32 %v1536, %v1536
    %v1545 = vmul.f32 %v1537, %v1537
    %v1546 = vadd.f32 %v1538, %v1539
    %v1547 = vadd.f32 %v1546, %v1540
    %v1548 = vadd.f32 %v1547, %v1541
    %v1549 = vadd.f32 %v1548, %v1542
    %v1550 = vadd.f32 %v1549, %v1543
    %v1551 = vadd.f32 %v1550, %v1544
    %v1552 = vadd.f32 %v1551, %v1545
    %v1553 = vrot.slane %v1552, 4
    %v1554 = vadd.f32 %v1552, %v1553
    %v1555 = vrot.slane %v1554, 2
    %v1556 = vadd.f32 %v1554, %v1555
    %v1557 = vrot.slane %v1556, 1
    %v1558 = vadd.f32 %v1556, %v1557
    %v1559 = vmul.f32 %v1558, %v99
    %v1560 = vadd.f32 %v1559, 1e-05
    %v1561 = vrsqrt.pop %v1560
    %s1562 = scalar_lea.vmem %s6, 4
    %v1563 = vld [vmem:[%s1562] sm:$0x1]
    %s1564 = scalar_lea.vmem [#allocation5], 4
    %v1565 = vld [vmem:[%s1564] sm:$0x1]
    %v1566 = vmul.f32 %v1530, %v1561
    %v1567 = vmul.f32 %v1531, %v1561
    %v1568 = vmul.f32 %v1532, %v1561
    %v1569 = vmul.f32 %v1533, %v1561
    %v1570 = vmul.f32 %v1534, %v1561
    %v1571 = vmul.f32 %v1535, %v1561
    %v1572 = vmul.f32 %v1536, %v1561
    %v1573 = vmul.f32 %v1537, %v1561
    %v1575 = vlaneseq
    %v1576 = vshrl.u32 %v1575, 7
    %v1577 = vsub.s32 0, %v1576
    %v1578 = vrot.slane %v1563, %v1577
    %v1580 = vmul.f32 %v1566, %v1578
    %v1581 = vmul.f32 %v1567, %v1578
    %v1582 = vmul.f32 %v1568, %v1578
    %v1583 = vmul.f32 %v1569, %v1578
    %v1584 = vmul.f32 %v1570, %v1578
    %v1585 = vmul.f32 %v1571, %v1578
    %v1586 = vmul.f32 %v1572, %v1578
    %v1587 = vmul.f32 %v1573, %v1578
    %v1589 = vlaneseq
    %v1590 = vshrl.u32 %v1589, 7
    %v1591 = vsub.s32 0, %v1590
    %v1592 = vrot.slane %v1565, %v1591
    %v1594 = vadd.f32 %v1580, %v1592
    %v1595 = vadd.f32 %v1581, %v1592
    %v1596 = vadd.f32 %v1582, %v1592
    %v1597 = vadd.f32 %v1583, %v1592
    %v1598 = vadd.f32 %v1584, %v1592
    %v1599 = vadd.f32 %v1585, %v1592
    %v1600 = vadd.f32 %v1586, %v1592
    %v1601 = vadd.f32 %v1587, %v1592
    %1602 = vrot.lane.b32.xlu0 %v1594, 2
    %v1603 = vpop.permute.xlu0 %1602
    %1604 = vrot.lane.b32.xlu0 %v1595, 2
    %v1605 = vpop.permute.xlu0 %1604
    %1606 = vrot.lane.b32.xlu0 %v1596, 2
    %v1607 = vpop.permute.xlu0 %1606
    %1608 = vrot.lane.b32.xlu0 %v1597, 2
    %v1609 = vpop.permute.xlu0 %1608
    %1610 = vrot.lane.b32.xlu0 %v1598, 2
    %v1611 = vpop.permute.xlu0 %1610
    %1612 = vrot.lane.b32.xlu0 %v1599, 2
    %v1613 = vpop.permute.xlu0 %1612
    %1614 = vrot.lane.b32.xlu0 %v1600, 2
    %v1615 = vpop.permute.xlu0 %1614
    %1616 = vrot.lane.b32.xlu0 %v1601, 2
    %v1617 = vpop.permute.xlu0 %1616
    %v1618 = vadd.f32 %v1508, %v1603
    %v1619 = vadd.f32 %v1509, %v1605
    %v1620 = vadd.f32 %v1510, %v1607
    %v1621 = vadd.f32 %v1511, %v1609
    %v1622 = vadd.f32 %v1512, %v1611
    %v1623 = vadd.f32 %v1513, %v1613
    %v1624 = vadd.f32 %v1514, %v1615
    %v1625 = vadd.f32 %v1515, %v1617
    %v1626 = vpack.c.bf16 %v1619, %v1618
    %v1627 = vpack.c.bf16 %v1621, %v1620
    %v1628 = vpack.c.bf16 %v1623, %v1622
    %v1629 = vpack.c.bf16 %v1625, %v1624
    %s1630 = scalar_lea.vmem [#allocation7], 256
    %v1631 = vld [vmem:[%s1630] sm:$0xf]
    %v1632 = vld [vmem:[%s1630 + $0x4] sm:$0xf]
    %v1633 = vld [vmem:[%s1630 + $0x8] sm:$0xf]
    %v1634 = vld [vmem:[%s1630 + $0xc] sm:$0xf]
    %v1635 = vld [vmem:[%s1630 + $0x10] sm:$0xf]
    %v1636 = vld [vmem:[%s1630 + $0x14] sm:$0xf]
    %v1637 = vld [vmem:[%s1630 + $0x18] sm:$0xf]
    %v1638 = vld [vmem:[%s1630 + $0x1c] sm:$0xf]
    %v1639 = vld [vmem:[%s1630 + $0x20] sm:$0xf]
    %v1640 = vld [vmem:[%s1630 + $0x24] sm:$0xf]
    %v1641 = vld [vmem:[%s1630 + $0x28] sm:$0xf]
    %v1642 = vld [vmem:[%s1630 + $0x2c] sm:$0xf]
    %v1643 = vld [vmem:[%s1630 + $0x30] sm:$0xf]
    %v1644 = vld [vmem:[%s1630 + $0x34] sm:$0xf]
    %v1645 = vld [vmem:[%s1630 + $0x38] sm:$0xf]
    %v1646 = vld [vmem:[%s1630 + $0x3c] sm:$0xf]
    %s1647 = scalar_lea.vmem %s9, 4
    %v1648 = vld [vmem:[%s1647] sm:$0x1]
    %v1650 = vlaneseq
    %v1651 = vshrl.u32 %v1650, 7
    %v1652 = vsub.s32 0, %v1651
    %v1653 = vrot.slane %v1648, %v1652
    %v1671 = vunpack.c.l.b16 %v1631
    %v1672 = vunpack.c.l.b16 %v1632
    %v1673 = vunpack.c.l.b16 %v1633
    %v1674 = vunpack.c.l.b16 %v1634
    %v1675 = vunpack.c.l.b16 %v1635
    %v1676 = vunpack.c.l.b16 %v1636
    %v1677 = vunpack.c.l.b16 %v1637
    %v1678 = vunpack.c.l.b16 %v1638
    %v1679 = vunpack.c.l.b16 %v1639
    %v1680 = vunpack.c.l.b16 %v1640
    %v1681 = vunpack.c.l.b16 %v1641
    %v1682 = vunpack.c.l.b16 %v1642
    %v1683 = vunpack.c.l.b16 %v1643
    %v1684 = vunpack.c.l.b16 %v1644
    %v1685 = vunpack.c.l.b16 %v1645
    %v1686 = vunpack.c.l.b16 %v1646
    %v1687 = vpack.c.b16 %v1672, %v1671
    %v1688 = vpack.c.b16 %v1674, %v1673
    %v1689 = vpack.c.b16 %v1676, %v1675
    %v1690 = vpack.c.b16 %v1678, %v1677
    %v1691 = vpack.c.b16 %v1680, %v1679
    %v1692 = vpack.c.b16 %v1682, %v1681
    %v1693 = vpack.c.b16 %v1684, %v1683
    %v1694 = vpack.c.b16 %v1686, %v1685
    %1703 = vmatprep.subr.bf16.mxu0 0
    %1704 = vmatpush1.bf16.msra.mxu0 %v1694
    %1705 = vmatprep.subr.bf16.mxu0 0
    %1706 = vmatpush1.bf16.msra.mxu0 %v1693
    %1707 = vmatprep.subr.bf16.mxu0 0
    %1708 = vmatpush1.bf16.msra.mxu0 %v1692
    %1709 = vmatprep.subr.bf16.mxu0 0
    %1710 = vmatpush1.bf16.msra.mxu0 %v1691
    %1711 = vmatprep.subr.bf16.mxu0 0
    %1712 = vmatpush1.bf16.msra.mxu0 %v1690
    %1713 = vmatprep.subr.bf16.mxu0 0
    %1714 = vmatpush1.bf16.msra.mxu0 %v1689
    %1715 = vmatprep.subr.bf16.mxu0 0
    %1716 = vmatpush1.bf16.msra.mxu0 %v1688
    %1717 = vmatprep.subr.bf16.mxu0 0
    %1718 = vmatpush1.bf16.msra.mxu0 %v1687
    %1719 = vmatprep.subr.bf16.mxu0 0
    %1720 = vmatpush2.bf16.msra.mxu0 0
    %1721 = vmatprep.subr.bf16.mxu0 0
    %1722 = vmatpush2.bf16.msra.mxu0 0
    %1723 = vmatprep.subr.bf16.mxu0 0
    %1724 = vmatpush2.bf16.msra.mxu0 0
    %1725 = vmatprep.subr.bf16.mxu0 0
    %1726 = vmatpush2.bf16.msra.mxu0 0
    %1727 = vmatprep.subr.bf16.mxu0 0
    %1728 = vmatpush2.bf16.msra.mxu0 0
    %1729 = vmatprep.subr.bf16.mxu0 0
    %1730 = vmatpush2.bf16.msra.mxu0 0
    %1731 = vmatprep.subr.bf16.mxu0 0
    %1732 = vmatpush2.bf16.msra.mxu0 0
    %1733 = vmatprep.subr.bf16.mxu0 0
    %1734 = vmatpush2.bf16.msra.mxu0 0
    %1735 = vmatprep.mubr.bf16.mxu0 0
    %1736 = vmatmul.mubr.bf16.gmra.mxu0 %v1626
    %v1737 = vpop.f32.mrf.mxu0
    %v1738 = vadd.f32 %v1653, %v1737
    %v1739 = vpop.f32.mrf.mxu0
    %v1740 = vpop.f32.mrf.mxu0
    %v1741 = vadd.f32 %v1653, %v1740
    %v1742 = vpop.f32.mrf.mxu0
    %1743 = vmatprep.mubr.bf16.mxu0 0
    %1744 = vmatmul.mubr.bf16.gmra.mxu0 %v1627
    %v1745 = vpop.f32.mrf.mxu0
    %v1746 = vadd.f32 %v1653, %v1745
    %v1747 = vpop.f32.mrf.mxu0
    %v1748 = vpop.f32.mrf.mxu0
    %v1749 = vadd.f32 %v1653, %v1748
    %v1750 = vpop.f32.mrf.mxu0
    %1751 = vmatprep.mubr.bf16.mxu0 0
    %1752 = vmatmul.mubr.bf16.gmra.mxu0 %v1628
    %v1753 = vpop.f32.mrf.mxu0
    %v1754 = vadd.f32 %v1653, %v1753
    %v1755 = vpop.f32.mrf.mxu0
    %v1756 = vpop.f32.mrf.mxu0
    %v1757 = vadd.f32 %v1653, %v1756
    %v1758 = vpop.f32.mrf.mxu0
    %1759 = vmatprep.mubr.bf16.mxu0 0
    %1760 = vmatmul.mubr.bf16.gmra.mxu0 %v1629
    %v1761 = vpop.f32.mrf.mxu0
    %v1762 = vadd.f32 %v1653, %v1761
    %v1763 = vpop.f32.mrf.mxu0
    %v1764 = vpop.f32.mrf.mxu0
    %v1765 = vadd.f32 %v1653, %v1764
    %v1766 = vpop.f32.mrf.mxu0
    %1767 = vdwg.mxu0
    %v1768 = vmax.f32 %v1738, 0.0
    %v1769 = vmax.f32 %v1741, 0.0
    %v1770 = vmax.f32 %v1746, 0.0
    %v1771 = vmax.f32 %v1749, 0.0
    %v1772 = vmax.f32 %v1754, 0.0
    %v1773 = vmax.f32 %v1757, 0.0
    %v1774 = vmax.f32 %v1762, 0.0
    %v1775 = vmax.f32 %v1765, 0.0
    %v1776 = vpack.c.bf16 %v1769, %v1768
    %v1777 = vpack.c.bf16 %v1771, %v1770
    %v1778 = vpack.c.bf16 %v1773, %v1772
    %v1779 = vpack.c.bf16 %v1775, %v1774
    %1780 = vmatprep.subr.bf16.mxu0 0
    %1781 = vmatpush1.bf16.msra.mxu0 0
    %1782 = vmatprep.subr.bf16.mxu0 0
    %1783 = vmatpush1.bf16.msra.mxu0 0
    %1784 = vmatprep.subr.bf16.mxu0 0
    %1785 = vmatpush1.bf16.msra.mxu0 0
    %1786 = vmatprep.subr.bf16.mxu0 0
    %1787 = vmatpush1.bf16.msra.mxu0 0
    %1788 = vmatprep.subr.bf16.mxu0 0
    %1789 = vmatpush1.bf16.msra.mxu0 %v1779
    %1790 = vmatprep.subr.bf16.mxu0 0
    %1791 = vmatpush1.bf16.msra.mxu0 %v1778
    %1792 = vmatprep.subr.bf16.mxu0 0
    %1793 = vmatpush1.bf16.msra.mxu0 %v1777
    %1794 = vmatprep.subr.bf16.mxu0 0
    %1795 = vmatpush1.bf16.msra.mxu0 %v1776
    %1796 = vmatprep.subr.bf16.mxu0 0
    %1797 = vmatpush2.bf16.msra.mxu0 0
    %1798 = vmatprep.subr.bf16.mxu0 0
    %1799 = vmatpush2.bf16.msra.mxu0 0
    %1800 = vmatprep.subr.bf16.mxu0 0
    %1801 = vmatpush2.bf16.msra.mxu0 0
    %1802 = vmatprep.subr.bf16.mxu0 0
    %1803 = vmatpush2.bf16.msra.mxu0 0
    %1804 = vmatprep.subr.bf16.mxu0 0
    %1805 = vmatpush2.bf16.msra.mxu0 0
    %1806 = vmatprep.subr.bf16.mxu0 0
    %1807 = vmatpush2.bf16.msra.mxu0 0
    %1808 = vmatprep.subr.bf16.mxu0 0
    %1809 = vmatpush2.bf16.msra.mxu0 0
    %1810 = vmatprep.subr.bf16.mxu0 0
    %1811 = vmatpush2.bf16.msra.mxu0 0
    %1812 = vmatprep.mubr.bf16.mxu0 0
    %1813 = vmatmul.mubr.bf16.gmra.mxu0 %v549
    %v1814 = vpop.f32.mrf.mxu0
    %v1815 = vadd.f32 0.0, %v1814
    %v1816 = vpop.f32.mrf.mxu0
    %v1817 = vpop.f32.mrf.mxu0
    %v1818 = vadd.f32 0.0, %v1817
    %v1819 = vpop.f32.mrf.mxu0
    %1820 = vdwg.mxu0
    %v1821 = vadd.f32 %v1815, %v1818
    %v1822 = vrot.slane %v1821, 4
    %v1823 = vadd.f32 %v1821, %v1822
    %v1824 = vrot.slane %v1823, 2
    %v1825 = vadd.f32 %v1823, %v1824
    %v1826 = vrot.slane %v1825, 1
    %v1827 = vadd.f32 %v1825, %v1826
    %v1828 = vmul.f32 %v1827, %v599
    %v1829 = vsub.f32 %v1815, %v1828
    %v1830 = vsub.f32 %v1818, %v1828
    %v1831 = vmul.f32 %v1829, %v1829
    %v1832 = vmul.f32 %v1830, %v1830
    %v1833 = vadd.f32 %v1831, %v1832
    %v1834 = vrot.slane %v1833, 4
    %v1835 = vadd.f32 %v1833, %v1834
    %v1836 = vrot.slane %v1835, 2
    %v1837 = vadd.f32 %v1835, %v1836
    %v1838 = vrot.slane %v1837, 1
    %v1839 = vadd.f32 %v1837, %v1838
    %v1840 = vmul.f32 %v1839, %v599
    %v1841 = vadd.f32 %v1840, 1e-05
    %v1842 = vrsqrt.pop %v1841
    %s1843 = scalar_lea.vmem %s4, 5
    %v1844 = vld [vmem:[%s1843] sm:$0x1]
    %s1845 = scalar_lea.vmem %s5, 5
    %v1846 = vld [vmem:[%s1845] sm:$0x1]
    %v1847 = vmul.f32 %v1829, %v1842
    %v1848 = vmul.f32 %v1830, %v1842
    %v1850 = vlaneseq
    %v1851 = vshrl.u32 %v1850, 7
    %v1852 = vsub.s32 0, %v1851
    %v1853 = vrot.slane %v1844, %v1852
    %v1855 = vmul.f32 %v1847, %v1853
    %v1856 = vmul.f32 %v1848, %v1853
    %v1858 = vlaneseq
    %v1859 = vshrl.u32 %v1858, 7
    %v1860 = vsub.s32 0, %v1859
    %v1861 = vrot.slane %v1846, %v1860
    %v1863 = vadd.f32 %v1855, %v1861
    %v1864 = vadd.f32 %v1856, %v1861
    %v1865 = vadd.f32 %v1416, %v1417
    %v1866 = vrot.slane %v1865, 4
    %v1867 = vadd.f32 %v1865, %v1866
    %v1868 = vrot.slane %v1867, 2
    %v1869 = vadd.f32 %v1867, %v1868
    %v1870 = vrot.slane %v1869, 1
    %v1871 = vadd.f32 %v1869, %v1870
    %v1872 = vmul.f32 %v1871, %v599
    %v1873 = vsub.f32 %v1416, %v1872
    %v1874 = vsub.f32 %v1417, %v1872
    %v1875 = vmul.f32 %v1873, %v1873
    %v1876 = vmul.f32 %v1874, %v1874
    %v1877 = vadd.f32 %v1875, %v1876
    %v1878 = vrot.slane %v1877, 4
    %v1879 = vadd.f32 %v1877, %v1878
    %v1880 = vrot.slane %v1879, 2
    %v1881 = vadd.f32 %v1879, %v1880
    %v1882 = vrot.slane %v1881, 1
    %v1883 = vadd.f32 %v1881, %v1882
    %v1884 = vmul.f32 %v1883, %v599
    %v1885 = vadd.f32 %v1884, 1e-05
    %v1886 = vrsqrt.pop %v1885
    %s1887 = scalar_lea.vmem %s6, 5
    %v1888 = vld [vmem:[%s1887] sm:$0x1]
    %s1889 = scalar_lea.vmem [#allocation5], 5
    %v1890 = vld [vmem:[%s1889] sm:$0x1]
    %v1891 = vmul.f32 %v1873, %v1886
    %v1892 = vmul.f32 %v1874, %v1886
    %v1894 = vlaneseq
    %v1895 = vshrl.u32 %v1894, 7
    %v1896 = vsub.s32 0, %v1895
    %v1897 = vrot.slane %v1888, %v1896
    %v1899 = vmul.f32 %v1891, %v1897
    %v1900 = vmul.f32 %v1892, %v1897
    %v1902 = vlaneseq
    %v1903 = vshrl.u32 %v1902, 7
    %v1904 = vsub.s32 0, %v1903
    %v1905 = vrot.slane %v1890, %v1904
    %v1907 = vadd.f32 %v1899, %v1905
    %v1908 = vadd.f32 %v1900, %v1905
    %1909 = vrot.lane.b32.xlu0 %v1907, 10
    %v1910 = vpop.permute.xlu0 %1909
    %1911 = vrot.lane.b32.xlu0 %v1908, 10
    %v1912 = vpop.permute.xlu0 %1911
    %v1913 = vadd.f32 %v1863, %v1910
    %v1914 = vadd.f32 %v1864, %v1912
    %v1915 = vpack.c.bf16 %v1914, %v1913
    %s1916 = scalar_lea.vmem [#allocation7], 320
    %v1917 = vld [vmem:[%s1916] sm:$0xf]
    %v1918 = vld [vmem:[%s1916 + $0x4] sm:$0xf]
    %v1919 = vld [vmem:[%s1916 + $0x8] sm:$0xf]
    %v1920 = vld [vmem:[%s1916 + $0xc] sm:$0xf]
    %v1921 = vld [vmem:[%s1916 + $0x10] sm:$0xf]
    %v1922 = vld [vmem:[%s1916 + $0x14] sm:$0xf]
    %v1923 = vld [vmem:[%s1916 + $0x18] sm:$0xf]
    %v1924 = vld [vmem:[%s1916 + $0x1c] sm:$0xf]
    %v1925 = vld [vmem:[%s1916 + $0x20] sm:$0xf]
    %v1926 = vld [vmem:[%s1916 + $0x24] sm:$0xf]
    %v1927 = vld [vmem:[%s1916 + $0x28] sm:$0xf]
    %v1928 = vld [vmem:[%s1916 + $0x2c] sm:$0xf]
    %v1929 = vld [vmem:[%s1916 + $0x30] sm:$0xf]
    %v1930 = vld [vmem:[%s1916 + $0x34] sm:$0xf]
    %v1931 = vld [vmem:[%s1916 + $0x38] sm:$0xf]
    %v1932 = vld [vmem:[%s1916 + $0x3c] sm:$0xf]
    %s1933 = scalar_lea.vmem %s9, 5
    %v1934 = vld [vmem:[%s1933] sm:$0x1]
    %v1936 = vlaneseq
    %v1937 = vshrl.u32 %v1936, 7
    %v1938 = vsub.s32 0, %v1937
    %v1939 = vrot.slane %v1934, %v1938
    %v1957 = vunpack.c.l.b16 %v1917
    %v1958 = vunpack.c.l.b16 %v1918
    %v1959 = vunpack.c.l.b16 %v1919
    %v1960 = vunpack.c.l.b16 %v1920
    %v1961 = vunpack.c.l.b16 %v1921
    %v1962 = vunpack.c.l.b16 %v1922
    %v1963 = vunpack.c.l.b16 %v1923
    %v1964 = vunpack.c.l.b16 %v1924
    %v1965 = vunpack.c.l.b16 %v1925
    %v1966 = vunpack.c.l.b16 %v1926
    %v1967 = vunpack.c.l.b16 %v1927
    %v1968 = vunpack.c.l.b16 %v1928
    %v1969 = vunpack.c.l.b16 %v1929
    %v1970 = vunpack.c.l.b16 %v1930
    %v1971 = vunpack.c.l.b16 %v1931
    %v1972 = vunpack.c.l.b16 %v1932
    %v1973 = vpack.c.b16 %v1958, %v1957
    %v1974 = vpack.c.b16 %v1960, %v1959
    %v1975 = vpack.c.b16 %v1962, %v1961
    %v1976 = vpack.c.b16 %v1964, %v1963
    %v1977 = vpack.c.b16 %v1966, %v1965
    %v1978 = vpack.c.b16 %v1968, %v1967
    %v1979 = vpack.c.b16 %v1970, %v1969
    %v1980 = vpack.c.b16 %v1972, %v1971
    %1989 = vmatprep.subr.bf16.mxu0 0
    %1990 = vmatpush1.bf16.msra.mxu0 %v1980
    %1991 = vmatprep.subr.bf16.mxu0 0
    %1992 = vmatpush1.bf16.msra.mxu0 %v1979
    %1993 = vmatprep.subr.bf16.mxu0 0
    %1994 = vmatpush1.bf16.msra.mxu0 %v1978
    %1995 = vmatprep.subr.bf16.mxu0 0
    %1996 = vmatpush1.bf16.msra.mxu0 %v1977
    %1997 = vmatprep.subr.bf16.mxu0 0
    %1998 = vmatpush1.bf16.msra.mxu0 %v1976
    %1999 = vmatprep.subr.bf16.mxu0 0
    %2000 = vmatpush1.bf16.msra.mxu0 %v1975
    %2001 = vmatprep.subr.bf16.mxu0 0
    %2002 = vmatpush1.bf16.msra.mxu0 %v1974
    %2003 = vmatprep.subr.bf16.mxu0 0
    %2004 = vmatpush1.bf16.msra.mxu0 %v1973
    %2005 = vmatprep.subr.bf16.mxu0 0
    %2006 = vmatpush2.bf16.msra.mxu0 0
    %2007 = vmatprep.subr.bf16.mxu0 0
    %2008 = vmatpush2.bf16.msra.mxu0 0
    %2009 = vmatprep.subr.bf16.mxu0 0
    %2010 = vmatpush2.bf16.msra.mxu0 0
    %2011 = vmatprep.subr.bf16.mxu0 0
    %2012 = vmatpush2.bf16.msra.mxu0 0
    %2013 = vmatprep.subr.bf16.mxu0 0
    %2014 = vmatpush2.bf16.msra.mxu0 0
    %2015 = vmatprep.subr.bf16.mxu0 0
    %2016 = vmatpush2.bf16.msra.mxu0 0
    %2017 = vmatprep.subr.bf16.mxu0 0
    %2018 = vmatpush2.bf16.msra.mxu0 0
    %2019 = vmatprep.subr.bf16.mxu0 0
    %2020 = vmatpush2.bf16.msra.mxu0 0
    %2021 = vmatprep.mubr.bf16.mxu0 0
    %2022 = vmatmul.mubr.bf16.gmra.mxu0 %v1915
    %v2023 = vpop.f32.mrf.mxu0
    %v2024 = vadd.f32 %v1939, %v2023
    %v2025 = vpop.f32.mrf.mxu0
    %v2026 = vpop.f32.mrf.mxu0
    %v2027 = vadd.f32 %v1939, %v2026
    %v2028 = vpop.f32.mrf.mxu0
    %2029 = vdwg.mxu0
    %v2030 = vmax.f32 %v2024, 0.0
    %v2031 = vmax.f32 %v2027, 0.0
    %v2032 = vpack.c.bf16 %v2031, %v2030
    %2033 = vmatprep.subr.bf16.mxu0 0
    %2034 = vmatpush1.bf16.msra.mxu0 0
    %2035 = vmatprep.subr.bf16.mxu0 0
    %2036 = vmatpush1.bf16.msra.mxu0 0
    %2037 = vmatprep.subr.bf16.mxu0 0
    %2038 = vmatpush1.bf16.msra.mxu0 0
    %2039 = vmatprep.subr.bf16.mxu0 0
    %2040 = vmatpush1.bf16.msra.mxu0 0
    %2041 = vmatprep.subr.bf16.mxu0 0
    %2042 = vmatpush1.bf16.msra.mxu0 0
    %2043 = vmatprep.subr.bf16.mxu0 0
    %2044 = vmatpush1.bf16.msra.mxu0 0
    %2045 = vmatprep.subr.bf16.mxu0 0
    %2046 = vmatpush1.bf16.msra.mxu0 0
    %2047 = vmatprep.subr.bf16.mxu0 0
    %2048 = vmatpush1.bf16.msra.mxu0 %v2032
    %2049 = vmatprep.subr.bf16.mxu0 0
    %2050 = vmatpush2.bf16.msra.mxu0 0
    %2051 = vmatprep.subr.bf16.mxu0 0
    %2052 = vmatpush2.bf16.msra.mxu0 0
    %2053 = vmatprep.subr.bf16.mxu0 0
    %2054 = vmatpush2.bf16.msra.mxu0 0
    %2055 = vmatprep.subr.bf16.mxu0 0
    %2056 = vmatpush2.bf16.msra.mxu0 0
    %2057 = vmatprep.subr.bf16.mxu0 0
    %2058 = vmatpush2.bf16.msra.mxu0 0
    %2059 = vmatprep.subr.bf16.mxu0 0
    %2060 = vmatpush2.bf16.msra.mxu0 0
    %2061 = vmatprep.subr.bf16.mxu0 0
    %2062 = vmatpush2.bf16.msra.mxu0 0
    %2063 = vmatprep.subr.bf16.mxu0 0
    %2064 = vmatpush2.bf16.msra.mxu0 0
    %2065 = vmatprep.mubr.bf16.mxu0 0
    %2066 = vmatmul.mubr.bf16.gmra.mxu0 %v166
    %v2067 = vpop.f32.mrf.mxu0
    %v2068 = vadd.f32 0.0, %v2067
    %v2069 = vpop.f32.mrf.mxu0
    %v2070 = vpop.f32.mrf.mxu0
    %v2071 = vadd.f32 0.0, %v2070
    %v2072 = vpop.f32.mrf.mxu0
    %2073 = vmatprep.mubr.bf16.mxu0 0
    %2074 = vmatmul.mubr.bf16.gmra.mxu0 %v169
    %v2075 = vpop.f32.mrf.mxu0
    %v2076 = vadd.f32 0.0, %v2075
    %v2077 = vpop.f32.mrf.mxu0
    %v2078 = vpop.f32.mrf.mxu0
    %v2079 = vadd.f32 0.0, %v2078
    %v2080 = vpop.f32.mrf.mxu0
    %2081 = vmatprep.mubr.bf16.mxu0 0
    %2082 = vmatmul.mubr.bf16.gmra.mxu0 %v172
    %v2083 = vpop.f32.mrf.mxu0
    %v2084 = vadd.f32 0.0, %v2083
    %v2085 = vpop.f32.mrf.mxu0
    %v2086 = vpop.f32.mrf.mxu0
    %v2087 = vadd.f32 0.0, %v2086
    %v2088 = vpop.f32.mrf.mxu0
    %2089 = vmatprep.mubr.bf16.mxu0 0
    %2090 = vmatmul.mubr.bf16.gmra.mxu0 %v175
    %v2091 = vpop.f32.mrf.mxu0
    %v2092 = vadd.f32 0.0, %v2091
    %v2093 = vpop.f32.mrf.mxu0
    %v2094 = vpop.f32.mrf.mxu0
    %v2095 = vadd.f32 0.0, %v2094
    %v2096 = vpop.f32.mrf.mxu0
    %2097 = vdwg.mxu0
    %s2098 = scalar_lea.vmem %s4, 6
    %v2099 = vld [vmem:[%s2098] sm:$0x1]
    %s2100 = scalar_lea.vmem %s5, 6
    %v2101 = vld [vmem:[%s2100] sm:$0x1]
    %v2103 = vlaneseq
    %v2104 = vshrl.u32 %v2103, 7
    %v2105 = vsub.s32 0, %v2104
    %v2106 = vrot.slane %v2099, %v2105
    %v2108 = vmul.f32 %v244, %v2106
    %v2109 = vmul.f32 %v245, %v2106
    %v2110 = vmul.f32 %v246, %v2106
    %v2111 = vmul.f32 %v247, %v2106
    %v2112 = vmul.f32 %v248, %v2106
    %v2113 = vmul.f32 %v249, %v2106
    %v2114 = vmul.f32 %v250, %v2106
    %v2115 = vmul.f32 %v251, %v2106
    %v2117 = vlaneseq
    %v2118 = vshrl.u32 %v2117, 7
    %v2119 = vsub.s32 0, %v2118
    %v2120 = vrot.slane %v2101, %v2119
    %v2122 = vadd.f32 %v2108, %v2120
    %v2123 = vadd.f32 %v2109, %v2120
    %v2124 = vadd.f32 %v2110, %v2120
    %v2125 = vadd.f32 %v2111, %v2120
    %v2126 = vadd.f32 %v2112, %v2120
    %v2127 = vadd.f32 %v2113, %v2120
    %v2128 = vadd.f32 %v2114, %v2120
    %v2129 = vadd.f32 %v2115, %v2120
    %v2130 = vadd.f32 %v2068, %v2071
    %v2131 = vadd.f32 %v2130, %v2076
    %v2132 = vadd.f32 %v2131, %v2079
    %v2133 = vadd.f32 %v2132, %v2084
    %v2134 = vadd.f32 %v2133, %v2087
    %v2135 = vadd.f32 %v2134, %v2092
    %v2136 = vadd.f32 %v2135, %v2095
    %v2137 = vrot.slane %v2136, 4
    %v2138 = vadd.f32 %v2136, %v2137
    %v2139 = vrot.slane %v2138, 2
    %v2140 = vadd.f32 %v2138, %v2139
    %v2141 = vrot.slane %v2140, 1
    %v2142 = vadd.f32 %v2140, %v2141
    %v2143 = vmul.f32 %v2142, %v99
    %v2144 = vsub.f32 %v2068, %v2143
    %v2145 = vsub.f32 %v2071, %v2143
    %v2146 = vsub.f32 %v2076, %v2143
    %v2147 = vsub.f32 %v2079, %v2143
    %v2148 = vsub.f32 %v2084, %v2143
    %v2149 = vsub.f32 %v2087, %v2143
    %v2150 = vsub.f32 %v2092, %v2143
    %v2151 = vsub.f32 %v2095, %v2143
    %v2152 = vmul.f32 %v2144, %v2144
    %v2153 = vmul.f32 %v2145, %v2145
    %v2154 = vmul.f32 %v2146, %v2146
    %v2155 = vmul.f32 %v2147, %v2147
    %v2156 = vmul.f32 %v2148, %v2148
    %v2157 = vmul.f32 %v2149, %v2149
    %v2158 = vmul.f32 %v2150, %v2150
    %v2159 = vmul.f32 %v2151, %v2151
    %v2160 = vadd.f32 %v2152, %v2153
    %v2161 = vadd.f32 %v2160, %v2154
    %v2162 = vadd.f32 %v2161, %v2155
    %v2163 = vadd.f32 %v2162, %v2156
    %v2164 = vadd.f32 %v2163, %v2157
    %v2165 = vadd.f32 %v2164, %v2158
    %v2166 = vadd.f32 %v2165, %v2159
    %v2167 = vrot.slane %v2166, 4
    %v2168 = vadd.f32 %v2166, %v2167
    %v2169 = vrot.slane %v2168, 2
    %v2170 = vadd.f32 %v2168, %v2169
    %v2171 = vrot.slane %v2170, 1
    %v2172 = vadd.f32 %v2170, %v2171
    %v2173 = vmul.f32 %v2172, %v99
    %v2174 = vadd.f32 %v2173, 1e-05
    %v2175 = vrsqrt.pop %v2174
    %s2176 = scalar_lea.vmem %s6, 6
    %v2177 = vld [vmem:[%s2176] sm:$0x1]
    %s2178 = scalar_lea.vmem [#allocation5], 6
    %v2179 = vld [vmem:[%s2178] sm:$0x1]
    %v2180 = vmul.f32 %v2144, %v2175
    %v2181 = vmul.f32 %v2145, %v2175
    %v2182 = vmul.f32 %v2146, %v2175
    %v2183 = vmul.f32 %v2147, %v2175
    %v2184 = vmul.f32 %v2148, %v2175
    %v2185 = vmul.f32 %v2149, %v2175
    %v2186 = vmul.f32 %v2150, %v2175
    %v2187 = vmul.f32 %v2151, %v2175
    %v2189 = vlaneseq
    %v2190 = vshrl.u32 %v2189, 7
    %v2191 = vsub.s32 0, %v2190
    %v2192 = vrot.slane %v2177, %v2191
    %v2194 = vmul.f32 %v2180, %v2192
    %v2195 = vmul.f32 %v2181, %v2192
    %v2196 = vmul.f32 %v2182, %v2192
    %v2197 = vmul.f32 %v2183, %v2192
    %v2198 = vmul.f32 %v2184, %v2192
    %v2199 = vmul.f32 %v2185, %v2192
    %v2200 = vmul.f32 %v2186, %v2192
    %v2201 = vmul.f32 %v2187, %v2192
    %v2203 = vlaneseq
    %v2204 = vshrl.u32 %v2203, 7
    %v2205 = vsub.s32 0, %v2204
    %v2206 = vrot.slane %v2179, %v2205
    %v2208 = vadd.f32 %v2194, %v2206
    %v2209 = vadd.f32 %v2195, %v2206
    %v2210 = vadd.f32 %v2196, %v2206
    %v2211 = vadd.f32 %v2197, %v2206
    %v2212 = vadd.f32 %v2198, %v2206
    %v2213 = vadd.f32 %v2199, %v2206
    %v2214 = vadd.f32 %v2200, %v2206
    %v2215 = vadd.f32 %v2201, %v2206
    %2216 = vrot.lane.b32.xlu0 %v2208, 2
    %v2217 = vpop.permute.xlu0 %2216
    %2218 = vrot.lane.b32.xlu0 %v2209, 2
    %v2219 = vpop.permute.xlu0 %2218
    %2220 = vrot.lane.b32.xlu0 %v2210, 2
    %v2221 = vpop.permute.xlu0 %2220
    %2222 = vrot.lane.b32.xlu0 %v2211, 2
    %v2223 = vpop.permute.xlu0 %2222
    %2224 = vrot.lane.b32.xlu0 %v2212, 2
    %v2225 = vpop.permute.xlu0 %2224
    %2226 = vrot.lane.b32.xlu0 %v2213, 2
    %v2227 = vpop.permute.xlu0 %2226
    %2228 = vrot.lane.b32.xlu0 %v2214, 2
    %v2229 = vpop.permute.xlu0 %2228
    %2230 = vrot.lane.b32.xlu0 %v2215, 2
    %v2231 = vpop.permute.xlu0 %2230
    %v2232 = vadd.f32 %v2122, %v2217
    %v2233 = vadd.f32 %v2123, %v2219
    %v2234 = vadd.f32 %v2124, %v2221
    %v2235 = vadd.f32 %v2125, %v2223
    %v2236 = vadd.f32 %v2126, %v2225
    %v2237 = vadd.f32 %v2127, %v2227
    %v2238 = vadd.f32 %v2128, %v2229
    %v2239 = vadd.f32 %v2129, %v2231
    %v2240 = vpack.c.bf16 %v2233, %v2232
    %v2241 = vpack.c.bf16 %v2235, %v2234
    %v2242 = vpack.c.bf16 %v2237, %v2236
    %v2243 = vpack.c.bf16 %v2239, %v2238
    %s2244 = scalar_lea.vmem [#allocation7], 384
    %v2245 = vld [vmem:[%s2244] sm:$0xf]
    %v2246 = vld [vmem:[%s2244 + $0x4] sm:$0xf]
    %v2247 = vld [vmem:[%s2244 + $0x8] sm:$0xf]
    %v2248 = vld [vmem:[%s2244 + $0xc] sm:$0xf]
    %v2249 = vld [vmem:[%s2244 + $0x10] sm:$0xf]
    %v2250 = vld [vmem:[%s2244 + $0x14] sm:$0xf]
    %v2251 = vld [vmem:[%s2244 + $0x18] sm:$0xf]
    %v2252 = vld [vmem:[%s2244 + $0x1c] sm:$0xf]
    %v2253 = vld [vmem:[%s2244 + $0x20] sm:$0xf]
    %v2254 = vld [vmem:[%s2244 + $0x24] sm:$0xf]
    %v2255 = vld [vmem:[%s2244 + $0x28] sm:$0xf]
    %v2256 = vld [vmem:[%s2244 + $0x2c] sm:$0xf]
    %v2257 = vld [vmem:[%s2244 + $0x30] sm:$0xf]
    %v2258 = vld [vmem:[%s2244 + $0x34] sm:$0xf]
    %v2259 = vld [vmem:[%s2244 + $0x38] sm:$0xf]
    %v2260 = vld [vmem:[%s2244 + $0x3c] sm:$0xf]
    %s2261 = scalar_lea.vmem %s9, 6
    %v2262 = vld [vmem:[%s2261] sm:$0x1]
    %v2264 = vlaneseq
    %v2265 = vshrl.u32 %v2264, 7
    %v2266 = vsub.s32 0, %v2265
    %v2267 = vrot.slane %v2262, %v2266
    %v2285 = vunpack.c.l.b16 %v2245
    %v2286 = vunpack.c.l.b16 %v2246
    %v2287 = vunpack.c.l.b16 %v2247
    %v2288 = vunpack.c.l.b16 %v2248
    %v2289 = vunpack.c.l.b16 %v2249
    %v2290 = vunpack.c.l.b16 %v2250
    %v2291 = vunpack.c.l.b16 %v2251
    %v2292 = vunpack.c.l.b16 %v2252
    %v2293 = vunpack.c.l.b16 %v2253
    %v2294 = vunpack.c.l.b16 %v2254
    %v2295 = vunpack.c.l.b16 %v2255
    %v2296 = vunpack.c.l.b16 %v2256
    %v2297 = vunpack.c.l.b16 %v2257
    %v2298 = vunpack.c.l.b16 %v2258
    %v2299 = vunpack.c.l.b16 %v2259
    %v2300 = vunpack.c.l.b16 %v2260
    %v2301 = vpack.c.b16 %v2286, %v2285
    %v2302 = vpack.c.b16 %v2288, %v2287
    %v2303 = vpack.c.b16 %v2290, %v2289
    %v2304 = vpack.c.b16 %v2292, %v2291
    %v2305 = vpack.c.b16 %v2294, %v2293
    %v2306 = vpack.c.b16 %v2296, %v2295
    %v2307 = vpack.c.b16 %v2298, %v2297
    %v2308 = vpack.c.b16 %v2300, %v2299
    %2317 = vmatprep.subr.bf16.mxu0 0
    %2318 = vmatpush1.bf16.msra.mxu0 %v2308
    %2319 = vmatprep.subr.bf16.mxu0 0
    %2320 = vmatpush1.bf16.msra.mxu0 %v2307
    %2321 = vmatprep.subr.bf16.mxu0 0
    %2322 = vmatpush1.bf16.msra.mxu0 %v2306
    %2323 = vmatprep.subr.bf16.mxu0 0
    %2324 = vmatpush1.bf16.msra.mxu0 %v2305
    %2325 = vmatprep.subr.bf16.mxu0 0
    %2326 = vmatpush1.bf16.msra.mxu0 %v2304
    %2327 = vmatprep.subr.bf16.mxu0 0
    %2328 = vmatpush1.bf16.msra.mxu0 %v2303
    %2329 = vmatprep.subr.bf16.mxu0 0
    %2330 = vmatpush1.bf16.msra.mxu0 %v2302
    %2331 = vmatprep.subr.bf16.mxu0 0
    %2332 = vmatpush1.bf16.msra.mxu0 %v2301
    %2333 = vmatprep.subr.bf16.mxu0 0
    %2334 = vmatpush2.bf16.msra.mxu0 0
    %2335 = vmatprep.subr.bf16.mxu0 0
    %2336 = vmatpush2.bf16.msra.mxu0 0
    %2337 = vmatprep.subr.bf16.mxu0 0
    %2338 = vmatpush2.bf16.msra.mxu0 0
    %2339 = vmatprep.subr.bf16.mxu0 0
    %2340 = vmatpush2.bf16.msra.mxu0 0
    %2341 = vmatprep.subr.bf16.mxu0 0
    %2342 = vmatpush2.bf16.msra.mxu0 0
    %2343 = vmatprep.subr.bf16.mxu0 0
    %2344 = vmatpush2.bf16.msra.mxu0 0
    %2345 = vmatprep.subr.bf16.mxu0 0
    %2346 = vmatpush2.bf16.msra.mxu0 0
    %2347 = vmatprep.subr.bf16.mxu0 0
    %2348 = vmatpush2.bf16.msra.mxu0 0
    %2349 = vmatprep.mubr.bf16.mxu0 0
    %2350 = vmatmul.mubr.bf16.gmra.mxu0 %v2240
    %v2351 = vpop.f32.mrf.mxu0
    %v2352 = vadd.f32 %v2267, %v2351
    %v2353 = vpop.f32.mrf.mxu0
    %v2354 = vpop.f32.mrf.mxu0
    %v2355 = vadd.f32 %v2267, %v2354
    %v2356 = vpop.f32.mrf.mxu0
    %2357 = vmatprep.mubr.bf16.mxu0 0
    %2358 = vmatmul.mubr.bf16.gmra.mxu0 %v2241
    %v2359 = vpop.f32.mrf.mxu0
    %v2360 = vadd.f32 %v2267, %v2359
    %v2361 = vpop.f32.mrf.mxu0
    %v2362 = vpop.f32.mrf.mxu0
    %v2363 = vadd.f32 %v2267, %v2362
    %v2364 = vpop.f32.mrf.mxu0
    %2365 = vmatprep.mubr.bf16.mxu0 0
    %2366 = vmatmul.mubr.bf16.gmra.mxu0 %v2242
    %v2367 = vpop.f32.mrf.mxu0
    %v2368 = vadd.f32 %v2267, %v2367
    %v2369 = vpop.f32.mrf.mxu0
    %v2370 = vpop.f32.mrf.mxu0
    %v2371 = vadd.f32 %v2267, %v2370
    %v2372 = vpop.f32.mrf.mxu0
    %2373 = vmatprep.mubr.bf16.mxu0 0
    %2374 = vmatmul.mubr.bf16.gmra.mxu0 %v2243
    %v2375 = vpop.f32.mrf.mxu0
    %v2376 = vadd.f32 %v2267, %v2375
    %v2377 = vpop.f32.mrf.mxu0
    %v2378 = vpop.f32.mrf.mxu0
    %v2379 = vadd.f32 %v2267, %v2378
    %v2380 = vpop.f32.mrf.mxu0
    %2381 = vdwg.mxu0
    %v2382 = vmax.f32 %v2352, 0.0
    %v2383 = vmax.f32 %v2355, 0.0
    %v2384 = vmax.f32 %v2360, 0.0
    %v2385 = vmax.f32 %v2363, 0.0
    %v2386 = vmax.f32 %v2368, 0.0
    %v2387 = vmax.f32 %v2371, 0.0
    %v2388 = vmax.f32 %v2376, 0.0
    %v2389 = vmax.f32 %v2379, 0.0
    %v2390 = vpack.c.bf16 %v2383, %v2382
    %v2391 = vpack.c.bf16 %v2385, %v2384
    %v2392 = vpack.c.bf16 %v2387, %v2386
    %v2393 = vpack.c.bf16 %v2389, %v2388
    %2394 = vmatprep.subr.bf16.mxu0 0
    %2395 = vmatpush1.bf16.msra.mxu0 0
    %2396 = vmatprep.subr.bf16.mxu0 0
    %2397 = vmatpush1.bf16.msra.mxu0 0
    %2398 = vmatprep.subr.bf16.mxu0 0
    %2399 = vmatpush1.bf16.msra.mxu0 0
    %2400 = vmatprep.subr.bf16.mxu0 0
    %2401 = vmatpush1.bf16.msra.mxu0 0
    %2402 = vmatprep.subr.bf16.mxu0 0
    %2403 = vmatpush1.bf16.msra.mxu0 %v2393
    %2404 = vmatprep.subr.bf16.mxu0 0
    %2405 = vmatpush1.bf16.msra.mxu0 %v2392
    %2406 = vmatprep.subr.bf16.mxu0 0
    %2407 = vmatpush1.bf16.msra.mxu0 %v2391
    %2408 = vmatprep.subr.bf16.mxu0 0
    %2409 = vmatpush1.bf16.msra.mxu0 %v2390
    %2410 = vmatprep.subr.bf16.mxu0 0
    %2411 = vmatpush2.bf16.msra.mxu0 0
    %2412 = vmatprep.subr.bf16.mxu0 0
    %2413 = vmatpush2.bf16.msra.mxu0 0
    %2414 = vmatprep.subr.bf16.mxu0 0
    %2415 = vmatpush2.bf16.msra.mxu0 0
    %2416 = vmatprep.subr.bf16.mxu0 0
    %2417 = vmatpush2.bf16.msra.mxu0 0
    %2418 = vmatprep.subr.bf16.mxu0 0
    %2419 = vmatpush2.bf16.msra.mxu0 0
    %2420 = vmatprep.subr.bf16.mxu0 0
    %2421 = vmatpush2.bf16.msra.mxu0 0
    %2422 = vmatprep.subr.bf16.mxu0 0
    %2423 = vmatpush2.bf16.msra.mxu0 0
    %2424 = vmatprep.subr.bf16.mxu0 0
    %2425 = vmatpush2.bf16.msra.mxu0 0
    %2426 = vmatprep.mubr.bf16.mxu0 0
    %2427 = vmatmul.mubr.bf16.gmra.mxu0 %v549
    %v2428 = vpop.f32.mrf.mxu0
    %v2429 = vadd.f32 0.0, %v2428
    %v2430 = vpop.f32.mrf.mxu0
    %v2431 = vpop.f32.mrf.mxu0
    %v2432 = vadd.f32 0.0, %v2431
    %v2433 = vpop.f32.mrf.mxu0
    %2434 = vdwg.mxu0
    %v2435 = vadd.f32 %v2429, %v2432
    %v2436 = vrot.slane %v2435, 4
    %v2437 = vadd.f32 %v2435, %v2436
    %v2438 = vrot.slane %v2437, 2
    %v2439 = vadd.f32 %v2437, %v2438
    %v2440 = vrot.slane %v2439, 1
    %v2441 = vadd.f32 %v2439, %v2440
    %v2442 = vmul.f32 %v2441, %v599
    %v2443 = vsub.f32 %v2429, %v2442
    %v2444 = vsub.f32 %v2432, %v2442
    %v2445 = vmul.f32 %v2443, %v2443
    %v2446 = vmul.f32 %v2444, %v2444
    %v2447 = vadd.f32 %v2445, %v2446
    %v2448 = vrot.slane %v2447, 4
    %v2449 = vadd.f32 %v2447, %v2448
    %v2450 = vrot.slane %v2449, 2
    %v2451 = vadd.f32 %v2449, %v2450
    %v2452 = vrot.slane %v2451, 1
    %v2453 = vadd.f32 %v2451, %v2452
    %v2454 = vmul.f32 %v2453, %v599
    %v2455 = vadd.f32 %v2454, 1e-05
    %v2456 = vrsqrt.pop %v2455
    %s2457 = scalar_lea.vmem %s4, 7
    %v2458 = vld [vmem:[%s2457] sm:$0x1]
    %s2459 = scalar_lea.vmem %s5, 7
    %v2460 = vld [vmem:[%s2459] sm:$0x1]
    %v2461 = vmul.f32 %v2443, %v2456
    %v2462 = vmul.f32 %v2444, %v2456
    %v2464 = vlaneseq
    %v2465 = vshrl.u32 %v2464, 7
    %v2466 = vsub.s32 0, %v2465
    %v2467 = vrot.slane %v2458, %v2466
    %v2469 = vmul.f32 %v2461, %v2467
    %v2470 = vmul.f32 %v2462, %v2467
    %v2472 = vlaneseq
    %v2473 = vshrl.u32 %v2472, 7
    %v2474 = vsub.s32 0, %v2473
    %v2475 = vrot.slane %v2460, %v2474
    %v2477 = vadd.f32 %v2469, %v2475
    %v2478 = vadd.f32 %v2470, %v2475
    %v2479 = vadd.f32 %v2030, %v2031
    %v2480 = vrot.slane %v2479, 4
    %v2481 = vadd.f32 %v2479, %v2480
    %v2482 = vrot.slane %v2481, 2
    %v2483 = vadd.f32 %v2481, %v2482
    %v2484 = vrot.slane %v2483, 1
    %v2485 = vadd.f32 %v2483, %v2484
    %v2486 = vmul.f32 %v2485, %v599
    %v2487 = vsub.f32 %v2030, %v2486
    %v2488 = vsub.f32 %v2031, %v2486
    %v2489 = vmul.f32 %v2487, %v2487
    %v2490 = vmul.f32 %v2488, %v2488
    %v2491 = vadd.f32 %v2489, %v2490
    %v2492 = vrot.slane %v2491, 4
    %v2493 = vadd.f32 %v2491, %v2492
    %v2494 = vrot.slane %v2493, 2
    %v2495 = vadd.f32 %v2493, %v2494
    %v2496 = vrot.slane %v2495, 1
    %v2497 = vadd.f32 %v2495, %v2496
    %v2498 = vmul.f32 %v2497, %v599
    %v2499 = vadd.f32 %v2498, 1e-05
    %v2500 = vrsqrt.pop %v2499
    %s2501 = scalar_lea.vmem %s6, 7
    %v2502 = vld [vmem:[%s2501] sm:$0x1]
    %s2503 = scalar_lea.vmem [#allocation5], 7
    %v2504 = vld [vmem:[%s2503] sm:$0x1]
    %v2505 = vmul.f32 %v2487, %v2500
    %v2506 = vmul.f32 %v2488, %v2500
    %v2508 = vlaneseq
    %v2509 = vshrl.u32 %v2508, 7
    %v2510 = vsub.s32 0, %v2509
    %v2511 = vrot.slane %v2502, %v2510
    %v2513 = vmul.f32 %v2505, %v2511
    %v2514 = vmul.f32 %v2506, %v2511
    %v2516 = vlaneseq
    %v2517 = vshrl.u32 %v2516, 7
    %v2518 = vsub.s32 0, %v2517
    %v2519 = vrot.slane %v2504, %v2518
    %v2521 = vadd.f32 %v2513, %v2519
    %v2522 = vadd.f32 %v2514, %v2519
    %2523 = vrot.lane.b32.xlu0 %v2521, 10
    %v2524 = vpop.permute.xlu0 %2523
    %2525 = vrot.lane.b32.xlu0 %v2522, 10
    %v2526 = vpop.permute.xlu0 %2525
    %v2527 = vadd.f32 %v2477, %v2524
    %v2528 = vadd.f32 %v2478, %v2526
    %v2529 = vpack.c.bf16 %v2528, %v2527
    %s2530 = scalar_lea.vmem [#allocation7], 448
    %v2531 = vld [vmem:[%s2530] sm:$0xf]
    %v2532 = vld [vmem:[%s2530 + $0x4] sm:$0xf]
    %v2533 = vld [vmem:[%s2530 + $0x8] sm:$0xf]
    %v2534 = vld [vmem:[%s2530 + $0xc] sm:$0xf]
    %v2535 = vld [vmem:[%s2530 + $0x10] sm:$0xf]
    %v2536 = vld [vmem:[%s2530 + $0x14] sm:$0xf]
    %v2537 = vld [vmem:[%s2530 + $0x18] sm:$0xf]
    %v2538 = vld [vmem:[%s2530 + $0x1c] sm:$0xf]
    %v2539 = vld [vmem:[%s2530 + $0x20] sm:$0xf]
    %v2540 = vld [vmem:[%s2530 + $0x24] sm:$0xf]
    %v2541 = vld [vmem:[%s2530 + $0x28] sm:$0xf]
    %v2542 = vld [vmem:[%s2530 + $0x2c] sm:$0xf]
    %v2543 = vld [vmem:[%s2530 + $0x30] sm:$0xf]
    %v2544 = vld [vmem:[%s2530 + $0x34] sm:$0xf]
    %v2545 = vld [vmem:[%s2530 + $0x38] sm:$0xf]
    %v2546 = vld [vmem:[%s2530 + $0x3c] sm:$0xf]
    %s2547 = scalar_lea.vmem %s9, 7
    %v2548 = vld [vmem:[%s2547] sm:$0x1]
    %v2550 = vlaneseq
    %v2551 = vshrl.u32 %v2550, 7
    %v2552 = vsub.s32 0, %v2551
    %v2553 = vrot.slane %v2548, %v2552
    %v2571 = vunpack.c.l.b16 %v2531
    %v2572 = vunpack.c.l.b16 %v2532
    %v2573 = vunpack.c.l.b16 %v2533
    %v2574 = vunpack.c.l.b16 %v2534
    %v2575 = vunpack.c.l.b16 %v2535
    %v2576 = vunpack.c.l.b16 %v2536
    %v2577 = vunpack.c.l.b16 %v2537
    %v2578 = vunpack.c.l.b16 %v2538
    %v2579 = vunpack.c.l.b16 %v2539
    %v2580 = vunpack.c.l.b16 %v2540
    %v2581 = vunpack.c.l.b16 %v2541
    %v2582 = vunpack.c.l.b16 %v2542
    %v2583 = vunpack.c.l.b16 %v2543
    %v2584 = vunpack.c.l.b16 %v2544
    %v2585 = vunpack.c.l.b16 %v2545
    %v2586 = vunpack.c.l.b16 %v2546
    %v2587 = vpack.c.b16 %v2572, %v2571
    %v2588 = vpack.c.b16 %v2574, %v2573
    %v2589 = vpack.c.b16 %v2576, %v2575
    %v2590 = vpack.c.b16 %v2578, %v2577
    %v2591 = vpack.c.b16 %v2580, %v2579
    %v2592 = vpack.c.b16 %v2582, %v2581
    %v2593 = vpack.c.b16 %v2584, %v2583
    %v2594 = vpack.c.b16 %v2586, %v2585
    %2603 = vmatprep.subr.bf16.mxu0 0
    %2604 = vmatpush1.bf16.msra.mxu0 %v2594
    %2605 = vmatprep.subr.bf16.mxu0 0
    %2606 = vmatpush1.bf16.msra.mxu0 %v2593
    %2607 = vmatprep.subr.bf16.mxu0 0
    %2608 = vmatpush1.bf16.msra.mxu0 %v2592
    %2609 = vmatprep.subr.bf16.mxu0 0
    %2610 = vmatpush1.bf16.msra.mxu0 %v2591
    %2611 = vmatprep.subr.bf16.mxu0 0
    %2612 = vmatpush1.bf16.msra.mxu0 %v2590
    %2613 = vmatprep.subr.bf16.mxu0 0
    %2614 = vmatpush1.bf16.msra.mxu0 %v2589
    %2615 = vmatprep.subr.bf16.mxu0 0
    %2616 = vmatpush1.bf16.msra.mxu0 %v2588
    %2617 = vmatprep.subr.bf16.mxu0 0
    %2618 = vmatpush1.bf16.msra.mxu0 %v2587
    %2619 = vmatprep.subr.bf16.mxu0 0
    %2620 = vmatpush2.bf16.msra.mxu0 0
    %2621 = vmatprep.subr.bf16.mxu0 0
    %2622 = vmatpush2.bf16.msra.mxu0 0
    %2623 = vmatprep.subr.bf16.mxu0 0
    %2624 = vmatpush2.bf16.msra.mxu0 0
    %2625 = vmatprep.subr.bf16.mxu0 0
    %2626 = vmatpush2.bf16.msra.mxu0 0
    %2627 = vmatprep.subr.bf16.mxu0 0
    %2628 = vmatpush2.bf16.msra.mxu0 0
    %2629 = vmatprep.subr.bf16.mxu0 0
    %2630 = vmatpush2.bf16.msra.mxu0 0
    %2631 = vmatprep.subr.bf16.mxu0 0
    %2632 = vmatpush2.bf16.msra.mxu0 0
    %2633 = vmatprep.subr.bf16.mxu0 0
    %2634 = vmatpush2.bf16.msra.mxu0 0
    %2635 = vmatprep.mubr.bf16.mxu0 0
    %2636 = vmatmul.mubr.bf16.gmra.mxu0 %v2529
    %v2637 = vpop.f32.mrf.mxu0
    %v2638 = vadd.f32 %v2553, %v2637
    %v2639 = vpop.f32.mrf.mxu0
    %v2640 = vpop.f32.mrf.mxu0
    %v2641 = vadd.f32 %v2553, %v2640
    %v2642 = vpop.f32.mrf.mxu0
    %2643 = vdwg.mxu0
    %v2644 = vmax.f32 %v2638, 0.0
    %v2645 = vmax.f32 %v2641, 0.0
    %2646 = vst [vmem:[#allocation8] sm:$0xff] %v2644
    %2647 = vst [vmem:[#allocation8 + $0x8] sm:$0xff] %v2645
    // Predicated region
    $region54: #{tpu_custom_call.1} parent=1 // pred_check
      _
    $region55: #{tpu_custom_call.1} parent=1 // pred_check_branch
      %2649 = sbr.rel (0) target = $region57
    $region56: #{tpu_custom_call.1} parent=1 // pred_region
      %s2651 = ssub.s32 256, 256
      %2652 = vsyncadd [#allocation4], %s2651
      %s2653 = sshll.u32 [#allocation8], 4
      %s2654 = int_to_ptr.vmem [resolvable:$true] %s2653
      %2659 = dma.vmem_to_hbm [thread:$0]  %s2654, 256, %s10, [#allocation4], 128, 128, 8
    $region57: #{tpu_custom_call.1} parent=1 // pred_fallthru
      _
    // Predicated region
    $region58: #{tpu_custom_call.1} parent=1 // pred_check
      _
    $region59: #{tpu_custom_call.1} parent=1 // pred_check_branch
      %2661 = sbr.rel (0) target = $region61
    $region60: #{tpu_custom_call.1} parent=1 // pred_region
      %2662 = dma.done [#allocation4], 256
    $region61: #{tpu_custom_call.1} parent=1 // pred_fallthru
      _
    %2663 = vsyncpa [#allocation3], 1
    %2664 = vsyncpa [#allocation6], 1
    %2665 = vsyncpa [#allocation4], 1

</llo_original>
